<compile_context>
chip_gen: v7x
topology: tpu7x:2x2x1
jax: 0.10.0
libtpu: 0.0.40
codegen_flags: <defaults>
</compile_context>

<pallas_src>
import functools

import jax
import jax.numpy as jnp
from jax import lax
from jax.experimental import pallas as pl
from jax.experimental.pallas import tpu as pltpu


# ----------------------------------------------------------------------------
# Kernel
# ----------------------------------------------------------------------------
def resblock_kernel(x_ref, t1_ref, b1_ref, t2_ref, b2_ref, o_ref,
                    xpad_ref, hpad_ref, im_ref, *, K, Nb, H, WC, res_scale):
    """Fused ResBlock for one block of Nb images.

    x_ref  : (Nb, H, WC)        f32   lane-dense input rows (WC = W * C)
    t*_ref : (K*WC, WC)         bf16  K-tap-stacked block-Toeplitz conv weights
    b*_ref : (1, WC)            f32   per-lane bias (channel bias tiled over W)
    o_ref  : (Nb, H, WC)        f32   output
    xpad_ref, hpad_ref : (Nb*Hp + 2p, WC) f32   H-halo padded activation slabs
    im_ref : (Nb*Hp, K*WC)      bf16  im2col slab (K row-shifted copies)

    Slab layout (Hp = H + 2p rows per image): buffer row p + s holds "slab row"
    s; image i occupies slab rows [i*Hp + p, i*Hp + p + H); all other rows are
    zero (they realize the "same" zero padding along H and isolate images from
    each other).  conv output at slab row s = sum_kh slab[s - p + kh] @ T[kh]
    = sum_kh buf[s + kh] @ T[kh], which the im2col + single matmul computes for
    ALL slab rows at once (halo-row outputs are garbage and simply discarded).
    """
    p = K // 2
    Hp = H + 2 * p                 # padded rows per image
    R = Nb * Hp                    # matmul M dimension (valid + halo rows)

    def zero_halos(buf):
        # Zero rows sit at buffer offsets i*Hp (2p rows each), i = 0..Nb; every
        # other buffer row is overwritten below, so only these need zeros.
        zeros = jnp.zeros((2 * p, WC), dtype=buf.dtype)
        for i in range(Nb + 1):
            buf[i * Hp:i * Hp + 2 * p, :] = zeros

    # ---- stage the Nb input images into the padded f32 slab ------------------
    zero_halos(xpad_ref)
    for i in range(Nb):
        xpad_ref[i * Hp + 2 * p:i * Hp + 2 * p + H, :] = x_ref[i]
    # NOTE: at larger H*WC, DMA the input block straight into the padded slab
    # (memory_space=pl.ANY + pltpu.make_async_copy) instead of this VMEM copy.

    # ---- conv1 + bias + ReLU -> hpad (stays in VMEM) --------------------------
    # im2col: im[r, kh*WC:(kh+1)*WC] = xpad[r + kh]  (cast to bf16 exactly here),
    # then ONE MXU matmul with contraction K*WC instead of K matmuls.
    for kh in range(K):
        im_ref[:, kh * WC:(kh + 1) * WC] = (
            xpad_ref[kh:kh + R, :].astype(jnp.bfloat16))
    acc1 = jnp.dot(im_ref[...], t1_ref[...],
                   preferred_element_type=jnp.float32)            # (R, WC) f32
    hpad_ref[p:p + R, :] = jnp.maximum(acc1 + b1_ref[...], 0.0)
    zero_halos(hpad_ref)        # re-zero halo rows clobbered by the slab write

    # ---- conv2 + bias ---------------------------------------------------------
    for kh in range(K):
        im_ref[:, kh * WC:(kh + 1) * WC] = (
            hpad_ref[kh:kh + R, :].astype(jnp.bfloat16))
    acc2 = jnp.dot(im_ref[...], t2_ref[...],
                   preferred_element_type=jnp.float32) + b2_ref[...]

    # ---- epilogue: * res_scale (compile-time skipped when 1) + residual (f32) -
    for i in range(Nb):
        res = acc2[i * Hp + p:i * Hp + p + H, :]      # drop halo-row garbage
        if res_scale != 1.0:
            res = res * res_scale
        o_ref[i] = (res + x_ref[i]).astype(o_ref.dtype)


# ----------------------------------------------------------------------------
# Weight / layout helpers
# ----------------------------------------------------------------------------
def _toeplitz_conv_weights(w_hwio, W):
    """(K, K, Cin, Cout) "same"-conv weights -> (K*W*Cin, W*Cout) stacked slab.

    T[kh, ws*Cin + ci, wd*Cout + co] = w[kh, ws - wd + p, ci, co]  (0 otherwise)
    so that   out_row[h] = sum_kh x_row[h + kh - p] @ T[kh]
    realizes the KxK "same"-padded conv along W (W-boundary zero padding folded
    into zero entries of T); the kh axis is then folded into the contraction
    (rows kh*W*Cin + ...) to match the kernel's im2col column layout.
    """
    K = w_hwio.shape[0]
    Cin, Cout = w_hwio.shape[2], w_hwio.shape[3]
    p = K // 2
    ws = jnp.arange(W)[:, None]                    # source column
    wd = jnp.arange(W)[None, :]                    # destination column
    kw = ws - wd + p                               # (W, W)
    valid = (kw >= 0) & (kw < K)
    kw_c = jnp.clip(kw, 0, K - 1)
    t = w_hwio[:, kw_c, :, :]                      # (K, Wsrc, Wdst, Cin, Cout)
    t = jnp.where(valid[None, :, :, None, None], t, 0.0)
    t = jnp.transpose(t, (0, 1, 3, 2, 4))          # (K, Wsrc, Cin, Wdst, Cout)
    return t.reshape(K * W * Cin, W * Cout)


def _pick_batch_block(n, target):
    nb = max(1, min(target, n))
    while n % nb:
        nb -= 1
    return nb


# ----------------------------------------------------------------------------
# Wrappers
# ----------------------------------------------------------------------------
def resblock_forward_lanes(x_lanes, w1, b1, w2, b2, *, res_scale=1.0,
                           batch_block=4):
    """Fused EDSR ResBlock on lane-dense activations.

    x_lanes: (N, H, W*C) f32, last dim laid out as (w major, c minor);
    w*: (K, K, C, C) HWIO conv weights; b*: (C,).  Returns (N, H, W*C).
    Keeping a ResBlock stack in this layout end-to-end avoids per-block
    NCHW<->lane-dense transposes (each is a full HBM round-trip).
    """
    N, H, WC = x_lanes.shape
    K = w1.shape[0]
    C = w1.shape[2]
    assert K % 2 == 1, "same-padding ResBlock conv expects odd kernel size"
    assert WC % C == 0, "lane-dense row must be W copies of the channel dim"
    assert WC % 128 == 0, "W*C must be a multiple of 128 (full vreg lanes)"
    W = WC // C
    p = K // 2
    Hp = H + 2 * p

    Nb = _pick_batch_block(N, batch_block)     # images per grid step (raises M)
    R = Nb * Hp                                # matmul M dim per grid step

    t1 = _toeplitz_conv_weights(w1, W).astype(jnp.bfloat16)      # (K*WC, WC)
    t2 = _toeplitz_conv_weights(w2, W).astype(jnp.bfloat16)
    b1_l = jnp.tile(b1.astype(jnp.float32), W).reshape(1, WC)
    b2_l = jnp.tile(b2.astype(jnp.float32), W).reshape(1, WC)

    # NOTE: flops is what the MXU actually executes (block-Toeplitz inflates
    # true conv FLOPs by ~W/K); do not read it as an efficiency metric.
    flops = 4 * K * WC * WC * N * Hp
    bytes_accessed = 2 * N * H * WC * 4 + 2 * K * WC * WC * 2 + 2 * WC * 4

    return pl.pallas_call(
        functools.partial(resblock_kernel, K=K, Nb=Nb, H=H, WC=WC,
                          res_scale=float(res_scale)),
        out_shape=jax.ShapeDtypeStruct((N, H, WC), x_lanes.dtype),
        grid_spec=pltpu.PrefetchScalarGridSpec(
            num_scalar_prefetch=0,
            grid=(N // Nb,),
            in_specs=[
                pl.BlockSpec((Nb, H, WC), lambda n: (n, 0, 0)),   # x block
                # Resident weights / biases: constant index_map -> fetched once
                # and reused across all grid steps.  At production n_feats
                # (WC ~ 1024) single-buffer these (pl.Buffered(1)) or switch
                # formulation (see header note); at WC<=256 the default
                # double-buffered footprint is <1 MiB and harmless.
                pl.BlockSpec((K * WC, WC), lambda n: (0, 0)),     # T1
                pl.BlockSpec((1, WC), lambda n: (0, 0)),          # b1
                pl.BlockSpec((K * WC, WC), lambda n: (0, 0)),     # T2
                pl.BlockSpec((1, WC), lambda n: (0, 0)),          # b2
            ],
            out_specs=pl.BlockSpec((Nb, H, WC), lambda n: (n, 0, 0)),
            scratch_shapes=[
                pltpu.VMEM((R + 2 * p, WC), jnp.float32),   # padded x slab
                pltpu.VMEM((R + 2 * p, WC), jnp.float32),   # padded h slab
                pltpu.VMEM((R, K * WC), jnp.bfloat16),      # bf16 im2col slab
            ],
        ),
        compiler_params=pltpu.CompilerParams(
            dimension_semantics=("parallel",),      # batch blocks across cores
            vmem_limit_bytes=32 * 1024 * 1024,      # safe on v5e/v6e/v7x
        ),
        cost_estimate=pl.CostEstimate(
            flops=flops, transcendentals=0, bytes_accessed=bytes_accessed),
    )(x_lanes, t1, b1_l, t2, b2_l)


def resblock_forward(x_nchw, w1, b1, w2, b2, *, res_scale=1.0, batch_block=4):
    """Drop-in NCHW entry point matching the PyTorch module's layout.

    The NCHW <-> lane-dense transposes below each re-read/write the full
    activation in HBM; in a real EDSR stack convert once at the network
    boundary and chain resblock_forward_lanes() instead (per perf review).
    """
    N, C, H, W = x_nchw.shape
    x_lanes = jnp.transpose(x_nchw, (0, 2, 3, 1)).reshape(N, H, W * C)
    out = resblock_forward_lanes(x_lanes, w1, b1, w2, b2,
                                 res_scale=res_scale, batch_block=batch_block)
    return jnp.transpose(out.reshape(N, H, W, C), (0, 3, 1, 2))


# ----------------------------------------------------------------------------
# Reference (matches kernel numerics: bf16 matmul operands, f32 accumulation)
# ----------------------------------------------------------------------------
def resblock_reference(x_nchw, w1, b1, w2, b2, *, res_scale=1.0):
    x = jnp.transpose(x_nchw, (0, 2, 3, 1))        # NHWC f32

    def conv(v, w):
        return lax.conv_general_dilated(
            v.astype(jnp.bfloat16), w.astype(jnp.bfloat16),
            window_strides=(1, 1), padding="SAME",
            dimension_numbers=("NHWC", "HWIO", "NHWC"),
            preferred_element_type=jnp.float32)

    h = jnp.maximum(conv(x, w1) + b1, 0.0).astype(jnp.bfloat16)
    y = conv(h, w2) + b2
    out = y * res_scale + x
    return jnp.transpose(out, (0, 3, 1, 2))


# ----------------------------------------------------------------------------
# Main
# ----------------------------------------------------------------------------
if __name__ == "__main__":
    # ResBlock config: 3x3 same-padding conv, n_feats channels, bias=True,
    # bn=False, act=ReLU, res_scale=1 (PyTorch defaults).
    # W * n_feats = 256 -> full 256-wide MXU rows on v6e/v7x; N=8 with Nb=4
    # gives 2 parallel grid steps (both v7x TensorCores busy) and M=72 rows
    # per MXU matmul.
    N, n_feats, H, W = 8, 16, 16, 16
    K = 3
    res_scale = 1.0

    key = jax.random.PRNGKey(0)
    kx, kw1, kb1, kw2, kb2 = jax.random.split(key, 5)

    x = jax.random.normal(kx, (N, n_feats, H, W), dtype=jnp.float32)

    # Conv params in HWIO layout (a PyTorch OIHW weight maps via transpose(2,3,1,0)).
    fan_in = n_feats * K * K
    bound = 1.0 / jnp.sqrt(fan_in)
    w1 = jax.random.uniform(kw1, (K, K, n_feats, n_feats), jnp.float32, -bound, bound)
    b1 = jax.random.uniform(kb1, (n_feats,), jnp.float32, -bound, bound)
    w2 = jax.random.uniform(kw2, (K, K, n_feats, n_feats), jnp.float32, -bound, bound)
    b2 = jax.random.uniform(kb2, (n_feats,), jnp.float32, -bound, bound)

    fwd = jax.jit(functools.partial(resblock_forward, res_scale=res_scale))
    out = jax.block_until_ready(fwd(x, w1, b1, w2, b2))

    ref = resblock_reference(x, w1, b1, w2, b2, res_scale=res_scale)
    if not jnp.allclose(out, ref, atol=1e-3, rtol=1e-3):
        err = jnp.max(jnp.abs(out - ref))
        raise AssertionError(f"Pallas ResBlock mismatch vs reference (max abs err {err})")

    print("KERNEL_OK")
</pallas_src>

<mosaic_0001>
module attributes {stable_mosaic.version = 11 : i64} {
  func.func @resblock_kernel(%arg0: i32, %arg1: memref<4x16x256xf32, #tpu.memory_space<vmem>>, %arg2: memref<768x256xbf16, #tpu.memory_space<vmem>>, %arg3: memref<1x256xf32, #tpu.memory_space<vmem>>, %arg4: memref<768x256xbf16, #tpu.memory_space<vmem>>, %arg5: memref<1x256xf32, #tpu.memory_space<vmem>>, %arg6: memref<4x16x256xf32, #tpu.memory_space<vmem>>, %arg7: memref<74x256xf32, #tpu.memory_space<vmem>>, %arg8: memref<74x256xf32, #tpu.memory_space<vmem>>, %arg9: memref<72x768xbf16, #tpu.memory_space<vmem>>) attributes {dimension_semantics = [#tpu.dimension_semantics<parallel>], iteration_bounds = array<i64: 2>, scalar_prefetch = 0 : i64, scratch_operands = 3 : i64, tpu.core_type = #tpu.core_type<tc>, window_params = [{transform_indices = @transform_0, window_bounds = array<i64: 4, 16, 256>}, {pipeline_mode = #tpu.pipeline_mode<synchronous>, transform_indices = @transform_1, window_bounds = array<i64: 768, 256>}, {pipeline_mode = #tpu.pipeline_mode<synchronous>, transform_indices = @transform_2, window_bounds = array<i64: 1, 256>}, {pipeline_mode = #tpu.pipeline_mode<synchronous>, transform_indices = @transform_3, window_bounds = array<i64: 768, 256>}, {pipeline_mode = #tpu.pipeline_mode<synchronous>, transform_indices = @transform_4, window_bounds = array<i64: 1, 256>}, {transform_indices = @transform_5, window_bounds = array<i64: 4, 16, 256>}]} {
    %cst = arith.constant 0.000000e+00 : f32
    %0 = vector.broadcast %cst : f32 to vector<2x256xf32>
    %c0 = arith.constant 0 : index
    %c0_0 = arith.constant 0 : index
    %1 = vector.load %arg7[%c0, %c0_0] : memref<74x256xf32, #tpu.memory_space<vmem>>, vector<2x256xf32>
    tpu.vector_store %arg7[%c0, %c0_0], %0 {strides = array<i32>} : memref<74x256xf32, #tpu.memory_space<vmem>>, vector<2x256xf32>,
    %c18 = arith.constant 18 : index
    %c0_1 = arith.constant 0 : index
    %2 = vector.load %arg7[%c18, %c0_1] : memref<74x256xf32, #tpu.memory_space<vmem>>, vector<2x256xf32>
    tpu.vector_store %arg7[%c18, %c0_1], %0 {strides = array<i32>} : memref<74x256xf32, #tpu.memory_space<vmem>>, vector<2x256xf32>,
    %c36 = arith.constant 36 : index
    %c0_2 = arith.constant 0 : index
    %3 = vector.load %arg7[%c36, %c0_2] : memref<74x256xf32, #tpu.memory_space<vmem>>, vector<2x256xf32>
    tpu.vector_store %arg7[%c36, %c0_2], %0 {strides = array<i32>} : memref<74x256xf32, #tpu.memory_space<vmem>>, vector<2x256xf32>,
    %c54 = arith.constant 54 : index
    %c0_3 = arith.constant 0 : index
    %4 = vector.load %arg7[%c54, %c0_3] : memref<74x256xf32, #tpu.memory_space<vmem>>, vector<2x256xf32>
    tpu.vector_store %arg7[%c54, %c0_3], %0 {strides = array<i32>} : memref<74x256xf32, #tpu.memory_space<vmem>>, vector<2x256xf32>,
    %c72 = arith.constant 72 : index
    %c0_4 = arith.constant 0 : index
    %5 = vector.load %arg7[%c72, %c0_4] : memref<74x256xf32, #tpu.memory_space<vmem>>, vector<2x256xf32>
    tpu.vector_store %arg7[%c72, %c0_4], %0 {strides = array<i32>} : memref<74x256xf32, #tpu.memory_space<vmem>>, vector<2x256xf32>,
    %c0_5 = arith.constant 0 : index
    %c0_6 = arith.constant 0 : index
    %c0_7 = arith.constant 0 : index
    %6 = vector.load %arg1[%c0_5, %c0_6, %c0_7] : memref<4x16x256xf32, #tpu.memory_space<vmem>>, vector<1x16x256xf32>
    %7 = vector.shape_cast %6 : vector<1x16x256xf32> to vector<16x256xf32>
    %c2 = arith.constant 2 : index
    %c0_8 = arith.constant 0 : index
    %8 = vector.load %arg7[%c2, %c0_8] : memref<74x256xf32, #tpu.memory_space<vmem>>, vector<16x256xf32>
    tpu.vector_store %arg7[%c2, %c0_8], %7 {strides = array<i32>} : memref<74x256xf32, #tpu.memory_space<vmem>>, vector<16x256xf32>,
    %c1 = arith.constant 1 : index
    %c0_9 = arith.constant 0 : index
    %c0_10 = arith.constant 0 : index
    %9 = vector.load %arg1[%c1, %c0_9, %c0_10] : memref<4x16x256xf32, #tpu.memory_space<vmem>>, vector<1x16x256xf32>
    %10 = vector.shape_cast %9 : vector<1x16x256xf32> to vector<16x256xf32>
    %c20 = arith.constant 20 : index
    %c0_11 = arith.constant 0 : index
    %11 = vector.load %arg7[%c20, %c0_11] : memref<74x256xf32, #tpu.memory_space<vmem>>, vector<16x256xf32>
    tpu.vector_store %arg7[%c20, %c0_11], %10 {strides = array<i32>} : memref<74x256xf32, #tpu.memory_space<vmem>>, vector<16x256xf32>,
    %c2_12 = arith.constant 2 : index
    %c0_13 = arith.constant 0 : index
    %c0_14 = arith.constant 0 : index
    %12 = vector.load %arg1[%c2_12, %c0_13, %c0_14] : memref<4x16x256xf32, #tpu.memory_space<vmem>>, vector<1x16x256xf32>
    %13 = vector.shape_cast %12 : vector<1x16x256xf32> to vector<16x256xf32>
    %c38 = arith.constant 38 : index
    %c0_15 = arith.constant 0 : index
    %14 = vector.load %arg7[%c38, %c0_15] : memref<74x256xf32, #tpu.memory_space<vmem>>, vector<16x256xf32>
    tpu.vector_store %arg7[%c38, %c0_15], %13 {strides = array<i32>} : memref<74x256xf32, #tpu.memory_space<vmem>>, vector<16x256xf32>,
    %c3 = arith.constant 3 : index
    %c0_16 = arith.constant 0 : index
    %c0_17 = arith.constant 0 : index
    %15 = vector.load %arg1[%c3, %c0_16, %c0_17] : memref<4x16x256xf32, #tpu.memory_space<vmem>>, vector<1x16x256xf32>
    %16 = vector.shape_cast %15 : vector<1x16x256xf32> to vector<16x256xf32>
    %c56 = arith.constant 56 : index
    %c0_18 = arith.constant 0 : index
    %17 = vector.load %arg7[%c56, %c0_18] : memref<74x256xf32, #tpu.memory_space<vmem>>, vector<16x256xf32>
    tpu.vector_store %arg7[%c56, %c0_18], %16 {strides = array<i32>} : memref<74x256xf32, #tpu.memory_space<vmem>>, vector<16x256xf32>,
    %c0_19 = arith.constant 0 : index
    %c0_20 = arith.constant 0 : index
    %18 = vector.load %arg7[%c0_19, %c0_20] : memref<74x256xf32, #tpu.memory_space<vmem>>, vector<72x256xf32>
    %19 = arith.truncf %18 : vector<72x256xf32> to vector<72x256xbf16>
    %c0_21 = arith.constant 0 : index
    %c0_22 = arith.constant 0 : index
    %20 = vector.load %arg9[%c0_21, %c0_22] : memref<72x768xbf16, #tpu.memory_space<vmem>>, vector<72x256xbf16>
    tpu.vector_store %arg9[%c0_21, %c0_22], %19 {strides = array<i32>} : memref<72x768xbf16, #tpu.memory_space<vmem>>, vector<72x256xbf16>,
    %c1_23 = arith.constant 1 : index
    %c0_24 = arith.constant 0 : index
    %21 = vector.load %arg7[%c1_23, %c0_24] : memref<74x256xf32, #tpu.memory_space<vmem>>, vector<72x256xf32>
    %22 = arith.truncf %21 : vector<72x256xf32> to vector<72x256xbf16>
    %c0_25 = arith.constant 0 : index
    %c256 = arith.constant 256 : index
    %23 = vector.load %arg9[%c0_25, %c256] : memref<72x768xbf16, #tpu.memory_space<vmem>>, vector<72x256xbf16>
    tpu.vector_store %arg9[%c0_25, %c256], %22 {strides = array<i32>} : memref<72x768xbf16, #tpu.memory_space<vmem>>, vector<72x256xbf16>,
    %c2_26 = arith.constant 2 : index
    %c0_27 = arith.constant 0 : index
    %24 = vector.load %arg7[%c2_26, %c0_27] : memref<74x256xf32, #tpu.memory_space<vmem>>, vector<72x256xf32>
    %25 = arith.truncf %24 : vector<72x256xf32> to vector<72x256xbf16>
    %c0_28 = arith.constant 0 : index
    %c512 = arith.constant 512 : index
    %26 = vector.load %arg9[%c0_28, %c512] : memref<72x768xbf16, #tpu.memory_space<vmem>>, vector<72x256xbf16>
    tpu.vector_store %arg9[%c0_28, %c512], %25 {strides = array<i32>} : memref<72x768xbf16, #tpu.memory_space<vmem>>, vector<72x256xbf16>,
    %c0_29 = arith.constant 0 : index
    %c0_30 = arith.constant 0 : index
    %27 = vector.load %arg9[%c0_29, %c0_30] : memref<72x768xbf16, #tpu.memory_space<vmem>>, vector<72x768xbf16>
    %c0_31 = arith.constant 0 : index
    %c0_32 = arith.constant 0 : index
    %28 = vector.load %arg2[%c0_31, %c0_32] : memref<768x256xbf16, #tpu.memory_space<vmem>>, vector<768x256xbf16>
    %cst_33 = arith.constant dense<0.000000e+00> : vector<72x256xf32>
    %29 = tpu.matmul %27, %28, %cst_33 {dimension_numbers = #tpu.dot_dimension_numbers<[1], [0], [0], [1], [0, 0, 1, 1], [], []>} : vector<72x768xbf16>, vector<768x256xbf16>, vector<72x256xf32> -> vector<72x256xf32>
    %c0_34 = arith.constant 0 : index
    %c0_35 = arith.constant 0 : index
    %30 = vector.load %arg3[%c0_34, %c0_35] : memref<1x256xf32, #tpu.memory_space<vmem>>, vector<1x256xf32>
    %31 = vector.broadcast %30 : vector<1x256xf32> to vector<72x256xf32>
    %32 = arith.addf %29, %31 : vector<72x256xf32>
    %cst_36 = arith.constant 0.000000e+00 : f32
    %33 = vector.broadcast %cst_36 : f32 to vector<72x256xf32>
    %34 = arith.maximumf %32, %33 : vector<72x256xf32>
    %c1_37 = arith.constant 1 : index
    %c0_38 = arith.constant 0 : index
    %35 = vector.load %arg8[%c1_37, %c0_38] : memref<74x256xf32, #tpu.memory_space<vmem>>, vector<72x256xf32>
    tpu.vector_store %arg8[%c1_37, %c0_38], %34 {strides = array<i32>} : memref<74x256xf32, #tpu.memory_space<vmem>>, vector<72x256xf32>,
    %cst_39 = arith.constant 0.000000e+00 : f32
    %36 = vector.broadcast %cst_39 : f32 to vector<2x256xf32>
    %c0_40 = arith.constant 0 : index
    %c0_41 = arith.constant 0 : index
    %37 = vector.load %arg8[%c0_40, %c0_41] : memref<74x256xf32, #tpu.memory_space<vmem>>, vector<2x256xf32>
    tpu.vector_store %arg8[%c0_40, %c0_41], %36 {strides = array<i32>} : memref<74x256xf32, #tpu.memory_space<vmem>>, vector<2x256xf32>,
    %c18_42 = arith.constant 18 : index
    %c0_43 = arith.constant 0 : index
    %38 = vector.load %arg8[%c18_42, %c0_43] : memref<74x256xf32, #tpu.memory_space<vmem>>, vector<2x256xf32>
    tpu.vector_store %arg8[%c18_42, %c0_43], %36 {strides = array<i32>} : memref<74x256xf32, #tpu.memory_space<vmem>>, vector<2x256xf32>,
    %c36_44 = arith.constant 36 : index
    %c0_45 = arith.constant 0 : index
    %39 = vector.load %arg8[%c36_44, %c0_45] : memref<74x256xf32, #tpu.memory_space<vmem>>, vector<2x256xf32>
    tpu.vector_store %arg8[%c36_44, %c0_45], %36 {strides = array<i32>} : memref<74x256xf32, #tpu.memory_space<vmem>>, vector<2x256xf32>,
    %c54_46 = arith.constant 54 : index
    %c0_47 = arith.constant 0 : index
    %40 = vector.load %arg8[%c54_46, %c0_47] : memref<74x256xf32, #tpu.memory_space<vmem>>, vector<2x256xf32>
    tpu.vector_store %arg8[%c54_46, %c0_47], %36 {strides = array<i32>} : memref<74x256xf32, #tpu.memory_space<vmem>>, vector<2x256xf32>,
    %c72_48 = arith.constant 72 : index
    %c0_49 = arith.constant 0 : index
    %41 = vector.load %arg8[%c72_48, %c0_49] : memref<74x256xf32, #tpu.memory_space<vmem>>, vector<2x256xf32>
    tpu.vector_store %arg8[%c72_48, %c0_49], %36 {strides = array<i32>} : memref<74x256xf32, #tpu.memory_space<vmem>>, vector<2x256xf32>,
    %c0_50 = arith.constant 0 : index
    %c0_51 = arith.constant 0 : index
    %42 = vector.load %arg8[%c0_50, %c0_51] : memref<74x256xf32, #tpu.memory_space<vmem>>, vector<72x256xf32>
    %43 = arith.truncf %42 : vector<72x256xf32> to vector<72x256xbf16>
    %c0_52 = arith.constant 0 : index
    %c0_53 = arith.constant 0 : index
    %44 = vector.load %arg9[%c0_52, %c0_53] : memref<72x768xbf16, #tpu.memory_space<vmem>>, vector<72x256xbf16>
    tpu.vector_store %arg9[%c0_52, %c0_53], %43 {strides = array<i32>} : memref<72x768xbf16, #tpu.memory_space<vmem>>, vector<72x256xbf16>,
    %c1_54 = arith.constant 1 : index
    %c0_55 = arith.constant 0 : index
    %45 = vector.load %arg8[%c1_54, %c0_55] : memref<74x256xf32, #tpu.memory_space<vmem>>, vector<72x256xf32>
    %46 = arith.truncf %45 : vector<72x256xf32> to vector<72x256xbf16>
    %c0_56 = arith.constant 0 : index
    %c256_57 = arith.constant 256 : index
    %47 = vector.load %arg9[%c0_56, %c256_57] : memref<72x768xbf16, #tpu.memory_space<vmem>>, vector<72x256xbf16>
    tpu.vector_store %arg9[%c0_56, %c256_57], %46 {strides = array<i32>} : memref<72x768xbf16, #tpu.memory_space<vmem>>, vector<72x256xbf16>,
    %c2_58 = arith.constant 2 : index
    %c0_59 = arith.constant 0 : index
    %48 = vector.load %arg8[%c2_58, %c0_59] : memref<74x256xf32, #tpu.memory_space<vmem>>, vector<72x256xf32>
    %49 = arith.truncf %48 : vector<72x256xf32> to vector<72x256xbf16>
    %c0_60 = arith.constant 0 : index
    %c512_61 = arith.constant 512 : index
    %50 = vector.load %arg9[%c0_60, %c512_61] : memref<72x768xbf16, #tpu.memory_space<vmem>>, vector<72x256xbf16>
    tpu.vector_store %arg9[%c0_60, %c512_61], %49 {strides = array<i32>} : memref<72x768xbf16, #tpu.memory_space<vmem>>, vector<72x256xbf16>,
    %c0_62 = arith.constant 0 : index
    %c0_63 = arith.constant 0 : index
    %51 = vector.load %arg9[%c0_62, %c0_63] : memref<72x768xbf16, #tpu.memory_space<vmem>>, vector<72x768xbf16>
    %c0_64 = arith.constant 0 : index
    %c0_65 = arith.constant 0 : index
    %52 = vector.load %arg4[%c0_64, %c0_65] : memref<768x256xbf16, #tpu.memory_space<vmem>>, vector<768x256xbf16>
    %cst_66 = arith.constant dense<0.000000e+00> : vector<72x256xf32>
    %53 = tpu.matmul %51, %52, %cst_66 {dimension_numbers = #tpu.dot_dimension_numbers<[1], [0], [0], [1], [0, 0, 1, 1], [], []>} : vector<72x768xbf16>, vector<768x256xbf16>, vector<72x256xf32> -> vector<72x256xf32>
    %c0_67 = arith.constant 0 : index
    %c0_68 = arith.constant 0 : index
    %54 = vector.load %arg5[%c0_67, %c0_68] : memref<1x256xf32, #tpu.memory_space<vmem>>, vector<1x256xf32>
    %55 = vector.broadcast %54 : vector<1x256xf32> to vector<72x256xf32>
    %56 = arith.addf %53, %55 : vector<72x256xf32>
    %57 = vector.extract_strided_slice %56 {offsets = [1, 0], sizes = [16, 256], strides = [1, 1]} : vector<72x256xf32> to vector<16x256xf32>
    %c0_69 = arith.constant 0 : index
    %c0_70 = arith.constant 0 : index
    %c0_71 = arith.constant 0 : index
    %58 = vector.load %arg1[%c0_69, %c0_70, %c0_71] : memref<4x16x256xf32, #tpu.memory_space<vmem>>, vector<1x16x256xf32>
    %59 = vector.shape_cast %58 : vector<1x16x256xf32> to vector<16x256xf32>
    %60 = arith.addf %57, %59 : vector<16x256xf32>
    %c0_72 = arith.constant 0 : index
    %c0_73 = arith.constant 0 : index
    %c0_74 = arith.constant 0 : index
    %61 = vector.load %arg6[%c0_72, %c0_73, %c0_74] : memref<4x16x256xf32, #tpu.memory_space<vmem>>, vector<1x16x256xf32>
    %62 = vector.shape_cast %61 : vector<1x16x256xf32> to vector<16x256xf32>
    %63 = vector.shape_cast %60 : vector<16x256xf32> to vector<1x16x256xf32>
    tpu.vector_store %arg6[%c0_72, %c0_73, %c0_74], %63 {strides = array<i32>} : memref<4x16x256xf32, #tpu.memory_space<vmem>>, vector<1x16x256xf32>,
    %64 = vector.extract_strided_slice %56 {offsets = [19, 0], sizes = [16, 256], strides = [1, 1]} : vector<72x256xf32> to vector<16x256xf32>
    %c1_75 = arith.constant 1 : index
    %c0_76 = arith.constant 0 : index
    %c0_77 = arith.constant 0 : index
    %65 = vector.load %arg1[%c1_75, %c0_76, %c0_77] : memref<4x16x256xf32, #tpu.memory_space<vmem>>, vector<1x16x256xf32>
    %66 = vector.shape_cast %65 : vector<1x16x256xf32> to vector<16x256xf32>
    %67 = arith.addf %64, %66 : vector<16x256xf32>
    %c1_78 = arith.constant 1 : index
    %c0_79 = arith.constant 0 : index
    %c0_80 = arith.constant 0 : index
    %68 = vector.load %arg6[%c1_78, %c0_79, %c0_80] : memref<4x16x256xf32, #tpu.memory_space<vmem>>, vector<1x16x256xf32>
    %69 = vector.shape_cast %68 : vector<1x16x256xf32> to vector<16x256xf32>
    %70 = vector.shape_cast %67 : vector<16x256xf32> to vector<1x16x256xf32>
    tpu.vector_store %arg6[%c1_78, %c0_79, %c0_80], %70 {strides = array<i32>} : memref<4x16x256xf32, #tpu.memory_space<vmem>>, vector<1x16x256xf32>,
    %71 = vector.extract_strided_slice %56 {offsets = [37, 0], sizes = [16, 256], strides = [1, 1]} : vector<72x256xf32> to vector<16x256xf32>
    %c2_81 = arith.constant 2 : index
    %c0_82 = arith.constant 0 : index
    %c0_83 = arith.constant 0 : index
    %72 = vector.load %arg1[%c2_81, %c0_82, %c0_83] : memref<4x16x256xf32, #tpu.memory_space<vmem>>, vector<1x16x256xf32>
    %73 = vector.shape_cast %72 : vector<1x16x256xf32> to vector<16x256xf32>
    %74 = arith.addf %71, %73 : vector<16x256xf32>
    %c2_84 = arith.constant 2 : index
    %c0_85 = arith.constant 0 : index
    %c0_86 = arith.constant 0 : index
    %75 = vector.load %arg6[%c2_84, %c0_85, %c0_86] : memref<4x16x256xf32, #tpu.memory_space<vmem>>, vector<1x16x256xf32>
    %76 = vector.shape_cast %75 : vector<1x16x256xf32> to vector<16x256xf32>
    %77 = vector.shape_cast %74 : vector<16x256xf32> to vector<1x16x256xf32>
    tpu.vector_store %arg6[%c2_84, %c0_85, %c0_86], %77 {strides = array<i32>} : memref<4x16x256xf32, #tpu.memory_space<vmem>>, vector<1x16x256xf32>,
    %78 = vector.extract_strided_slice %56 {offsets = [55, 0], sizes = [16, 256], strides = [1, 1]} : vector<72x256xf32> to vector<16x256xf32>
    %c3_87 = arith.constant 3 : index
    %c0_88 = arith.constant 0 : index
    %c0_89 = arith.constant 0 : index
    %79 = vector.load %arg1[%c3_87, %c0_88, %c0_89] : memref<4x16x256xf32, #tpu.memory_space<vmem>>, vector<1x16x256xf32>
    %80 = vector.shape_cast %79 : vector<1x16x256xf32> to vector<16x256xf32>
    %81 = arith.addf %78, %80 : vector<16x256xf32>
    %c3_90 = arith.constant 3 : index
    %c0_91 = arith.constant 0 : index
    %c0_92 = arith.constant 0 : index
    %82 = vector.load %arg6[%c3_90, %c0_91, %c0_92] : memref<4x16x256xf32, #tpu.memory_space<vmem>>, vector<1x16x256xf32>
    %83 = vector.shape_cast %82 : vector<1x16x256xf32> to vector<16x256xf32>
    %84 = vector.shape_cast %81 : vector<16x256xf32> to vector<1x16x256xf32>
    tpu.vector_store %arg6[%c3_90, %c0_91, %c0_92], %84 {strides = array<i32>} : memref<4x16x256xf32, #tpu.memory_space<vmem>>, vector<1x16x256xf32>,
    return
  }
  func.func @transform_0(%arg0: i32) -> (i32, i32, i32) {
    %c0_i32 = arith.constant 0 : i32
    %c0_i32_0 = arith.constant 0 : i32
    %c0_i32_1 = arith.constant 0 : i32
    return %arg0, %c0_i32, %c0_i32_0 : i32, i32, i32
  }
  func.func @transform_1(%arg0: i32) -> (i32, i32) {
    %c0_i32 = arith.constant 0 : i32
    %c0_i32_0 = arith.constant 0 : i32
    %c0_i32_1 = arith.constant 0 : i32
    return %c0_i32, %c0_i32_0 : i32, i32
  }
  func.func @transform_2(%arg0: i32) -> (i32, i32) {
    %c0_i32 = arith.constant 0 : i32
    %c0_i32_0 = arith.constant 0 : i32
    %c0_i32_1 = arith.constant 0 : i32
    return %c0_i32, %c0_i32_0 : i32, i32
  }
  func.func @transform_3(%arg0: i32) -> (i32, i32) {
    %c0_i32 = arith.constant 0 : i32
    %c0_i32_0 = arith.constant 0 : i32
    %c0_i32_1 = arith.constant 0 : i32
    return %c0_i32, %c0_i32_0 : i32, i32
  }
  func.func @transform_4(%arg0: i32) -> (i32, i32) {
    %c0_i32 = arith.constant 0 : i32
    %c0_i32_0 = arith.constant 0 : i32
    %c0_i32_1 = arith.constant 0 : i32
    return %c0_i32, %c0_i32_0 : i32, i32
  }
  func.func @transform_5(%arg0: i32) -> (i32, i32, i32) {
    %c0_i32 = arith.constant 0 : i32
    %c0_i32_0 = arith.constant 0 : i32
    %c0_i32_1 = arith.constant 0 : i32
    return %arg0, %c0_i32, %c0_i32_0 : i32, i32, i32
  }
}

</mosaic_0001>

<llo_original>
// kernel: tile.13
$region0: #{tile.13}
  #allocation0 [shape = 's32[1]{0}', space=sflag, size = 0x4, scoped, tag = 'scoped memory for tile.13']
  %s0 = inlined_call_operand.vmem [shape: f32[16], index: 0, kind: input, shape index: {}]
  %s1 = inlined_call_operand.vmem [shape: f32[16,16], index: 1, kind: output, shape index: {}]
  // Predicated region
  $region2: #{tile.13} parent=0 // pred_check
    _
  $region3: #{tile.13} parent=0 // pred_check_branch
    %3 = sbr.rel (0) target = $region5
  $region4: #{tile.13} parent=0 // pred_region
    _
  $region5: #{tile.13} parent=0 // pred_fallthru
    _
  %v4 = vld [vmem:[%s0] ss:$0 sm:$0xff]
  %5 = vst [vmem:[%s1] sm:$0xff] %v4
  %s6 = scalar_lea.vmem %s1, 8
  %7 = vst [vmem:[%s6] sm:$0xff] %v4

// kernel: tile.14
$region0: #{tile.14}
  %s0 = inlined_call_operand.vmem [shape: f32[16,16], index: 0, kind: input, shape index: {}]
  %s1 = inlined_call_operand.vmem [shape: f32[1,256], index: 1, kind: output, shape index: {}]
  $region1: #{tile.14} parent=0
    #allocation0 [shape = 'u8[8192]{0}', space=vmem, size = 0x2000, scoped, tag = 'scoped mem for output reshape']
    %s2 = smov 3
    %v3 = vld [vmem:[%s0] ss:$8 sm:%s2]
    %vm4 = vcmask 130048
    %5 = vst.msk [vmem:[#allocation0] ss:$8 sm:$0x3] %vm4, %v3
    %s6 = scalar_lea.vmem %s0, 7
    %s7 = smov 3
    %v8 = vld [vmem:[%s6] ss:$8 sm:%s7]
    %9 = vrot.lane.b32.xlu0 %v8, 112
    %v10 = vpop.permute.xlu0 %9
    %vm11 = vcmask 1048448
    %12 = vst.msk [vmem:[#allocation0] ss:$8 sm:$0x3] %vm11, %v10
    %s13 = scalar_lea.vmem %s0, 6
    %s14 = smov 3
    %v15 = vld [vmem:[%s13] ss:$8 sm:%s14]
    %16 = vrot.lane.b32.xlu0 %v15, 96
    %v17 = vpop.permute.xlu0 %16
    %vm18 = vcmask 917248
    %19 = vst.msk [vmem:[#allocation0] ss:$8 sm:$0x3] %vm18, %v17
    %s20 = scalar_lea.vmem %s0, 5
    %s21 = smov 3
    %v22 = vld [vmem:[%s20] ss:$8 sm:%s21]
    %23 = vrot.lane.b32.xlu0 %v22, 80
    %v24 = vpop.permute.xlu0 %23
    %vm25 = vcmask 786048
    %26 = vst.msk [vmem:[#allocation0] ss:$8 sm:$0x3] %vm25, %v24
    %s27 = scalar_lea.vmem %s0, 4
    %s28 = smov 3
    %v29 = vld [vmem:[%s27] ss:$8 sm:%s28]
    %30 = vrot.lane.b32.xlu0 %v29, 64
    %v31 = vpop.permute.xlu0 %30
    %vm32 = vcmask 654848
    %33 = vst.msk [vmem:[#allocation0] ss:$8 sm:$0x3] %vm32, %v31
    %s34 = scalar_lea.vmem %s0, 3
    %s35 = smov 3
    %v36 = vld [vmem:[%s34] ss:$8 sm:%s35]
    %37 = vrot.lane.b32.xlu0 %v36, 48
    %v38 = vpop.permute.xlu0 %37
    %vm39 = vcmask 523648
    %40 = vst.msk [vmem:[#allocation0] ss:$8 sm:$0x3] %vm39, %v38
    %s41 = scalar_lea.vmem %s0, 2
    %s42 = smov 3
    %v43 = vld [vmem:[%s41] ss:$8 sm:%s42]
    %44 = vrot.lane.b32.xlu0 %v43, 32
    %v45 = vpop.permute.xlu0 %44
    %vm46 = vcmask 392448
    %47 = vst.msk [vmem:[#allocation0] ss:$8 sm:$0x3] %vm46, %v45
    %s48 = scalar_lea.vmem %s0, 1
    %s49 = smov 3
    %v50 = vld [vmem:[%s48] ss:$8 sm:%s49]
    %51 = vrot.lane.b32.xlu0 %v50, 16
    %v52 = vpop.permute.xlu0 %51
    %vm53 = vcmask 261248
    %54 = vst.msk [vmem:[#allocation0] ss:$8 sm:$0x3] %vm53, %v52
    %s56 = sshllo.u32 0, 1
    %v58 = vld [vmem:[#allocation0] sm:%s56]
    %s59 = sshllo.u32 0, 1
    %60 = vst [vmem:[%s1] sm:%s59] %v58
    %s61 = scalar_lea.vmem [#allocation0], 8
    %v62 = vld [vmem:[%s61] sm:%s56]
    %s63 = sshllo.u32 0, 1
    %s64 = scalar_lea.vmem %s1, 1
    %65 = vst [vmem:[%s64] sm:%s63] %v62

// kernel: resblock_forward.1
$region0: #{resblock_forward.1}
  #allocation0 [shape = 'u32[]', space=smem, size = 0x4, offset = 0x4, fixed_abs, tag = 'smem constant byte address 0x4 - core index']
  #allocation1 [shape = 'u32[144,128]{1,0:T(1,128)}', space=vmem, size = 0x12000, scoped, tag = 'internal scratch']
  #allocation2 [shape = 'f32[74,256]{1,0:T(8,128)}', space=vmem, size = 0x14000, scoped, tag = 'scratch operand']
  #allocation3 [shape = 'f32[74,256]{1,0:T(8,128)}', space=vmem, size = 0x14000, scoped, tag = 'scratch operand']
  #allocation4 [shape = 'bf16[72,768]{1,0:T(8,128)(2,1)}', space=vmem, size = 0x1b000, scoped, tag = 'scratch operand']
  %s0 = inlined_call_operand.vmem [shape: f32[8,16,256], index: 0, kind: input, shape index: {}]
  %s1 = inlined_call_operand.vmem [shape: bf16[768,256], index: 1, kind: input, shape index: {}]
  %s2 = inlined_call_operand.vmem [shape: f32[1,256], index: 2, kind: input, shape index: {}]
  %s3 = inlined_call_operand.vmem [shape: bf16[768,256], index: 3, kind: input, shape index: {}]
  %s4 = inlined_call_operand.vmem [shape: f32[1,256], index: 4, kind: input, shape index: {}]
  %s5 = inlined_call_operand.vmem [shape: f32[8,16,256], index: 5, kind: output, shape index: {}]
  %s6 = sld [smem:[#allocation0]]
  $region53: #{resblock_forward.1} parent=0
    _
  %s8 = ssub.s32 1, %s6
  %s9 = scalar_select 0, %s8, %s6
  loop: start=0, step=1, limit=4
  $region2: #{resblock_forward.1} parent=0 // loop_pre_header
    _
  $region3: #{resblock_forward.1} parent=0 // loop_header
    %s11 = sphi 0, %s15
    %p12 = scmp.ge.s32.totalorder %s11, 4
    %s21 = sphi 0, %s23
    %s24 = sphi 0, %s21
    %s25 = sphi 0, %s24
    %s41 = sphi 0, %s25
    %s45 = sphi 0, %s45
    %s47 = sphi 0, %s45
    %s48 = sphi 0, %s47
    %s62 = sphi 0, %s48
    %s66 = sphi 0, %s66
    %s68 = sphi 0, %s66
    %s69 = sphi 0, %s68
    %s83 = sphi 0, %s69
    %s87 = sphi 0, %s87
    %s89 = sphi 0, %s87
    %s90 = sphi 0, %s89
    %s104 = sphi 0, %s90
    %s108 = sphi 0, %s108
    %s110 = sphi 0, %s108
    %s111 = sphi 0, %s110
    %s125 = sphi 0, %s111
    %s131 = sphi 0, %s133
    %s134 = sphi 0, %s131
    %s135 = sphi 0, %s134
    %s151 = sphi 0, %s135
  $region4: #{resblock_forward.1} parent=0 // loop_header_branch
    %14 = sbr.rel (%p12) target = $region8
  $region5: #{resblock_forward.1} parent=0 // loop_body
    %s16 = ssub.s32 %s11, 1
    %s17 = ssub.s32 %s11, 2
    %s18 = sadd.s32 %s11, 1
    %s19 = ssub.s32 %s11, %s18
    %p20 = scmp.eq.s32.totalorder %s19, 0
    %s22 = sadd.s32 %s21, 1
    %s23 = scalar_select %p20, %s21, %s22
    %p26 = pneg %p20
    %p27 = scmp.eq.s32.totalorder %s11, 1
    %p28 = por %p26, %p27
    %p29 = scmp.ne.s32.totalorder %s21, %s24
    %p30 = scmp.eq.s32.totalorder %s11, 0
    %p31 = por %p29, %p30
    %p32 = scmp.ne.s32.totalorder %s21, %s24
    %p33 = scmp.eq.s32.totalorder %s16, 1
    %p34 = por %p32, %p33
    %p35 = scmp.ne.s32.totalorder %s24, %s25
    %p36 = scmp.eq.s32.totalorder %s16, 0
    %p37 = por %p35, %p36
    %p38 = scmp.ne.s32.totalorder %s24, %s25
    %p39 = scmp.eq.s32.totalorder %s17, 1
    %p40 = por %p38, %p39
    %p42 = scmp.ne.s32.totalorder %s25, %s41
    %p43 = scmp.eq.s32.totalorder %s17, 0
    %p44 = por %p42, %p43
    %s46 = sadd.s32 %s45, 1
    %p49 = scmp.eq.s32.totalorder %s11, 1
    %p50 = scmp.ne.s32.totalorder %s45, %s47
    %p51 = scmp.eq.s32.totalorder %s11, 0
    %p52 = por %p50, %p51
    %p53 = scmp.ne.s32.totalorder %s45, %s47
    %p54 = scmp.eq.s32.totalorder %s16, 1
    %p55 = por %p53, %p54
    %p56 = scmp.ne.s32.totalorder %s47, %s48
    %p57 = scmp.eq.s32.totalorder %s16, 0
    %p58 = por %p56, %p57
    %p59 = scmp.ne.s32.totalorder %s47, %s48
    %p60 = scmp.eq.s32.totalorder %s17, 1
    %p61 = por %p59, %p60
    %p63 = scmp.ne.s32.totalorder %s48, %s62
    %p64 = scmp.eq.s32.totalorder %s17, 0
    %p65 = por %p63, %p64
    %s67 = sadd.s32 %s66, 1
    %p70 = scmp.eq.s32.totalorder %s11, 1
    %p71 = scmp.ne.s32.totalorder %s66, %s68
    %p72 = scmp.eq.s32.totalorder %s11, 0
    %p73 = por %p71, %p72
    %p74 = scmp.ne.s32.totalorder %s66, %s68
    %p75 = scmp.eq.s32.totalorder %s16, 1
    %p76 = por %p74, %p75
    %p77 = scmp.ne.s32.totalorder %s68, %s69
    %p78 = scmp.eq.s32.totalorder %s16, 0
    %p79 = por %p77, %p78
    %p80 = scmp.ne.s32.totalorder %s68, %s69
    %p81 = scmp.eq.s32.totalorder %s17, 1
    %p82 = por %p80, %p81
    %p84 = scmp.ne.s32.totalorder %s69, %s83
    %p85 = scmp.eq.s32.totalorder %s17, 0
    %p86 = por %p84, %p85
    %s88 = sadd.s32 %s87, 1
    %p91 = scmp.eq.s32.totalorder %s11, 1
    %p92 = scmp.ne.s32.totalorder %s87, %s89
    %p93 = scmp.eq.s32.totalorder %s11, 0
    %p94 = por %p92, %p93
    %p95 = scmp.ne.s32.totalorder %s87, %s89
    %p96 = scmp.eq.s32.totalorder %s16, 1
    %p97 = por %p95, %p96
    %p98 = scmp.ne.s32.totalorder %s89, %s90
    %p99 = scmp.eq.s32.totalorder %s16, 0
    %p100 = por %p98, %p99
    %p101 = scmp.ne.s32.totalorder %s89, %s90
    %p102 = scmp.eq.s32.totalorder %s17, 1
    %p103 = por %p101, %p102
    %p105 = scmp.ne.s32.totalorder %s90, %s104
    %p106 = scmp.eq.s32.totalorder %s17, 0
    %p107 = por %p105, %p106
    %s109 = sadd.s32 %s108, 1
    %p112 = scmp.eq.s32.totalorder %s11, 1
    %p113 = scmp.ne.s32.totalorder %s108, %s110
    %p114 = scmp.eq.s32.totalorder %s11, 0
    %p115 = por %p113, %p114
    %p116 = scmp.ne.s32.totalorder %s108, %s110
    %p117 = scmp.eq.s32.totalorder %s16, 1
    %p118 = por %p116, %p117
    %p119 = scmp.ne.s32.totalorder %s110, %s111
    %p120 = scmp.eq.s32.totalorder %s16, 0
    %p121 = por %p119, %p120
    %p122 = scmp.ne.s32.totalorder %s110, %s111
    %p123 = scmp.eq.s32.totalorder %s17, 1
    %p124 = por %p122, %p123
    %p126 = scmp.ne.s32.totalorder %s111, %s125
    %p127 = scmp.eq.s32.totalorder %s17, 0
    %p128 = por %p126, %p127
    %s129 = ssub.s32 %s11, %s18
    %p130 = scmp.eq.s32.totalorder %s129, 0
    %s132 = sadd.s32 %s131, 1
    %s133 = scalar_select %p130, %s131, %s132
    %p136 = pneg %p130
    %p137 = scmp.eq.s32.totalorder %s11, 1
    %p138 = por %p136, %p137
    %p139 = scmp.ne.s32.totalorder %s131, %s134
    %p140 = scmp.eq.s32.totalorder %s11, 0
    %p141 = por %p139, %p140
    %p142 = scmp.ne.s32.totalorder %s131, %s134
    %p143 = scmp.eq.s32.totalorder %s16, 1
    %p144 = por %p142, %p143
    %p145 = scmp.ne.s32.totalorder %s134, %s135
    %p146 = scmp.eq.s32.totalorder %s16, 0
    %p147 = por %p145, %p146
    %p148 = scmp.ne.s32.totalorder %s134, %s135
    %p149 = scmp.eq.s32.totalorder %s17, 1
    %p150 = por %p148, %p149
    %p152 = scmp.ne.s32.totalorder %s135, %s151
    %p153 = scmp.eq.s32.totalorder %s17, 0
    %p154 = por %p152, %p153
    %p155 = scmp.le.s32.totalorder 1, %s11
    %p156 = scmp.lt.s32.totalorder %s11, 3
    %p157 = pnand %p155, %p156
    %p158 = pneg %p157
    // Predicated region
    $region9: #{resblock_forward.1} parent=5 // pred_check
      _
    $region10: #{resblock_forward.1} parent=5 // pred_check_branch
      %160 = sbr.rel (%p157) target = $region12
    $region11: #{resblock_forward.1} parent=5 // pred_region
      %s161 = ssub.s32 %s11, 1
      // Predicated region
      $region13: #{resblock_forward.1} parent=11 // pred_check
        %p162 = pneg %p58
      $region14: #{resblock_forward.1} parent=11 // pred_check_branch
        %164 = sbr.rel (%p162) target = $region16
      $region15: #{resblock_forward.1} parent=11 // pred_region
        _
      $region16: #{resblock_forward.1} parent=11 // pred_fallthru
        _
      // Predicated region
      $region17: #{resblock_forward.1} parent=11 // pred_check
        %p165 = pneg %p79
      $region18: #{resblock_forward.1} parent=11 // pred_check_branch
        %167 = sbr.rel (%p165) target = $region20
      $region19: #{resblock_forward.1} parent=11 // pred_region
        _
      $region20: #{resblock_forward.1} parent=11 // pred_fallthru
        _
      // Predicated region
      $region21: #{resblock_forward.1} parent=11 // pred_check
        %p168 = pneg %p100
      $region22: #{resblock_forward.1} parent=11 // pred_check_branch
        %170 = sbr.rel (%p168) target = $region24
      $region23: #{resblock_forward.1} parent=11 // pred_region
        _
      $region24: #{resblock_forward.1} parent=11 // pred_fallthru
        _
      // Predicated region
      $region25: #{resblock_forward.1} parent=11 // pred_check
        %p171 = pneg %p121
      $region26: #{resblock_forward.1} parent=11 // pred_check_branch
        %173 = sbr.rel (%p171) target = $region28
      $region27: #{resblock_forward.1} parent=11 // pred_region
        _
      $region28: #{resblock_forward.1} parent=11 // pred_fallthru
        _
    $region12: #{resblock_forward.1} parent=5 // pred_fallthru
      _
    %p174 = scmp.lt.s32.totalorder %s11, 2
    // Predicated region
    $region29: #{resblock_forward.1} parent=5 // pred_check
      %p175 = pneg %p174
    $region30: #{resblock_forward.1} parent=5 // pred_check_branch
      %177 = sbr.rel (%p175) target = $region32
    $region31: #{resblock_forward.1} parent=5 // pred_region
      // Predicated region
      $region33: #{resblock_forward.1} parent=31 // pred_check
        %p178 = pneg %p31
      $region34: #{resblock_forward.1} parent=31 // pred_check_branch
        %180 = sbr.rel (%p178) target = $region36
      $region35: #{resblock_forward.1} parent=31 // pred_region
        %s181 = smul.u32 4, %s11
        %p182 = scmp.lt.s32.totalorder %s181, 7
        %s183 = scalar_select %p182, %s181, 7
        %s184 = smul.addr %s183, 4
        %s185 = smul.addr %s184, 8
        %s186 = scalar_lea.vmem %s0, %s185
        %s187 = smul.u32 4, %s11
      $region36: #{resblock_forward.1} parent=31 // pred_fallthru
        _
    $region32: #{resblock_forward.1} parent=5 // pred_fallthru
      _
    %p188 = scmp.le.s32.totalorder 1, %s11
    %p189 = scmp.lt.s32.totalorder %s11, 3
    %p190 = pnand %p188, %p189
    %p191 = pneg %p190
    // Predicated region
    $region37: #{resblock_forward.1} parent=5 // pred_check
      _
    $region38: #{resblock_forward.1} parent=5 // pred_check_branch
      %193 = sbr.rel (%p190) target = $region40
    $region39: #{resblock_forward.1} parent=5 // pred_region
      %s194 = ssub.s32 %s11, 1
      %s195 = smul.u32 4, %s16
      %p196 = scmp.lt.s32.totalorder %s195, 7
      %s197 = scalar_select %p196, %s195, 7
      %s198 = smul.addr %s197, 4
      %s199 = smul.addr %s198, 8
      %s200 = scalar_lea.vmem %s0, %s199
      %p201 = pneg %p37
      %p202 = pneg %p34
      %p203 = pneg %p58
      %p204 = pneg %p55
      %p205 = pneg %p79
      %p206 = pneg %p76
      %p207 = pneg %p100
      %p208 = pneg %p97
      %p209 = pneg %p121
      %p210 = pneg %p118
      %p211 = pneg %p147
      %p212 = pneg %p144
      %s213 = smul.u32 4, %s16
      %p214 = scmp.lt.s32.totalorder %s213, 7
      %s215 = scalar_select %p214, %s213, 7
      %s216 = smul.addr %s215, 4
      %s217 = smul.addr %s216, 8
      %s218 = scalar_lea.vmem %s5, %s217
      %s219 = smul.u32 4, %s16
      %p220 = scmp.lt.s32.totalorder %s219, 7
      %s221 = scalar_select %p220, %s219, 7
      %s222 = smul.addr %s221, 4
      %s223 = smul.addr %s222, 8
      %s224 = scalar_lea.vmem %s0, %s223
      %s225 = smul.u32 4, %s16
      %s226 = smul.u32 4, %s16
      %p227 = scmp.lt.s32.totalorder %s226, 7
      %s228 = scalar_select %p227, %s226, 7
      %s229 = smul.addr %s228, 4
      %s230 = smul.addr %s229, 8
      %s231 = scalar_lea.vmem %s5, %s230
      %s232 = smul.u32 4, %s16
      %233 = vst [vmem:[#allocation2] sm:$0x3] 0.0
      %234 = vst [vmem:[#allocation2 + $0x8] sm:$0x3] 0.0
      %235 = vst [vmem:[#allocation2 + $0x20] sm:$0xc] 0.0
      %236 = vst [vmem:[#allocation2 + $0x28] sm:$0xc] 0.0
      %237 = vst [vmem:[#allocation2 + $0x40] sm:$0x30] 0.0
      %238 = vst [vmem:[#allocation2 + $0x48] sm:$0x30] 0.0
      %239 = vst [vmem:[#allocation2 + $0x60] sm:$0xc0] 0.0
      %240 = vst [vmem:[#allocation2 + $0x68] sm:$0xc0] 0.0
      %241 = vst [vmem:[#allocation2 + $0x90] sm:$0x3] 0.0
      %242 = vst [vmem:[#allocation2 + $0x98] sm:$0x3] 0.0
      %v243 = vld [vmem:[%s224] sm:$0xff]
      %v244 = vld [vmem:[%s224 + $0x8] sm:$0xff]
      %v245 = vld [vmem:[%s224 + $0x10] sm:$0xff]
      %v246 = vld [vmem:[%s224 + $0x18] sm:$0xff]
      %vm251 = vcmask 1041408
      %v252 = vrot.slane %v243, 6
      %v253 = vrot.slane %v244, 6
      %v254 = vrot.slane %v245, 6
      %v255 = vsel %vm251, %v252, %v254
      %v256 = vrot.slane %v246, 6
      %v257 = vsel %vm251, %v253, %v256
      %264 = vst [vmem:[#allocation2] sm:$0xfc] %v252
      %265 = vst [vmem:[#allocation2 + $0x8] sm:$0xfc] %v253
      %266 = vst [vmem:[#allocation2 + $0x10] sm:$0xff] %v255
      %267 = vst [vmem:[#allocation2 + $0x18] sm:$0xff] %v257
      %268 = vst [vmem:[#allocation2 + $0x20] sm:$0x3] %v254
      %269 = vst [vmem:[#allocation2 + $0x28] sm:$0x3] %v256
      %s270 = scalar_lea.vmem %s224, 32
      %v271 = vld [vmem:[%s270] sm:$0xff]
      %v272 = vld [vmem:[%s270 + $0x8] sm:$0xff]
      %v273 = vld [vmem:[%s270 + $0x10] sm:$0xff]
      %v274 = vld [vmem:[%s270 + $0x18] sm:$0xff]
      %vm279 = vcmask 1043456
      %v280 = vrot.slane %v271, 4
      %v281 = vrot.slane %v272, 4
      %v282 = vrot.slane %v273, 4
      %v283 = vsel %vm279, %v280, %v282
      %v284 = vrot.slane %v274, 4
      %v285 = vsel %vm279, %v281, %v284
      %292 = vst [vmem:[#allocation2 + $0x20] sm:$0xf0] %v280
      %293 = vst [vmem:[#allocation2 + $0x28] sm:$0xf0] %v281
      %294 = vst [vmem:[#allocation2 + $0x30] sm:$0xff] %v283
      %295 = vst [vmem:[#allocation2 + $0x38] sm:$0xff] %v285
      %296 = vst [vmem:[#allocation2 + $0x40] sm:$0xf] %v282
      %297 = vst [vmem:[#allocation2 + $0x48] sm:$0xf] %v284
      %s298 = scalar_lea.vmem %s224, 64
      %v299 = vld [vmem:[%s298] sm:$0xff]
      %v300 = vld [vmem:[%s298 + $0x8] sm:$0xff]
      %v301 = vld [vmem:[%s298 + $0x10] sm:$0xff]
      %v302 = vld [vmem:[%s298 + $0x18] sm:$0xff]
      %vm307 = vcmask 1045504
      %v308 = vrot.slane %v299, 2
      %v309 = vrot.slane %v300, 2
      %v310 = vrot.slane %v301, 2
      %v311 = vsel %vm307, %v308, %v310
      %v312 = vrot.slane %v302, 2
      %v313 = vsel %vm307, %v309, %v312
      %320 = vst [vmem:[#allocation2 + $0x40] sm:$0xc0] %v308
      %321 = vst [vmem:[#allocation2 + $0x48] sm:$0xc0] %v309
      %322 = vst [vmem:[#allocation2 + $0x50] sm:$0xff] %v311
      %323 = vst [vmem:[#allocation2 + $0x58] sm:$0xff] %v313
      %324 = vst [vmem:[#allocation2 + $0x60] sm:$0x3f] %v310
      %325 = vst [vmem:[#allocation2 + $0x68] sm:$0x3f] %v312
      %s326 = scalar_lea.vmem %s224, 96
      %v327 = vld [vmem:[%s326] sm:$0xff]
      %v328 = vld [vmem:[%s326 + $0x8] sm:$0xff]
      %v329 = vld [vmem:[%s326 + $0x10] sm:$0xff]
      %v330 = vld [vmem:[%s326 + $0x18] sm:$0xff]
      %331 = vst [vmem:[#allocation2 + $0x70] sm:$0xff] %v327
      %332 = vst [vmem:[#allocation2 + $0x78] sm:$0xff] %v328
      %333 = vst [vmem:[#allocation2 + $0x80] sm:$0xff] %v329
      %334 = vst [vmem:[#allocation2 + $0x88] sm:$0xff] %v330
      %v335 = vld [vmem:[#allocation2] sm:$0xff]
      %v336 = vld [vmem:[#allocation2 + $0x8] sm:$0xff]
      %v337 = vld [vmem:[#allocation2 + $0x10] sm:$0xff]
      %v338 = vld [vmem:[#allocation2 + $0x18] sm:$0xff]
      %v339 = vld [vmem:[#allocation2 + $0x20] sm:$0xff]
      %v340 = vld [vmem:[#allocation2 + $0x28] sm:$0xff]
      %v341 = vld [vmem:[#allocation2 + $0x30] sm:$0xff]
      %v342 = vld [vmem:[#allocation2 + $0x38] sm:$0xff]
      %v343 = vld [vmem:[#allocation2 + $0x40] sm:$0xff]
      %v344 = vld [vmem:[#allocation2 + $0x48] sm:$0xff]
      %v345 = vld [vmem:[#allocation2 + $0x50] sm:$0xff]
      %v346 = vld [vmem:[#allocation2 + $0x58] sm:$0xff]
      %v347 = vld [vmem:[#allocation2 + $0x60] sm:$0xff]
      %v348 = vld [vmem:[#allocation2 + $0x68] sm:$0xff]
      %v349 = vld [vmem:[#allocation2 + $0x70] sm:$0xff]
      %v350 = vld [vmem:[#allocation2 + $0x78] sm:$0xff]
      %v351 = vld [vmem:[#allocation2 + $0x80] sm:$0xff]
      %v352 = vld [vmem:[#allocation2 + $0x88] sm:$0xff]
      %v353 = vpack.c.bf16 %v337, %v335
      %v354 = vpack.c.bf16 %v338, %v336
      %v355 = vpack.c.bf16 %v341, %v339
      %v356 = vpack.c.bf16 %v342, %v340
      %v357 = vpack.c.bf16 %v345, %v343
      %v358 = vpack.c.bf16 %v346, %v344
      %v359 = vpack.c.bf16 %v349, %v347
      %v360 = vpack.c.bf16 %v350, %v348
      %v361 = vpack.c.bf16 %v351, %v351
      %v362 = vpack.c.bf16 %v352, %v352
      %v373 = vunpack.c.l.b16 %v353
      %v374 = vunpack.c.l.b16 %v354
      %v375 = vunpack.c.h.b16 %v353
      %v376 = vunpack.c.h.b16 %v354
      %v377 = vunpack.c.l.b16 %v355
      %v378 = vunpack.c.l.b16 %v356
      %v379 = vunpack.c.h.b16 %v355
      %v380 = vunpack.c.h.b16 %v356
      %v381 = vunpack.c.l.b16 %v357
      %v382 = vunpack.c.l.b16 %v358
      %v383 = vunpack.c.h.b16 %v357
      %v384 = vunpack.c.h.b16 %v358
      %v385 = vunpack.c.l.b16 %v359
      %v386 = vunpack.c.l.b16 %v360
      %v387 = vunpack.c.h.b16 %v359
      %v388 = vunpack.c.h.b16 %v360
      %v389 = vunpack.c.l.b16 %v361
      %v390 = vunpack.c.l.b16 %v362
      %v391 = vpack.c.b16 %v374, %v373
      %v392 = vpack.c.b16 %v376, %v375
      %v393 = vpack.c.b16 %v378, %v377
      %v394 = vpack.c.b16 %v380, %v379
      %v395 = vpack.c.b16 %v382, %v381
      %v396 = vpack.c.b16 %v384, %v383
      %v397 = vpack.c.b16 %v386, %v385
      %v398 = vpack.c.b16 %v388, %v387
      %v399 = vpack.c.b16 %v390, %v389
      %409 = vst [vmem:[#allocation4] sm:$0xff] %v391
      %410 = vst [vmem:[#allocation4 + $0x18] sm:$0xff] %v392
      %411 = vst [vmem:[#allocation4 + $0x30] sm:$0xff] %v393
      %412 = vst [vmem:[#allocation4 + $0x48] sm:$0xff] %v394
      %413 = vst [vmem:[#allocation4 + $0x60] sm:$0xff] %v395
      %414 = vst [vmem:[#allocation4 + $0x78] sm:$0xff] %v396
      %415 = vst [vmem:[#allocation4 + $0x90] sm:$0xff] %v397
      %416 = vst [vmem:[#allocation4 + $0xa8] sm:$0xff] %v398
      %417 = vst [vmem:[#allocation4 + $0xc0] sm:$0xff] %v399
      %v418 = vld [vmem:[#allocation2] sm:$0xfe]
      %v419 = vld [vmem:[#allocation2 + $0x8] sm:$0xfe]
      %v420 = vld [vmem:[#allocation2 + $0x10] sm:$0xff]
      %v421 = vld [vmem:[#allocation2 + $0x18] sm:$0xff]
      %v422 = vld [vmem:[#allocation2 + $0x20] sm:$0xff]
      %v423 = vld [vmem:[#allocation2 + $0x28] sm:$0xff]
      %v424 = vld [vmem:[#allocation2 + $0x30] sm:$0xff]
      %v425 = vld [vmem:[#allocation2 + $0x38] sm:$0xff]
      %v426 = vld [vmem:[#allocation2 + $0x40] sm:$0xff]
      %v427 = vld [vmem:[#allocation2 + $0x48] sm:$0xff]
      %v428 = vld [vmem:[#allocation2 + $0x50] sm:$0xff]
      %v429 = vld [vmem:[#allocation2 + $0x58] sm:$0xff]
      %v430 = vld [vmem:[#allocation2 + $0x60] sm:$0xff]
      %v431 = vld [vmem:[#allocation2 + $0x68] sm:$0xff]
      %v432 = vld [vmem:[#allocation2 + $0x70] sm:$0xff]
      %v433 = vld [vmem:[#allocation2 + $0x78] sm:$0xff]
      %v434 = vld [vmem:[#allocation2 + $0x80] sm:$0xff]
      %v435 = vld [vmem:[#allocation2 + $0x88] sm:$0xff]
      %v436 = vld [vmem:[#allocation2 + $0x90] sm:$0x1]
      %v437 = vld [vmem:[#allocation2 + $0x98] sm:$0x1]
      %v438 = vpack.c.bf16 %v420, %v418
      %v439 = vpack.c.bf16 %v421, %v419
      %v440 = vpack.c.bf16 %v424, %v422
      %v441 = vpack.c.bf16 %v425, %v423
      %v442 = vpack.c.bf16 %v428, %v426
      %v443 = vpack.c.bf16 %v429, %v427
      %v444 = vpack.c.bf16 %v432, %v430
      %v445 = vpack.c.bf16 %v433, %v431
      %v446 = vpack.c.bf16 %v436, %v434
      %v447 = vpack.c.bf16 %v437, %v435
      %v458 = vunpack.c.l.b16 %v438
      %v459 = vunpack.c.l.b16 %v439
      %v460 = vunpack.c.h.b16 %v438
      %v461 = vunpack.c.h.b16 %v439
      %v462 = vunpack.c.l.b16 %v440
      %v463 = vunpack.c.l.b16 %v441
      %v464 = vunpack.c.h.b16 %v440
      %v465 = vunpack.c.h.b16 %v441
      %v466 = vunpack.c.l.b16 %v442
      %v467 = vunpack.c.l.b16 %v443
      %v468 = vunpack.c.h.b16 %v442
      %v469 = vunpack.c.h.b16 %v443
      %v470 = vunpack.c.l.b16 %v444
      %v471 = vunpack.c.l.b16 %v445
      %v472 = vunpack.c.h.b16 %v444
      %v473 = vunpack.c.h.b16 %v445
      %v474 = vunpack.c.l.b16 %v446
      %v475 = vunpack.c.l.b16 %v447
      %v476 = vunpack.c.h.b16 %v446
      %v477 = vunpack.c.h.b16 %v447
      %v478 = vpack.c.b16 %v459, %v458
      %v479 = vpack.c.b16 %v461, %v460
      %v480 = vpack.c.b16 %v463, %v462
      %v481 = vpack.c.b16 %v465, %v464
      %v482 = vpack.c.b16 %v467, %v466
      %v483 = vpack.c.b16 %v469, %v468
      %v484 = vpack.c.b16 %v471, %v470
      %v485 = vpack.c.b16 %v473, %v472
      %v486 = vpack.c.b16 %v475, %v474
      %v487 = vpack.c.b16 %v477, %v476
      %vm488 = vsmask.f32 3328
      %vm489 = vsmask.f32 7440
      %vm490 = vmor %vm488, %vm489
      %v492 = vshrl.u32 %v478, 16
      %v494 = vrot.slane %v492, 4
      %v495 = vshll.u32 %v478, 16
      %v497 = vrot.slane %v495, 5
      %v498 = vor.u32 %v494, %v497
      %v499 = vrot.slane %v498, 4
      %v501 = vshll.u32 %v479, 16
      %v503 = vrot.slane %v501, 5
      %v504 = vsel %vm490, %v499, %v503
      %v505 = vshrl.u32 %v479, 16
      %v507 = vrot.slane %v505, 4
      %v508 = vor.u32 %v507, %v503
      %v509 = vrot.slane %v508, 4
      %v511 = vshll.u32 %v480, 16
      %v513 = vrot.slane %v511, 5
      %v514 = vsel %vm490, %v509, %v513
      %v515 = vshrl.u32 %v480, 16
      %v517 = vrot.slane %v515, 4
      %v518 = vor.u32 %v517, %v513
      %v519 = vrot.slane %v518, 4
      %v521 = vshll.u32 %v481, 16
      %v523 = vrot.slane %v521, 5
      %v524 = vsel %vm490, %v519, %v523
      %v525 = vshrl.u32 %v481, 16
      %v527 = vrot.slane %v525, 4
      %v528 = vor.u32 %v527, %v523
      %v529 = vrot.slane %v528, 4
      %v531 = vshll.u32 %v482, 16
      %v533 = vrot.slane %v531, 5
      %v534 = vsel %vm490, %v529, %v533
      %v535 = vshrl.u32 %v482, 16
      %v537 = vrot.slane %v535, 4
      %v538 = vor.u32 %v537, %v533
      %v539 = vrot.slane %v538, 4
      %v541 = vshll.u32 %v483, 16
      %v543 = vrot.slane %v541, 5
      %v544 = vsel %vm490, %v539, %v543
      %v545 = vshrl.u32 %v483, 16
      %v547 = vrot.slane %v545, 4
      %v548 = vor.u32 %v547, %v543
      %v549 = vrot.slane %v548, 4
      %v551 = vshll.u32 %v484, 16
      %v553 = vrot.slane %v551, 5
      %v554 = vsel %vm490, %v549, %v553
      %v555 = vshrl.u32 %v484, 16
      %v557 = vrot.slane %v555, 4
      %v558 = vor.u32 %v557, %v553
      %v559 = vrot.slane %v558, 4
      %v561 = vshll.u32 %v485, 16
      %v563 = vrot.slane %v561, 5
      %v564 = vsel %vm490, %v559, %v563
      %v565 = vshrl.u32 %v485, 16
      %v567 = vrot.slane %v565, 4
      %v568 = vor.u32 %v567, %v563
      %v569 = vrot.slane %v568, 4
      %v571 = vshll.u32 %v486, 16
      %v573 = vrot.slane %v571, 5
      %v574 = vsel %vm490, %v569, %v573
      %v575 = vshrl.u32 %v486, 16
      %v577 = vrot.slane %v575, 4
      %v578 = vor.u32 %v577, %v573
      %v579 = vrot.slane %v578, 4
      %v581 = vshll.u32 %v487, 16
      %v583 = vrot.slane %v581, 5
      %v584 = vsel %vm490, %v579, %v583
      %594 = vst [vmem:[#allocation4 + $0x8] sm:$0xff] %v504
      %595 = vst [vmem:[#allocation4 + $0x20] sm:$0xff] %v514
      %596 = vst [vmem:[#allocation4 + $0x38] sm:$0xff] %v524
      %597 = vst [vmem:[#allocation4 + $0x50] sm:$0xff] %v534
      %598 = vst [vmem:[#allocation4 + $0x68] sm:$0xff] %v544
      %599 = vst [vmem:[#allocation4 + $0x80] sm:$0xff] %v554
      %600 = vst [vmem:[#allocation4 + $0x98] sm:$0xff] %v564
      %601 = vst [vmem:[#allocation4 + $0xb0] sm:$0xff] %v574
      %602 = vst [vmem:[#allocation4 + $0xc8] sm:$0xff] %v584
      %v603 = vld [vmem:[#allocation2] sm:$0xfc]
      %v604 = vld [vmem:[#allocation2 + $0x8] sm:$0xfc]
      %v605 = vld [vmem:[#allocation2 + $0x10] sm:$0xff]
      %v606 = vld [vmem:[#allocation2 + $0x18] sm:$0xff]
      %v607 = vld [vmem:[#allocation2 + $0x20] sm:$0xff]
      %v608 = vld [vmem:[#allocation2 + $0x28] sm:$0xff]
      %v609 = vld [vmem:[#allocation2 + $0x30] sm:$0xff]
      %v610 = vld [vmem:[#allocation2 + $0x38] sm:$0xff]
      %v611 = vld [vmem:[#allocation2 + $0x40] sm:$0xff]
      %v612 = vld [vmem:[#allocation2 + $0x48] sm:$0xff]
      %v613 = vld [vmem:[#allocation2 + $0x50] sm:$0xff]
      %v614 = vld [vmem:[#allocation2 + $0x58] sm:$0xff]
      %v615 = vld [vmem:[#allocation2 + $0x60] sm:$0xff]
      %v616 = vld [vmem:[#allocation2 + $0x68] sm:$0xff]
      %v617 = vld [vmem:[#allocation2 + $0x70] sm:$0xff]
      %v618 = vld [vmem:[#allocation2 + $0x78] sm:$0xff]
      %v619 = vld [vmem:[#allocation2 + $0x80] sm:$0xff]
      %v620 = vld [vmem:[#allocation2 + $0x88] sm:$0xff]
      %v621 = vld [vmem:[#allocation2 + $0x90] sm:$0x3]
      %v622 = vld [vmem:[#allocation2 + $0x98] sm:$0x3]
      %v623 = vpack.c.bf16 %v605, %v603
      %v624 = vpack.c.bf16 %v606, %v604
      %v625 = vpack.c.bf16 %v609, %v607
      %v626 = vpack.c.bf16 %v610, %v608
      %v627 = vpack.c.bf16 %v613, %v611
      %v628 = vpack.c.bf16 %v614, %v612
      %v629 = vpack.c.bf16 %v617, %v615
      %v630 = vpack.c.bf16 %v618, %v616
      %v631 = vpack.c.bf16 %v621, %v619
      %v632 = vpack.c.bf16 %v622, %v620
      %v643 = vunpack.c.l.b16 %v623
      %v644 = vunpack.c.l.b16 %v624
      %v645 = vunpack.c.h.b16 %v623
      %v646 = vunpack.c.h.b16 %v624
      %v647 = vunpack.c.l.b16 %v625
      %v648 = vunpack.c.l.b16 %v626
      %v649 = vunpack.c.h.b16 %v625
      %v650 = vunpack.c.h.b16 %v626
      %v651 = vunpack.c.l.b16 %v627
      %v652 = vunpack.c.l.b16 %v628
      %v653 = vunpack.c.h.b16 %v627
      %v654 = vunpack.c.h.b16 %v628
      %v655 = vunpack.c.l.b16 %v629
      %v656 = vunpack.c.l.b16 %v630
      %v657 = vunpack.c.h.b16 %v629
      %v658 = vunpack.c.h.b16 %v630
      %v659 = vunpack.c.l.b16 %v631
      %v660 = vunpack.c.l.b16 %v632
      %v661 = vunpack.c.h.b16 %v631
      %v662 = vunpack.c.h.b16 %v632
      %v663 = vpack.c.b16 %v644, %v643
      %v664 = vpack.c.b16 %v646, %v645
      %v665 = vpack.c.b16 %v648, %v647
      %v666 = vpack.c.b16 %v650, %v649
      %v667 = vpack.c.b16 %v652, %v651
      %v668 = vpack.c.b16 %v654, %v653
      %v669 = vpack.c.b16 %v656, %v655
      %v670 = vpack.c.b16 %v658, %v657
      %v671 = vpack.c.b16 %v660, %v659
      %v672 = vpack.c.b16 %v662, %v661
      %vm673 = vcmask 1042432
      %vm674 = vcmask 1046532
      %vm675 = vmor %vm673, %vm674
      %v676 = vrot.slane %v663, 5
      %v677 = vrot.slane %v676, 4
      %v678 = vrot.slane %v664, 5
      %v679 = vsel %vm675, %v677, %v678
      %v680 = vrot.slane %v678, 4
      %v681 = vrot.slane %v665, 5
      %v682 = vsel %vm675, %v680, %v681
      %v683 = vrot.slane %v681, 4
      %v684 = vrot.slane %v666, 5
      %v685 = vsel %vm675, %v683, %v684
      %v686 = vrot.slane %v684, 4
      %v687 = vrot.slane %v667, 5
      %v688 = vsel %vm675, %v686, %v687
      %v689 = vrot.slane %v687, 4
      %v690 = vrot.slane %v668, 5
      %v691 = vsel %vm675, %v689, %v690
      %v692 = vrot.slane %v690, 4
      %v693 = vrot.slane %v669, 5
      %v694 = vsel %vm675, %v692, %v693
      %v695 = vrot.slane %v693, 4
      %v696 = vrot.slane %v670, 5
      %v697 = vsel %vm675, %v695, %v696
      %v698 = vrot.slane %v696, 4
      %v699 = vrot.slane %v671, 5
      %v700 = vsel %vm675, %v698, %v699
      %v701 = vrot.slane %v699, 4
      %v702 = vrot.slane %v672, 5
      %v703 = vsel %vm675, %v701, %v702
      %713 = vst [vmem:[#allocation4 + $0x10] sm:$0xff] %v679
      %714 = vst [vmem:[#allocation4 + $0x28] sm:$0xff] %v682
      %715 = vst [vmem:[#allocation4 + $0x40] sm:$0xff] %v685
      %716 = vst [vmem:[#allocation4 + $0x58] sm:$0xff] %v688
      %717 = vst [vmem:[#allocation4 + $0x70] sm:$0xff] %v691
      %718 = vst [vmem:[#allocation4 + $0x88] sm:$0xff] %v694
      %719 = vst [vmem:[#allocation4 + $0xa0] sm:$0xff] %v697
      %720 = vst [vmem:[#allocation4 + $0xb8] sm:$0xff] %v700
      %721 = vst [vmem:[#allocation4 + $0xd0] sm:$0xff] %v703
      %v722 = vld [vmem:[#allocation4] sm:$0xff]
      %v723 = vld [vmem:[#allocation4 + $0x8] sm:$0xff]
      %v724 = vld [vmem:[#allocation4 + $0x10] sm:$0xff]
      %v725 = vld [vmem:[#allocation4 + $0x18] sm:$0xff]
      %v726 = vld [vmem:[#allocation4 + $0x20] sm:$0xff]
      %v727 = vld [vmem:[#allocation4 + $0x28] sm:$0xff]
      %v728 = vld [vmem:[#allocation4 + $0x30] sm:$0xff]
      %v729 = vld [vmem:[#allocation4 + $0x38] sm:$0xff]
      %v730 = vld [vmem:[#allocation4 + $0x40] sm:$0xff]
      %v731 = vld [vmem:[#allocation4 + $0x48] sm:$0xff]
      %v732 = vld [vmem:[#allocation4 + $0x50] sm:$0xff]
      %v733 = vld [vmem:[#allocation4 + $0x58] sm:$0xff]
      %v734 = vld [vmem:[#allocation4 + $0x60] sm:$0xff]
      %v735 = vld [vmem:[#allocation4 + $0x68] sm:$0xff]
      %v736 = vld [vmem:[#allocation4 + $0x70] sm:$0xff]
      %v737 = vld [vmem:[#allocation4 + $0x78] sm:$0xff]
      %v738 = vld [vmem:[#allocation4 + $0x80] sm:$0xff]
      %v739 = vld [vmem:[#allocation4 + $0x88] sm:$0xff]
      %v740 = vld [vmem:[#allocation4 + $0x90] sm:$0xff]
      %v741 = vld [vmem:[#allocation4 + $0x98] sm:$0xff]
      %v742 = vld [vmem:[#allocation4 + $0xa0] sm:$0xff]
      %v743 = vld [vmem:[#allocation4 + $0xa8] sm:$0xff]
      %v744 = vld [vmem:[#allocation4 + $0xb0] sm:$0xff]
      %v745 = vld [vmem:[#allocation4 + $0xb8] sm:$0xff]
      %v746 = vld [vmem:[#allocation4 + $0xc0] sm:$0xff]
      %v747 = vld [vmem:[#allocation4 + $0xc8] sm:$0xff]
      %v748 = vld [vmem:[#allocation4 + $0xd0] sm:$0xff]
      %v749 = vld [vmem:[%s1] sm:$0xff]
      %v750 = vld [vmem:[%s1 + $0x8] sm:$0xff]
      %v751 = vld [vmem:[%s1 + $0x10] sm:$0xff]
      %v752 = vld [vmem:[%s1 + $0x18] sm:$0xff]
      %v753 = vld [vmem:[%s1 + $0x20] sm:$0xff]
      %v754 = vld [vmem:[%s1 + $0x28] sm:$0xff]
      %v755 = vld [vmem:[%s1 + $0x30] sm:$0xff]
      %v756 = vld [vmem:[%s1 + $0x38] sm:$0xff]
      %v757 = vld [vmem:[%s1 + $0x40] sm:$0xff]
      %v758 = vld [vmem:[%s1 + $0x48] sm:$0xff]
      %v759 = vld [vmem:[%s1 + $0x50] sm:$0xff]
      %v760 = vld [vmem:[%s1 + $0x58] sm:$0xff]
      %v761 = vld [vmem:[%s1 + $0x60] sm:$0xff]
      %v762 = vld [vmem:[%s1 + $0x68] sm:$0xff]
      %v763 = vld [vmem:[%s1 + $0x70] sm:$0xff]
      %v764 = vld [vmem:[%s1 + $0x78] sm:$0xff]
      %v765 = vld [vmem:[%s1 + $0x80] sm:$0xff]
      %v766 = vld [vmem:[%s1 + $0x88] sm:$0xff]
      %v767 = vld [vmem:[%s1 + $0x90] sm:$0xff]
      %v768 = vld [vmem:[%s1 + $0x98] sm:$0xff]
      %v769 = vld [vmem:[%s1 + $0xa0] sm:$0xff]
      %v770 = vld [vmem:[%s1 + $0xa8] sm:$0xff]
      %v771 = vld [vmem:[%s1 + $0xb0] sm:$0xff]
      %v772 = vld [vmem:[%s1 + $0xb8] sm:$0xff]
      %v773 = vld [vmem:[%s1 + $0xc0] sm:$0xff]
      %v774 = vld [vmem:[%s1 + $0xc8] sm:$0xff]
      %v775 = vld [vmem:[%s1 + $0xd0] sm:$0xff]
      %v776 = vld [vmem:[%s1 + $0xd8] sm:$0xff]
      %v777 = vld [vmem:[%s1 + $0xe0] sm:$0xff]
      %v778 = vld [vmem:[%s1 + $0xe8] sm:$0xff]
      %v779 = vld [vmem:[%s1 + $0xf0] sm:$0xff]
      %v780 = vld [vmem:[%s1 + $0xf8] sm:$0xff]
      %v781 = vld [vmem:[%s1 + $0x100] sm:$0xff]
      %v782 = vld [vmem:[%s1 + $0x108] sm:$0xff]
      %v783 = vld [vmem:[%s1 + $0x110] sm:$0xff]
      %v784 = vld [vmem:[%s1 + $0x118] sm:$0xff]
      %v785 = vld [vmem:[%s1 + $0x120] sm:$0xff]
      %v786 = vld [vmem:[%s1 + $0x128] sm:$0xff]
      %v787 = vld [vmem:[%s1 + $0x130] sm:$0xff]
      %v788 = vld [vmem:[%s1 + $0x138] sm:$0xff]
      %v789 = vld [vmem:[%s1 + $0x140] sm:$0xff]
      %v790 = vld [vmem:[%s1 + $0x148] sm:$0xff]
      %v791 = vld [vmem:[%s1 + $0x150] sm:$0xff]
      %v792 = vld [vmem:[%s1 + $0x158] sm:$0xff]
      %v793 = vld [vmem:[%s1 + $0x160] sm:$0xff]
      %v794 = vld [vmem:[%s1 + $0x168] sm:$0xff]
      %v795 = vld [vmem:[%s1 + $0x170] sm:$0xff]
      %v796 = vld [vmem:[%s1 + $0x178] sm:$0xff]
      %v797 = vld [vmem:[%s1 + $0x180] sm:$0xff]
      %v798 = vld [vmem:[%s1 + $0x188] sm:$0xff]
      %v799 = vld [vmem:[%s1 + $0x190] sm:$0xff]
      %v800 = vld [vmem:[%s1 + $0x198] sm:$0xff]
      %v801 = vld [vmem:[%s1 + $0x1a0] sm:$0xff]
      %v802 = vld [vmem:[%s1 + $0x1a8] sm:$0xff]
      %v803 = vld [vmem:[%s1 + $0x1b0] sm:$0xff]
      %v804 = vld [vmem:[%s1 + $0x1b8] sm:$0xff]
      %v805 = vld [vmem:[%s1 + $0x1c0] sm:$0xff]
      %v806 = vld [vmem:[%s1 + $0x1c8] sm:$0xff]
      %v807 = vld [vmem:[%s1 + $0x1d0] sm:$0xff]
      %v808 = vld [vmem:[%s1 + $0x1d8] sm:$0xff]
      %v809 = vld [vmem:[%s1 + $0x1e0] sm:$0xff]
      %v810 = vld [vmem:[%s1 + $0x1e8] sm:$0xff]
      %v811 = vld [vmem:[%s1 + $0x1f0] sm:$0xff]
      %v812 = vld [vmem:[%s1 + $0x1f8] sm:$0xff]
      %v813 = vld [vmem:[%s1 + $0x200] sm:$0xff]
      %v814 = vld [vmem:[%s1 + $0x208] sm:$0xff]
      %v815 = vld [vmem:[%s1 + $0x210] sm:$0xff]
      %v816 = vld [vmem:[%s1 + $0x218] sm:$0xff]
      %v817 = vld [vmem:[%s1 + $0x220] sm:$0xff]
      %v818 = vld [vmem:[%s1 + $0x228] sm:$0xff]
      %v819 = vld [vmem:[%s1 + $0x230] sm:$0xff]
      %v820 = vld [vmem:[%s1 + $0x238] sm:$0xff]
      %v821 = vld [vmem:[%s1 + $0x240] sm:$0xff]
      %v822 = vld [vmem:[%s1 + $0x248] sm:$0xff]
      %v823 = vld [vmem:[%s1 + $0x250] sm:$0xff]
      %v824 = vld [vmem:[%s1 + $0x258] sm:$0xff]
      %v825 = vld [vmem:[%s1 + $0x260] sm:$0xff]
      %v826 = vld [vmem:[%s1 + $0x268] sm:$0xff]
      %v827 = vld [vmem:[%s1 + $0x270] sm:$0xff]
      %v828 = vld [vmem:[%s1 + $0x278] sm:$0xff]
      %v829 = vld [vmem:[%s1 + $0x280] sm:$0xff]
      %v830 = vld [vmem:[%s1 + $0x288] sm:$0xff]
      %v831 = vld [vmem:[%s1 + $0x290] sm:$0xff]
      %v832 = vld [vmem:[%s1 + $0x298] sm:$0xff]
      %v833 = vld [vmem:[%s1 + $0x2a0] sm:$0xff]
      %v834 = vld [vmem:[%s1 + $0x2a8] sm:$0xff]
      %v835 = vld [vmem:[%s1 + $0x2b0] sm:$0xff]
      %v836 = vld [vmem:[%s1 + $0x2b8] sm:$0xff]
      %v837 = vld [vmem:[%s1 + $0x2c0] sm:$0xff]
      %v838 = vld [vmem:[%s1 + $0x2c8] sm:$0xff]
      %v839 = vld [vmem:[%s1 + $0x2d0] sm:$0xff]
      %v840 = vld [vmem:[%s1 + $0x2d8] sm:$0xff]
      %v841 = vld [vmem:[%s1 + $0x2e0] sm:$0xff]
      %v842 = vld [vmem:[%s1 + $0x2e8] sm:$0xff]
      %v843 = vld [vmem:[%s1 + $0x2f0] sm:$0xff]
      %v844 = vld [vmem:[%s1 + $0x2f8] sm:$0xff]
      %v845 = vld [vmem:[%s2] sm:$0x3]
      %v847 = vlaneseq
      %v848 = vshrl.u32 %v847, 7
      %v849 = vsub.s32 0, %v848
      %v850 = vrot.slane %v845, %v849
      %v851 = vlaneseq
      %v852 = vshrl.u32 %v851, 7
      %v853 = vsub.s32 1, %v852
      %v854 = vrot.slane %v845, %v853
      %v884 = vunpack.c.l.b16 %v722
      %v885 = vunpack.c.h.b16 %v722
      %v886 = vunpack.c.l.b16 %v723
      %v887 = vunpack.c.h.b16 %v723
      %v888 = vunpack.c.l.b16 %v724
      %v889 = vunpack.c.h.b16 %v724
      %v890 = vunpack.c.l.b16 %v725
      %v891 = vunpack.c.h.b16 %v725
      %v892 = vunpack.c.l.b16 %v726
      %v893 = vunpack.c.h.b16 %v726
      %v894 = vunpack.c.l.b16 %v727
      %v895 = vunpack.c.h.b16 %v727
      %v896 = vunpack.c.l.b16 %v728
      %v897 = vunpack.c.h.b16 %v728
      %v898 = vunpack.c.l.b16 %v729
      %v899 = vunpack.c.h.b16 %v729
      %v900 = vunpack.c.l.b16 %v730
      %v901 = vunpack.c.h.b16 %v730
      %v902 = vunpack.c.l.b16 %v731
      %v903 = vunpack.c.h.b16 %v731
      %v904 = vunpack.c.l.b16 %v732
      %v905 = vunpack.c.h.b16 %v732
      %v906 = vunpack.c.l.b16 %v733
      %v907 = vunpack.c.h.b16 %v733
      %v908 = vunpack.c.l.b16 %v734
      %v909 = vunpack.c.h.b16 %v734
      %v910 = vunpack.c.l.b16 %v735
      %v911 = vunpack.c.h.b16 %v735
      %v912 = vunpack.c.l.b16 %v736
      %v913 = vunpack.c.h.b16 %v736
      %v914 = vunpack.c.l.b16 %v737
      %v915 = vunpack.c.h.b16 %v737
      %v916 = vunpack.c.l.b16 %v738
      %v917 = vunpack.c.h.b16 %v738
      %v918 = vunpack.c.l.b16 %v739
      %v919 = vunpack.c.h.b16 %v739
      %v920 = vunpack.c.l.b16 %v740
      %v921 = vunpack.c.h.b16 %v740
      %v922 = vunpack.c.l.b16 %v741
      %v923 = vunpack.c.h.b16 %v741
      %v924 = vunpack.c.l.b16 %v742
      %v925 = vunpack.c.h.b16 %v742
      %v926 = vunpack.c.l.b16 %v743
      %v927 = vunpack.c.h.b16 %v743
      %v928 = vunpack.c.l.b16 %v744
      %v929 = vunpack.c.h.b16 %v744
      %v930 = vunpack.c.l.b16 %v745
      %v931 = vunpack.c.h.b16 %v745
      %v932 = vunpack.c.l.b16 %v746
      %v933 = vunpack.c.h.b16 %v746
      %v934 = vunpack.c.l.b16 %v747
      %v935 = vunpack.c.h.b16 %v747
      %v936 = vunpack.c.l.b16 %v748
      %v937 = vunpack.c.h.b16 %v748
      %v938 = vpack.c.b16 %v890, %v884
      %v939 = vpack.c.b16 %v891, %v885
      %v940 = vpack.c.b16 %v892, %v886
      %v941 = vpack.c.b16 %v893, %v887
      %v942 = vpack.c.b16 %v894, %v888
      %v943 = vpack.c.b16 %v895, %v889
      %v944 = vpack.c.b16 %v902, %v896
      %v945 = vpack.c.b16 %v903, %v897
      %v946 = vpack.c.b16 %v904, %v898
      %v947 = vpack.c.b16 %v905, %v899
      %v948 = vpack.c.b16 %v906, %v900
      %v949 = vpack.c.b16 %v907, %v901
      %v950 = vpack.c.b16 %v914, %v908
      %v951 = vpack.c.b16 %v915, %v909
      %v952 = vpack.c.b16 %v916, %v910
      %v953 = vpack.c.b16 %v917, %v911
      %v954 = vpack.c.b16 %v918, %v912
      %v955 = vpack.c.b16 %v919, %v913
      %v956 = vpack.c.b16 %v926, %v920
      %v957 = vpack.c.b16 %v927, %v921
      %v958 = vpack.c.b16 %v928, %v922
      %v959 = vpack.c.b16 %v929, %v923
      %v960 = vpack.c.b16 %v930, %v924
      %v961 = vpack.c.b16 %v931, %v925
      %v962 = vpack.c.b16 %v932, %v932
      %v963 = vpack.c.b16 %v933, %v933
      %v964 = vpack.c.b16 %v934, %v934
      %v965 = vpack.c.b16 %v935, %v935
      %v966 = vpack.c.b16 %v936, %v936
      %v967 = vpack.c.b16 %v937, %v937
      %v1094 = vunpack.c.l.b16 %v749
      %v1095 = vunpack.c.h.b16 %v749
      %v1096 = vunpack.c.l.b16 %v750
      %v1097 = vunpack.c.h.b16 %v750
      %v1098 = vunpack.c.l.b16 %v751
      %v1099 = vunpack.c.h.b16 %v751
      %v1100 = vunpack.c.l.b16 %v752
      %v1101 = vunpack.c.h.b16 %v752
      %v1102 = vunpack.c.l.b16 %v753
      %v1103 = vunpack.c.h.b16 %v753
      %v1104 = vunpack.c.l.b16 %v754
      %v1105 = vunpack.c.h.b16 %v754
      %v1106 = vunpack.c.l.b16 %v755
      %v1107 = vunpack.c.h.b16 %v755
      %v1108 = vunpack.c.l.b16 %v756
      %v1109 = vunpack.c.h.b16 %v756
      %v1110 = vunpack.c.l.b16 %v757
      %v1111 = vunpack.c.h.b16 %v757
      %v1112 = vunpack.c.l.b16 %v758
      %v1113 = vunpack.c.h.b16 %v758
      %v1114 = vunpack.c.l.b16 %v759
      %v1115 = vunpack.c.h.b16 %v759
      %v1116 = vunpack.c.l.b16 %v760
      %v1117 = vunpack.c.h.b16 %v760
      %v1118 = vunpack.c.l.b16 %v761
      %v1119 = vunpack.c.h.b16 %v761
      %v1120 = vunpack.c.l.b16 %v762
      %v1121 = vunpack.c.h.b16 %v762
      %v1122 = vunpack.c.l.b16 %v763
      %v1123 = vunpack.c.h.b16 %v763
      %v1124 = vunpack.c.l.b16 %v764
      %v1125 = vunpack.c.h.b16 %v764
      %v1126 = vunpack.c.l.b16 %v765
      %v1127 = vunpack.c.h.b16 %v765
      %v1128 = vunpack.c.l.b16 %v766
      %v1129 = vunpack.c.h.b16 %v766
      %v1130 = vunpack.c.l.b16 %v767
      %v1131 = vunpack.c.h.b16 %v767
      %v1132 = vunpack.c.l.b16 %v768
      %v1133 = vunpack.c.h.b16 %v768
      %v1134 = vunpack.c.l.b16 %v769
      %v1135 = vunpack.c.h.b16 %v769
      %v1136 = vunpack.c.l.b16 %v770
      %v1137 = vunpack.c.h.b16 %v770
      %v1138 = vunpack.c.l.b16 %v771
      %v1139 = vunpack.c.h.b16 %v771
      %v1140 = vunpack.c.l.b16 %v772
      %v1141 = vunpack.c.h.b16 %v772
      %v1142 = vunpack.c.l.b16 %v773
      %v1143 = vunpack.c.h.b16 %v773
      %v1144 = vunpack.c.l.b16 %v774
      %v1145 = vunpack.c.h.b16 %v774
      %v1146 = vunpack.c.l.b16 %v775
      %v1147 = vunpack.c.h.b16 %v775
      %v1148 = vunpack.c.l.b16 %v776
      %v1149 = vunpack.c.h.b16 %v776
      %v1150 = vunpack.c.l.b16 %v777
      %v1151 = vunpack.c.h.b16 %v777
      %v1152 = vunpack.c.l.b16 %v778
      %v1153 = vunpack.c.h.b16 %v778
      %v1154 = vunpack.c.l.b16 %v779
      %v1155 = vunpack.c.h.b16 %v779
      %v1156 = vunpack.c.l.b16 %v780
      %v1157 = vunpack.c.h.b16 %v780
      %v1158 = vunpack.c.l.b16 %v781
      %v1159 = vunpack.c.h.b16 %v781
      %v1160 = vunpack.c.l.b16 %v782
      %v1161 = vunpack.c.h.b16 %v782
      %v1162 = vunpack.c.l.b16 %v783
      %v1163 = vunpack.c.h.b16 %v783
      %v1164 = vunpack.c.l.b16 %v784
      %v1165 = vunpack.c.h.b16 %v784
      %v1166 = vunpack.c.l.b16 %v785
      %v1167 = vunpack.c.h.b16 %v785
      %v1168 = vunpack.c.l.b16 %v786
      %v1169 = vunpack.c.h.b16 %v786
      %v1170 = vunpack.c.l.b16 %v787
      %v1171 = vunpack.c.h.b16 %v787
      %v1172 = vunpack.c.l.b16 %v788
      %v1173 = vunpack.c.h.b16 %v788
      %v1174 = vunpack.c.l.b16 %v789
      %v1175 = vunpack.c.h.b16 %v789
      %v1176 = vunpack.c.l.b16 %v790
      %v1177 = vunpack.c.h.b16 %v790
      %v1178 = vunpack.c.l.b16 %v791
      %v1179 = vunpack.c.h.b16 %v791
      %v1180 = vunpack.c.l.b16 %v792
      %v1181 = vunpack.c.h.b16 %v792
      %v1182 = vunpack.c.l.b16 %v793
      %v1183 = vunpack.c.h.b16 %v793
      %v1184 = vunpack.c.l.b16 %v794
      %v1185 = vunpack.c.h.b16 %v794
      %v1186 = vunpack.c.l.b16 %v795
      %v1187 = vunpack.c.h.b16 %v795
      %v1188 = vunpack.c.l.b16 %v796
      %v1189 = vunpack.c.h.b16 %v796
      %v1190 = vunpack.c.l.b16 %v797
      %v1191 = vunpack.c.h.b16 %v797
      %v1192 = vunpack.c.l.b16 %v798
      %v1193 = vunpack.c.h.b16 %v798
      %v1194 = vunpack.c.l.b16 %v799
      %v1195 = vunpack.c.h.b16 %v799
      %v1196 = vunpack.c.l.b16 %v800
      %v1197 = vunpack.c.h.b16 %v800
      %v1198 = vunpack.c.l.b16 %v801
      %v1199 = vunpack.c.h.b16 %v801
      %v1200 = vunpack.c.l.b16 %v802
      %v1201 = vunpack.c.h.b16 %v802
      %v1202 = vunpack.c.l.b16 %v803
      %v1203 = vunpack.c.h.b16 %v803
      %v1204 = vunpack.c.l.b16 %v804
      %v1205 = vunpack.c.h.b16 %v804
      %v1206 = vunpack.c.l.b16 %v805
      %v1207 = vunpack.c.h.b16 %v805
      %v1208 = vunpack.c.l.b16 %v806
      %v1209 = vunpack.c.h.b16 %v806
      %v1210 = vunpack.c.l.b16 %v807
      %v1211 = vunpack.c.h.b16 %v807
      %v1212 = vunpack.c.l.b16 %v808
      %v1213 = vunpack.c.h.b16 %v808
      %v1214 = vunpack.c.l.b16 %v809
      %v1215 = vunpack.c.h.b16 %v809
      %v1216 = vunpack.c.l.b16 %v810
      %v1217 = vunpack.c.h.b16 %v810
      %v1218 = vunpack.c.l.b16 %v811
      %v1219 = vunpack.c.h.b16 %v811
      %v1220 = vunpack.c.l.b16 %v812
      %v1221 = vunpack.c.h.b16 %v812
      %v1222 = vunpack.c.l.b16 %v813
      %v1223 = vunpack.c.h.b16 %v813
      %v1224 = vunpack.c.l.b16 %v814
      %v1225 = vunpack.c.h.b16 %v814
      %v1226 = vunpack.c.l.b16 %v815
      %v1227 = vunpack.c.h.b16 %v815
      %v1228 = vunpack.c.l.b16 %v816
      %v1229 = vunpack.c.h.b16 %v816
      %v1230 = vunpack.c.l.b16 %v817
      %v1231 = vunpack.c.h.b16 %v817
      %v1232 = vunpack.c.l.b16 %v818
      %v1233 = vunpack.c.h.b16 %v818
      %v1234 = vunpack.c.l.b16 %v819
      %v1235 = vunpack.c.h.b16 %v819
      %v1236 = vunpack.c.l.b16 %v820
      %v1237 = vunpack.c.h.b16 %v820
      %v1238 = vunpack.c.l.b16 %v821
      %v1239 = vunpack.c.h.b16 %v821
      %v1240 = vunpack.c.l.b16 %v822
      %v1241 = vunpack.c.h.b16 %v822
      %v1242 = vunpack.c.l.b16 %v823
      %v1243 = vunpack.c.h.b16 %v823
      %v1244 = vunpack.c.l.b16 %v824
      %v1245 = vunpack.c.h.b16 %v824
      %v1246 = vunpack.c.l.b16 %v825
      %v1247 = vunpack.c.h.b16 %v825
      %v1248 = vunpack.c.l.b16 %v826
      %v1249 = vunpack.c.h.b16 %v826
      %v1250 = vunpack.c.l.b16 %v827
      %v1251 = vunpack.c.h.b16 %v827
      %v1252 = vunpack.c.l.b16 %v828
      %v1253 = vunpack.c.h.b16 %v828
      %v1254 = vunpack.c.l.b16 %v829
      %v1255 = vunpack.c.h.b16 %v829
      %v1256 = vunpack.c.l.b16 %v830
      %v1257 = vunpack.c.h.b16 %v830
      %v1258 = vunpack.c.l.b16 %v831
      %v1259 = vunpack.c.h.b16 %v831
      %v1260 = vunpack.c.l.b16 %v832
      %v1261 = vunpack.c.h.b16 %v832
      %v1262 = vunpack.c.l.b16 %v833
      %v1263 = vunpack.c.h.b16 %v833
      %v1264 = vunpack.c.l.b16 %v834
      %v1265 = vunpack.c.h.b16 %v834
      %v1266 = vunpack.c.l.b16 %v835
      %v1267 = vunpack.c.h.b16 %v835
      %v1268 = vunpack.c.l.b16 %v836
      %v1269 = vunpack.c.h.b16 %v836
      %v1270 = vunpack.c.l.b16 %v837
      %v1271 = vunpack.c.h.b16 %v837
      %v1272 = vunpack.c.l.b16 %v838
      %v1273 = vunpack.c.h.b16 %v838
      %v1274 = vunpack.c.l.b16 %v839
      %v1275 = vunpack.c.h.b16 %v839
      %v1276 = vunpack.c.l.b16 %v840
      %v1277 = vunpack.c.h.b16 %v840
      %v1278 = vunpack.c.l.b16 %v841
      %v1279 = vunpack.c.h.b16 %v841
      %v1280 = vunpack.c.l.b16 %v842
      %v1281 = vunpack.c.h.b16 %v842
      %v1282 = vunpack.c.l.b16 %v843
      %v1283 = vunpack.c.h.b16 %v843
      %v1284 = vunpack.c.l.b16 %v844
      %v1285 = vunpack.c.h.b16 %v844
      %v1286 = vpack.c.b16 %v1096, %v1094
      %v1287 = vpack.c.b16 %v1097, %v1095
      %v1288 = vpack.c.b16 %v1100, %v1098
      %v1289 = vpack.c.b16 %v1101, %v1099
      %v1290 = vpack.c.b16 %v1104, %v1102
      %v1291 = vpack.c.b16 %v1105, %v1103
      %v1292 = vpack.c.b16 %v1108, %v1106
      %v1293 = vpack.c.b16 %v1109, %v1107
      %v1294 = vpack.c.b16 %v1112, %v1110
      %v1295 = vpack.c.b16 %v1113, %v1111
      %v1296 = vpack.c.b16 %v1116, %v1114
      %v1297 = vpack.c.b16 %v1117, %v1115
      %v1298 = vpack.c.b16 %v1120, %v1118
      %v1299 = vpack.c.b16 %v1121, %v1119
      %v1300 = vpack.c.b16 %v1124, %v1122
      %v1301 = vpack.c.b16 %v1125, %v1123
      %v1302 = vpack.c.b16 %v1128, %v1126
      %v1303 = vpack.c.b16 %v1129, %v1127
      %v1304 = vpack.c.b16 %v1132, %v1130
      %v1305 = vpack.c.b16 %v1133, %v1131
      %v1306 = vpack.c.b16 %v1136, %v1134
      %v1307 = vpack.c.b16 %v1137, %v1135
      %v1308 = vpack.c.b16 %v1140, %v1138
      %v1309 = vpack.c.b16 %v1141, %v1139
      %v1310 = vpack.c.b16 %v1144, %v1142
      %v1311 = vpack.c.b16 %v1145, %v1143
      %v1312 = vpack.c.b16 %v1148, %v1146
      %v1313 = vpack.c.b16 %v1149, %v1147
      %v1314 = vpack.c.b16 %v1152, %v1150
      %v1315 = vpack.c.b16 %v1153, %v1151
      %v1316 = vpack.c.b16 %v1156, %v1154
      %v1317 = vpack.c.b16 %v1157, %v1155
      %v1318 = vpack.c.b16 %v1160, %v1158
      %v1319 = vpack.c.b16 %v1161, %v1159
      %v1320 = vpack.c.b16 %v1164, %v1162
      %v1321 = vpack.c.b16 %v1165, %v1163
      %v1322 = vpack.c.b16 %v1168, %v1166
      %v1323 = vpack.c.b16 %v1169, %v1167
      %v1324 = vpack.c.b16 %v1172, %v1170
      %v1325 = vpack.c.b16 %v1173, %v1171
      %v1326 = vpack.c.b16 %v1176, %v1174
      %v1327 = vpack.c.b16 %v1177, %v1175
      %v1328 = vpack.c.b16 %v1180, %v1178
      %v1329 = vpack.c.b16 %v1181, %v1179
      %v1330 = vpack.c.b16 %v1184, %v1182
      %v1331 = vpack.c.b16 %v1185, %v1183
      %v1332 = vpack.c.b16 %v1188, %v1186
      %v1333 = vpack.c.b16 %v1189, %v1187
      %v1334 = vpack.c.b16 %v1192, %v1190
      %v1335 = vpack.c.b16 %v1193, %v1191
      %v1336 = vpack.c.b16 %v1196, %v1194
      %v1337 = vpack.c.b16 %v1197, %v1195
      %v1338 = vpack.c.b16 %v1200, %v1198
      %v1339 = vpack.c.b16 %v1201, %v1199
      %v1340 = vpack.c.b16 %v1204, %v1202
      %v1341 = vpack.c.b16 %v1205, %v1203
      %v1342 = vpack.c.b16 %v1208, %v1206
      %v1343 = vpack.c.b16 %v1209, %v1207
      %v1344 = vpack.c.b16 %v1212, %v1210
      %v1345 = vpack.c.b16 %v1213, %v1211
      %v1346 = vpack.c.b16 %v1216, %v1214
      %v1347 = vpack.c.b16 %v1217, %v1215
      %v1348 = vpack.c.b16 %v1220, %v1218
      %v1349 = vpack.c.b16 %v1221, %v1219
      %v1350 = vpack.c.b16 %v1224, %v1222
      %v1351 = vpack.c.b16 %v1225, %v1223
      %v1352 = vpack.c.b16 %v1228, %v1226
      %v1353 = vpack.c.b16 %v1229, %v1227
      %v1354 = vpack.c.b16 %v1232, %v1230
      %v1355 = vpack.c.b16 %v1233, %v1231
      %v1356 = vpack.c.b16 %v1236, %v1234
      %v1357 = vpack.c.b16 %v1237, %v1235
      %v1358 = vpack.c.b16 %v1240, %v1238
      %v1359 = vpack.c.b16 %v1241, %v1239
      %v1360 = vpack.c.b16 %v1244, %v1242
      %v1361 = vpack.c.b16 %v1245, %v1243
      %v1362 = vpack.c.b16 %v1248, %v1246
      %v1363 = vpack.c.b16 %v1249, %v1247
      %v1364 = vpack.c.b16 %v1252, %v1250
      %v1365 = vpack.c.b16 %v1253, %v1251
      %v1366 = vpack.c.b16 %v1256, %v1254
      %v1367 = vpack.c.b16 %v1257, %v1255
      %v1368 = vpack.c.b16 %v1260, %v1258
      %v1369 = vpack.c.b16 %v1261, %v1259
      %v1370 = vpack.c.b16 %v1264, %v1262
      %v1371 = vpack.c.b16 %v1265, %v1263
      %v1372 = vpack.c.b16 %v1268, %v1266
      %v1373 = vpack.c.b16 %v1269, %v1267
      %v1374 = vpack.c.b16 %v1272, %v1270
      %v1375 = vpack.c.b16 %v1273, %v1271
      %v1376 = vpack.c.b16 %v1276, %v1274
      %v1377 = vpack.c.b16 %v1277, %v1275
      %v1378 = vpack.c.b16 %v1280, %v1278
      %v1379 = vpack.c.b16 %v1281, %v1279
      %v1380 = vpack.c.b16 %v1284, %v1282
      %v1381 = vpack.c.b16 %v1285, %v1283
      %1478 = vmatprep.subr.bf16.mxu0 %v1287
      %1479 = vmatpush1.bf16.msra.mxu0 %v1286
      %1480 = vmatprep.subr.bf16.mxu0 %v1289
      %1481 = vmatpush1.bf16.msra.mxu0 %v1288
      %1482 = vmatprep.subr.bf16.mxu0 %v1291
      %1483 = vmatpush1.bf16.msra.mxu0 %v1290
      %1484 = vmatprep.subr.bf16.mxu0 %v1293
      %1485 = vmatpush1.bf16.msra.mxu0 %v1292
      %1486 = vmatprep.subr.bf16.mxu0 %v1295
      %1487 = vmatpush1.bf16.msra.mxu0 %v1294
      %1488 = vmatprep.subr.bf16.mxu0 %v1297
      %1489 = vmatpush1.bf16.msra.mxu0 %v1296
      %1490 = vmatprep.subr.bf16.mxu0 %v1299
      %1491 = vmatpush1.bf16.msra.mxu0 %v1298
      %1492 = vmatprep.subr.bf16.mxu0 %v1301
      %1493 = vmatpush1.bf16.msra.mxu0 %v1300
      %1494 = vmatprep.subr.bf16.mxu0 %v1303
      %1495 = vmatpush1.bf16.msra.mxu0 %v1302
      %1496 = vmatprep.subr.bf16.mxu0 %v1305
      %1497 = vmatpush1.bf16.msra.mxu0 %v1304
      %1498 = vmatprep.subr.bf16.mxu0 %v1307
      %1499 = vmatpush1.bf16.msra.mxu0 %v1306
      %1500 = vmatprep.subr.bf16.mxu0 %v1309
      %1501 = vmatpush1.bf16.msra.mxu0 %v1308
      %1502 = vmatprep.subr.bf16.mxu0 %v1311
      %1503 = vmatpush1.bf16.msra.mxu0 %v1310
      %1504 = vmatprep.subr.bf16.mxu0 %v1313
      %1505 = vmatpush1.bf16.msra.mxu0 %v1312
      %1506 = vmatprep.subr.bf16.mxu0 %v1315
      %1507 = vmatpush1.bf16.msra.mxu0 %v1314
      %1508 = vmatprep.subr.bf16.mxu0 %v1317
      %1509 = vmatpush1.bf16.msra.mxu0 %v1316
      %1510 = vmatprep.mubr.bf16.mxu0 %v939
      %1511 = vmatmul.mubr.bf16.gmra.mrb[0].mxu0 %v938
      %v1512 = vpop.f32.mrb[0].mxu0
      %v1513 = vadd.f32 %v850, %v1512
      %v1514 = vpop.f32.mrb[0].mxu0
      %v1515 = vadd.f32 %v854, %v1514
      %v1516 = vpop.f32.mrb[0].mxu0
      %v1517 = vadd.f32 %v850, %v1516
      %v1518 = vpop.f32.mrb[0].mxu0
      %v1519 = vadd.f32 %v854, %v1518
      %1520 = vmatprep.mubr.bf16.mxu0 %v945
      %1521 = vmatmul.mubr.bf16.gmra.mrb[0].mxu0 %v944
      %v1522 = vpop.f32.mrb[0].mxu0
      %v1523 = vadd.f32 %v850, %v1522
      %v1524 = vpop.f32.mrb[0].mxu0
      %v1525 = vadd.f32 %v854, %v1524
      %v1526 = vpop.f32.mrb[0].mxu0
      %v1527 = vadd.f32 %v850, %v1526
      %v1528 = vpop.f32.mrb[0].mxu0
      %v1529 = vadd.f32 %v854, %v1528
      %1530 = vmatprep.mubr.bf16.mxu0 %v951
      %1531 = vmatmul.mubr.bf16.gmra.mrb[0].mxu0 %v950
      %v1532 = vpop.f32.mrb[0].mxu0
      %v1533 = vadd.f32 %v850, %v1532
      %v1534 = vpop.f32.mrb[0].mxu0
      %v1535 = vadd.f32 %v854, %v1534
      %v1536 = vpop.f32.mrb[0].mxu0
      %v1537 = vadd.f32 %v850, %v1536
      %v1538 = vpop.f32.mrb[0].mxu0
      %v1539 = vadd.f32 %v854, %v1538
      %1540 = vmatprep.mubr.bf16.mxu0 %v957
      %1541 = vmatmul.mubr.bf16.gmra.mrb[0].mxu0 %v956
      %v1542 = vpop.f32.mrb[0].mxu0
      %v1543 = vadd.f32 %v850, %v1542
      %v1544 = vpop.f32.mrb[0].mxu0
      %v1545 = vadd.f32 %v854, %v1544
      %v1546 = vpop.f32.mrb[0].mxu0
      %v1547 = vadd.f32 %v850, %v1546
      %v1548 = vpop.f32.mrb[0].mxu0
      %v1549 = vadd.f32 %v854, %v1548
      %1550 = vmatprep.mubr.bf16.mxu0 %v963
      %1551 = vmatmul.mubr.bf16.gmra.mrb[0].mxu0 %v962
      %v1552 = vpop.f32.mrb[0].mxu0
      %v1553 = vadd.f32 %v850, %v1552
      %v1554 = vpop.f32.mrb[0].mxu0
      %v1555 = vadd.f32 %v854, %v1554
      %v1556 = vpop.f32.mrb[0].mxu0
      %v1557 = vpop.f32.mrb[0].mxu0
      %1558 = vdwg.mxu0
      %1559 = vmatprep.subr.bf16.mxu0 %v1319
      %1560 = vmatpush1.bf16.msra.mxu0 %v1318
      %1561 = vmatprep.subr.bf16.mxu0 %v1321
      %1562 = vmatpush1.bf16.msra.mxu0 %v1320
      %1563 = vmatprep.subr.bf16.mxu0 %v1323
      %1564 = vmatpush1.bf16.msra.mxu0 %v1322
      %1565 = vmatprep.subr.bf16.mxu0 %v1325
      %1566 = vmatpush1.bf16.msra.mxu0 %v1324
      %1567 = vmatprep.subr.bf16.mxu0 %v1327
      %1568 = vmatpush1.bf16.msra.mxu0 %v1326
      %1569 = vmatprep.subr.bf16.mxu0 %v1329
      %1570 = vmatpush1.bf16.msra.mxu0 %v1328
      %1571 = vmatprep.subr.bf16.mxu0 %v1331
      %1572 = vmatpush1.bf16.msra.mxu0 %v1330
      %1573 = vmatprep.subr.bf16.mxu0 %v1333
      %1574 = vmatpush1.bf16.msra.mxu0 %v1332
      %1575 = vmatprep.subr.bf16.mxu0 %v1335
      %1576 = vmatpush1.bf16.msra.mxu0 %v1334
      %1577 = vmatprep.subr.bf16.mxu0 %v1337
      %1578 = vmatpush1.bf16.msra.mxu0 %v1336
      %1579 = vmatprep.subr.bf16.mxu0 %v1339
      %1580 = vmatpush1.bf16.msra.mxu0 %v1338
      %1581 = vmatprep.subr.bf16.mxu0 %v1341
      %1582 = vmatpush1.bf16.msra.mxu0 %v1340
      %1583 = vmatprep.subr.bf16.mxu0 %v1343
      %1584 = vmatpush1.bf16.msra.mxu0 %v1342
      %1585 = vmatprep.subr.bf16.mxu0 %v1345
      %1586 = vmatpush1.bf16.msra.mxu0 %v1344
      %1587 = vmatprep.subr.bf16.mxu0 %v1347
      %1588 = vmatpush1.bf16.msra.mxu0 %v1346
      %1589 = vmatprep.subr.bf16.mxu0 %v1349
      %1590 = vmatpush1.bf16.msra.mxu0 %v1348
      %1591 = vmatprep.mubr.bf16.mxu0 %v941
      %1592 = vmatmul.mubr.bf16.gmra.mrb[0].mxu0 %v940
      %v1593 = vpop.f32.mrb[0].mxu0
      %v1594 = vadd.f32 %v1513, %v1593
      %v1595 = vpop.f32.mrb[0].mxu0
      %v1596 = vadd.f32 %v1515, %v1595
      %v1597 = vpop.f32.mrb[0].mxu0
      %v1598 = vadd.f32 %v1517, %v1597
      %v1599 = vpop.f32.mrb[0].mxu0
      %v1600 = vadd.f32 %v1519, %v1599
      %1601 = vmatprep.mubr.bf16.mxu0 %v947
      %1602 = vmatmul.mubr.bf16.gmra.mrb[0].mxu0 %v946
      %v1603 = vpop.f32.mrb[0].mxu0
      %v1604 = vadd.f32 %v1523, %v1603
      %v1605 = vpop.f32.mrb[0].mxu0
      %v1606 = vadd.f32 %v1525, %v1605
      %v1607 = vpop.f32.mrb[0].mxu0
      %v1608 = vadd.f32 %v1527, %v1607
      %v1609 = vpop.f32.mrb[0].mxu0
      %v1610 = vadd.f32 %v1529, %v1609
      %1611 = vmatprep.mubr.bf16.mxu0 %v953
      %1612 = vmatmul.mubr.bf16.gmra.mrb[0].mxu0 %v952
      %v1613 = vpop.f32.mrb[0].mxu0
      %v1614 = vadd.f32 %v1533, %v1613
      %v1615 = vpop.f32.mrb[0].mxu0
      %v1616 = vadd.f32 %v1535, %v1615
      %v1617 = vpop.f32.mrb[0].mxu0
      %v1618 = vadd.f32 %v1537, %v1617
      %v1619 = vpop.f32.mrb[0].mxu0
      %v1620 = vadd.f32 %v1539, %v1619
      %1621 = vmatprep.mubr.bf16.mxu0 %v959
      %1622 = vmatmul.mubr.bf16.gmra.mrb[0].mxu0 %v958
      %v1623 = vpop.f32.mrb[0].mxu0
      %v1624 = vadd.f32 %v1543, %v1623
      %v1625 = vpop.f32.mrb[0].mxu0
      %v1626 = vadd.f32 %v1545, %v1625
      %v1627 = vpop.f32.mrb[0].mxu0
      %v1628 = vadd.f32 %v1547, %v1627
      %v1629 = vpop.f32.mrb[0].mxu0
      %v1630 = vadd.f32 %v1549, %v1629
      %1631 = vmatprep.mubr.bf16.mxu0 %v965
      %1632 = vmatmul.mubr.bf16.gmra.mrb[0].mxu0 %v964
      %v1633 = vpop.f32.mrb[0].mxu0
      %v1634 = vadd.f32 %v1553, %v1633
      %v1635 = vpop.f32.mrb[0].mxu0
      %v1636 = vadd.f32 %v1555, %v1635
      %v1637 = vpop.f32.mrb[0].mxu0
      %v1638 = vpop.f32.mrb[0].mxu0
      %1639 = vdwg.mxu0
      %1640 = vmatprep.subr.bf16.mxu0 %v1351
      %1641 = vmatpush1.bf16.msra.mxu0 %v1350
      %1642 = vmatprep.subr.bf16.mxu0 %v1353
      %1643 = vmatpush1.bf16.msra.mxu0 %v1352
      %1644 = vmatprep.subr.bf16.mxu0 %v1355
      %1645 = vmatpush1.bf16.msra.mxu0 %v1354
      %1646 = vmatprep.subr.bf16.mxu0 %v1357
      %1647 = vmatpush1.bf16.msra.mxu0 %v1356
      %1648 = vmatprep.subr.bf16.mxu0 %v1359
      %1649 = vmatpush1.bf16.msra.mxu0 %v1358
      %1650 = vmatprep.subr.bf16.mxu0 %v1361
      %1651 = vmatpush1.bf16.msra.mxu0 %v1360
      %1652 = vmatprep.subr.bf16.mxu0 %v1363
      %1653 = vmatpush1.bf16.msra.mxu0 %v1362
      %1654 = vmatprep.subr.bf16.mxu0 %v1365
      %1655 = vmatpush1.bf16.msra.mxu0 %v1364
      %1656 = vmatprep.subr.bf16.mxu0 %v1367
      %1657 = vmatpush1.bf16.msra.mxu0 %v1366
      %1658 = vmatprep.subr.bf16.mxu0 %v1369
      %1659 = vmatpush1.bf16.msra.mxu0 %v1368
      %1660 = vmatprep.subr.bf16.mxu0 %v1371
      %1661 = vmatpush1.bf16.msra.mxu0 %v1370
      %1662 = vmatprep.subr.bf16.mxu0 %v1373
      %1663 = vmatpush1.bf16.msra.mxu0 %v1372
      %1664 = vmatprep.subr.bf16.mxu0 %v1375
      %1665 = vmatpush1.bf16.msra.mxu0 %v1374
      %1666 = vmatprep.subr.bf16.mxu0 %v1377
      %1667 = vmatpush1.bf16.msra.mxu0 %v1376
      %1668 = vmatprep.subr.bf16.mxu0 %v1379
      %1669 = vmatpush1.bf16.msra.mxu0 %v1378
      %1670 = vmatprep.subr.bf16.mxu0 %v1381
      %1671 = vmatpush1.bf16.msra.mxu0 %v1380
      %1672 = vmatprep.mubr.bf16.mxu0 %v943
      %1673 = vmatmul.mubr.bf16.gmra.mrb[0].mxu0 %v942
      %v1674 = vpop.f32.mrb[0].mxu0
      %v1675 = vadd.f32 %v1594, %v1674
      %v1676 = vpop.f32.mrb[0].mxu0
      %v1677 = vadd.f32 %v1596, %v1676
      %v1678 = vpop.f32.mrb[0].mxu0
      %v1679 = vadd.f32 %v1598, %v1678
      %v1680 = vpop.f32.mrb[0].mxu0
      %v1681 = vadd.f32 %v1600, %v1680
      %1682 = vmatprep.mubr.bf16.mxu0 %v949
      %1683 = vmatmul.mubr.bf16.gmra.mrb[0].mxu0 %v948
      %v1684 = vpop.f32.mrb[0].mxu0
      %v1685 = vadd.f32 %v1604, %v1684
      %v1686 = vpop.f32.mrb[0].mxu0
      %v1687 = vadd.f32 %v1606, %v1686
      %v1688 = vpop.f32.mrb[0].mxu0
      %v1689 = vadd.f32 %v1608, %v1688
      %v1690 = vpop.f32.mrb[0].mxu0
      %v1691 = vadd.f32 %v1610, %v1690
      %1692 = vmatprep.mubr.bf16.mxu0 %v955
      %1693 = vmatmul.mubr.bf16.gmra.mrb[0].mxu0 %v954
      %v1694 = vpop.f32.mrb[0].mxu0
      %v1695 = vadd.f32 %v1614, %v1694
      %v1696 = vpop.f32.mrb[0].mxu0
      %v1697 = vadd.f32 %v1616, %v1696
      %v1698 = vpop.f32.mrb[0].mxu0
      %v1699 = vadd.f32 %v1618, %v1698
      %v1700 = vpop.f32.mrb[0].mxu0
      %v1701 = vadd.f32 %v1620, %v1700
      %1702 = vmatprep.mubr.bf16.mxu0 %v961
      %1703 = vmatmul.mubr.bf16.gmra.mrb[0].mxu0 %v960
      %v1704 = vpop.f32.mrb[0].mxu0
      %v1705 = vadd.f32 %v1624, %v1704
      %v1706 = vpop.f32.mrb[0].mxu0
      %v1707 = vadd.f32 %v1626, %v1706
      %v1708 = vpop.f32.mrb[0].mxu0
      %v1709 = vadd.f32 %v1628, %v1708
      %v1710 = vpop.f32.mrb[0].mxu0
      %v1711 = vadd.f32 %v1630, %v1710
      %1712 = vmatprep.mubr.bf16.mxu0 %v967
      %1713 = vmatmul.mubr.bf16.gmra.mrb[0].mxu0 %v966
      %v1714 = vpop.f32.mrb[0].mxu0
      %v1715 = vadd.f32 %v1634, %v1714
      %v1716 = vpop.f32.mrb[0].mxu0
      %v1717 = vadd.f32 %v1636, %v1716
      %v1718 = vpop.f32.mrb[0].mxu0
      %v1719 = vpop.f32.mrb[0].mxu0
      %1720 = vdwg.mxu0
      %v1721 = vmax.f32 %v1675, 0.0
      %v1722 = vmax.f32 %v1677, 0.0
      %v1723 = vmax.f32 %v1679, 0.0
      %v1724 = vmax.f32 %v1681, 0.0
      %v1725 = vmax.f32 %v1685, 0.0
      %v1726 = vmax.f32 %v1687, 0.0
      %v1727 = vmax.f32 %v1689, 0.0
      %v1728 = vmax.f32 %v1691, 0.0
      %v1729 = vmax.f32 %v1695, 0.0
      %v1730 = vmax.f32 %v1697, 0.0
      %v1731 = vmax.f32 %v1699, 0.0
      %v1732 = vmax.f32 %v1701, 0.0
      %v1733 = vmax.f32 %v1705, 0.0
      %v1734 = vmax.f32 %v1707, 0.0
      %v1735 = vmax.f32 %v1709, 0.0
      %v1736 = vmax.f32 %v1711, 0.0
      %v1737 = vmax.f32 %v1715, 0.0
      %v1738 = vmax.f32 %v1717, 0.0
      %vm1757 = vcmask 1040384
      %v1758 = vrot.slane %v1721, 7
      %v1759 = vrot.slane %v1722, 7
      %v1760 = vrot.slane %v1723, 7
      %v1761 = vsel %vm1757, %v1758, %v1760
      %v1762 = vrot.slane %v1724, 7
      %v1763 = vsel %vm1757, %v1759, %v1762
      %v1764 = vrot.slane %v1725, 7
      %v1765 = vsel %vm1757, %v1760, %v1764
      %v1766 = vrot.slane %v1726, 7
      %v1767 = vsel %vm1757, %v1762, %v1766
      %v1768 = vrot.slane %v1727, 7
      %v1769 = vsel %vm1757, %v1764, %v1768
      %v1770 = vrot.slane %v1728, 7
      %v1771 = vsel %vm1757, %v1766, %v1770
      %v1772 = vrot.slane %v1729, 7
      %v1773 = vsel %vm1757, %v1768, %v1772
      %v1774 = vrot.slane %v1730, 7
      %v1775 = vsel %vm1757, %v1770, %v1774
      %v1776 = vrot.slane %v1731, 7
      %v1777 = vsel %vm1757, %v1772, %v1776
      %v1778 = vrot.slane %v1732, 7
      %v1779 = vsel %vm1757, %v1774, %v1778
      %v1780 = vrot.slane %v1733, 7
      %v1781 = vsel %vm1757, %v1776, %v1780
      %v1782 = vrot.slane %v1734, 7
      %v1783 = vsel %vm1757, %v1778, %v1782
      %v1784 = vrot.slane %v1735, 7
      %v1785 = vsel %vm1757, %v1780, %v1784
      %v1786 = vrot.slane %v1736, 7
      %v1787 = vsel %vm1757, %v1782, %v1786
      %v1788 = vrot.slane %v1737, 7
      %v1789 = vsel %vm1757, %v1784, %v1788
      %v1790 = vrot.slane %v1738, 7
      %v1791 = vsel %vm1757, %v1786, %v1790
      %1812 = vst [vmem:[#allocation3] sm:$0xfe] %v1758
      %1813 = vst [vmem:[#allocation3 + $0x8] sm:$0xfe] %v1759
      %1814 = vst [vmem:[#allocation3 + $0x10] sm:$0xff] %v1761
      %1815 = vst [vmem:[#allocation3 + $0x18] sm:$0xff] %v1763
      %1816 = vst [vmem:[#allocation3 + $0x20] sm:$0xff] %v1765
      %1817 = vst [vmem:[#allocation3 + $0x28] sm:$0xff] %v1767
      %1818 = vst [vmem:[#allocation3 + $0x30] sm:$0xff] %v1769
      %1819 = vst [vmem:[#allocation3 + $0x38] sm:$0xff] %v1771
      %1820 = vst [vmem:[#allocation3 + $0x40] sm:$0xff] %v1773
      %1821 = vst [vmem:[#allocation3 + $0x48] sm:$0xff] %v1775
      %1822 = vst [vmem:[#allocation3 + $0x50] sm:$0xff] %v1777
      %1823 = vst [vmem:[#allocation3 + $0x58] sm:$0xff] %v1779
      %1824 = vst [vmem:[#allocation3 + $0x60] sm:$0xff] %v1781
      %1825 = vst [vmem:[#allocation3 + $0x68] sm:$0xff] %v1783
      %1826 = vst [vmem:[#allocation3 + $0x70] sm:$0xff] %v1785
      %1827 = vst [vmem:[#allocation3 + $0x78] sm:$0xff] %v1787
      %1828 = vst [vmem:[#allocation3 + $0x80] sm:$0xff] %v1789
      %1829 = vst [vmem:[#allocation3 + $0x88] sm:$0xff] %v1791
      %1830 = vst [vmem:[#allocation3 + $0x90] sm:$0x1] %v1788
      %1831 = vst [vmem:[#allocation3 + $0x98] sm:$0x1] %v1790
      %1832 = vst [vmem:[#allocation3] sm:$0x3] 0.0
      %1833 = vst [vmem:[#allocation3 + $0x8] sm:$0x3] 0.0
      %1834 = vst [vmem:[#allocation3 + $0x20] sm:$0xc] 0.0
      %1835 = vst [vmem:[#allocation3 + $0x28] sm:$0xc] 0.0
      %1836 = vst [vmem:[#allocation3 + $0x40] sm:$0x30] 0.0
      %1837 = vst [vmem:[#allocation3 + $0x48] sm:$0x30] 0.0
      %1838 = vst [vmem:[#allocation3 + $0x60] sm:$0xc0] 0.0
      %1839 = vst [vmem:[#allocation3 + $0x68] sm:$0xc0] 0.0
      %1840 = vst [vmem:[#allocation3 + $0x90] sm:$0x3] 0.0
      %1841 = vst [vmem:[#allocation3 + $0x98] sm:$0x3] 0.0
      %v1842 = vld [vmem:[#allocation3] sm:$0xff]
      %v1843 = vld [vmem:[#allocation3 + $0x8] sm:$0xff]
      %v1844 = vld [vmem:[#allocation3 + $0x10] sm:$0xff]
      %v1845 = vld [vmem:[#allocation3 + $0x18] sm:$0xff]
      %v1846 = vld [vmem:[#allocation3 + $0x20] sm:$0xff]
      %v1847 = vld [vmem:[#allocation3 + $0x28] sm:$0xff]
      %v1848 = vld [vmem:[#allocation3 + $0x30] sm:$0xff]
      %v1849 = vld [vmem:[#allocation3 + $0x38] sm:$0xff]
      %v1850 = vld [vmem:[#allocation3 + $0x40] sm:$0xff]
      %v1851 = vld [vmem:[#allocation3 + $0x48] sm:$0xff]
      %v1852 = vld [vmem:[#allocation3 + $0x50] sm:$0xff]
      %v1853 = vld [vmem:[#allocation3 + $0x58] sm:$0xff]
      %v1854 = vld [vmem:[#allocation3 + $0x60] sm:$0xff]
      %v1855 = vld [vmem:[#allocation3 + $0x68] sm:$0xff]
      %v1856 = vld [vmem:[#allocation3 + $0x70] sm:$0xff]
      %v1857 = vld [vmem:[#allocation3 + $0x78] sm:$0xff]
      %v1858 = vld [vmem:[#allocation3 + $0x80] sm:$0xff]
      %v1859 = vld [vmem:[#allocation3 + $0x88] sm:$0xff]
      %v1860 = vpack.c.bf16 %v1844, %v1842
      %v1861 = vpack.c.bf16 %v1845, %v1843
      %v1862 = vpack.c.bf16 %v1848, %v1846
      %v1863 = vpack.c.bf16 %v1849, %v1847
      %v1864 = vpack.c.bf16 %v1852, %v1850
      %v1865 = vpack.c.bf16 %v1853, %v1851
      %v1866 = vpack.c.bf16 %v1856, %v1854
      %v1867 = vpack.c.bf16 %v1857, %v1855
      %v1868 = vpack.c.bf16 %v1858, %v1858
      %v1869 = vpack.c.bf16 %v1859, %v1859
      %v1880 = vunpack.c.l.b16 %v1860
      %v1881 = vunpack.c.l.b16 %v1861
      %v1882 = vunpack.c.h.b16 %v1860
      %v1883 = vunpack.c.h.b16 %v1861
      %v1884 = vunpack.c.l.b16 %v1862
      %v1885 = vunpack.c.l.b16 %v1863
      %v1886 = vunpack.c.h.b16 %v1862
      %v1887 = vunpack.c.h.b16 %v1863
      %v1888 = vunpack.c.l.b16 %v1864
      %v1889 = vunpack.c.l.b16 %v1865
      %v1890 = vunpack.c.h.b16 %v1864
      %v1891 = vunpack.c.h.b16 %v1865
      %v1892 = vunpack.c.l.b16 %v1866
      %v1893 = vunpack.c.l.b16 %v1867
      %v1894 = vunpack.c.h.b16 %v1866
      %v1895 = vunpack.c.h.b16 %v1867
      %v1896 = vunpack.c.l.b16 %v1868
      %v1897 = vunpack.c.l.b16 %v1869
      %v1898 = vpack.c.b16 %v1881, %v1880
      %v1899 = vpack.c.b16 %v1883, %v1882
      %v1900 = vpack.c.b16 %v1885, %v1884
      %v1901 = vpack.c.b16 %v1887, %v1886
      %v1902 = vpack.c.b16 %v1889, %v1888
      %v1903 = vpack.c.b16 %v1891, %v1890
      %v1904 = vpack.c.b16 %v1893, %v1892
      %v1905 = vpack.c.b16 %v1895, %v1894
      %v1906 = vpack.c.b16 %v1897, %v1896
      %1916 = vst [vmem:[#allocation4] sm:$0xff] %v1898
      %1917 = vst [vmem:[#allocation4 + $0x18] sm:$0xff] %v1899
      %1918 = vst [vmem:[#allocation4 + $0x30] sm:$0xff] %v1900
      %1919 = vst [vmem:[#allocation4 + $0x48] sm:$0xff] %v1901
      %1920 = vst [vmem:[#allocation4 + $0x60] sm:$0xff] %v1902
      %1921 = vst [vmem:[#allocation4 + $0x78] sm:$0xff] %v1903
      %1922 = vst [vmem:[#allocation4 + $0x90] sm:$0xff] %v1904
      %1923 = vst [vmem:[#allocation4 + $0xa8] sm:$0xff] %v1905
      %1924 = vst [vmem:[#allocation4 + $0xc0] sm:$0xff] %v1906
      %v1925 = vld [vmem:[#allocation3] sm:$0xfe]
      %v1926 = vld [vmem:[#allocation3 + $0x8] sm:$0xfe]
      %v1927 = vld [vmem:[#allocation3 + $0x10] sm:$0xff]
      %v1928 = vld [vmem:[#allocation3 + $0x18] sm:$0xff]
      %v1929 = vld [vmem:[#allocation3 + $0x20] sm:$0xff]
      %v1930 = vld [vmem:[#allocation3 + $0x28] sm:$0xff]
      %v1931 = vld [vmem:[#allocation3 + $0x30] sm:$0xff]
      %v1932 = vld [vmem:[#allocation3 + $0x38] sm:$0xff]
      %v1933 = vld [vmem:[#allocation3 + $0x40] sm:$0xff]
      %v1934 = vld [vmem:[#allocation3 + $0x48] sm:$0xff]
      %v1935 = vld [vmem:[#allocation3 + $0x50] sm:$0xff]
      %v1936 = vld [vmem:[#allocation3 + $0x58] sm:$0xff]
      %v1937 = vld [vmem:[#allocation3 + $0x60] sm:$0xff]
      %v1938 = vld [vmem:[#allocation3 + $0x68] sm:$0xff]
      %v1939 = vld [vmem:[#allocation3 + $0x70] sm:$0xff]
      %v1940 = vld [vmem:[#allocation3 + $0x78] sm:$0xff]
      %v1941 = vld [vmem:[#allocation3 + $0x80] sm:$0xff]
      %v1942 = vld [vmem:[#allocation3 + $0x88] sm:$0xff]
      %v1943 = vld [vmem:[#allocation3 + $0x90] sm:$0x1]
      %v1944 = vld [vmem:[#allocation3 + $0x98] sm:$0x1]
      %v1945 = vpack.c.bf16 %v1927, %v1925
      %v1946 = vpack.c.bf16 %v1928, %v1926
      %v1947 = vpack.c.bf16 %v1931, %v1929
      %v1948 = vpack.c.bf16 %v1932, %v1930
      %v1949 = vpack.c.bf16 %v1935, %v1933
      %v1950 = vpack.c.bf16 %v1936, %v1934
      %v1951 = vpack.c.bf16 %v1939, %v1937
      %v1952 = vpack.c.bf16 %v1940, %v1938
      %v1953 = vpack.c.bf16 %v1943, %v1941
      %v1954 = vpack.c.bf16 %v1944, %v1942
      %v1965 = vunpack.c.l.b16 %v1945
      %v1966 = vunpack.c.l.b16 %v1946
      %v1967 = vunpack.c.h.b16 %v1945
      %v1968 = vunpack.c.h.b16 %v1946
      %v1969 = vunpack.c.l.b16 %v1947
      %v1970 = vunpack.c.l.b16 %v1948
      %v1971 = vunpack.c.h.b16 %v1947
      %v1972 = vunpack.c.h.b16 %v1948
      %v1973 = vunpack.c.l.b16 %v1949
      %v1974 = vunpack.c.l.b16 %v1950
      %v1975 = vunpack.c.h.b16 %v1949
      %v1976 = vunpack.c.h.b16 %v1950
      %v1977 = vunpack.c.l.b16 %v1951
      %v1978 = vunpack.c.l.b16 %v1952
      %v1979 = vunpack.c.h.b16 %v1951
      %v1980 = vunpack.c.h.b16 %v1952
      %v1981 = vunpack.c.l.b16 %v1953
      %v1982 = vunpack.c.l.b16 %v1954
      %v1983 = vunpack.c.h.b16 %v1953
      %v1984 = vunpack.c.h.b16 %v1954
      %v1985 = vpack.c.b16 %v1966, %v1965
      %v1986 = vpack.c.b16 %v1968, %v1967
      %v1987 = vpack.c.b16 %v1970, %v1969
      %v1988 = vpack.c.b16 %v1972, %v1971
      %v1989 = vpack.c.b16 %v1974, %v1973
      %v1990 = vpack.c.b16 %v1976, %v1975
      %v1991 = vpack.c.b16 %v1978, %v1977
      %v1992 = vpack.c.b16 %v1980, %v1979
      %v1993 = vpack.c.b16 %v1982, %v1981
      %v1994 = vpack.c.b16 %v1984, %v1983
      %v1996 = vshrl.u32 %v1985, 16
      %v1998 = vrot.slane %v1996, 4
      %v1999 = vshll.u32 %v1985, 16
      %v2001 = vrot.slane %v1999, 5
      %v2002 = vor.u32 %v1998, %v2001
      %v2003 = vrot.slane %v2002, 4
      %v2005 = vshll.u32 %v1986, 16
      %v2007 = vrot.slane %v2005, 5
      %v2008 = vsel %vm490, %v2003, %v2007
      %v2009 = vshrl.u32 %v1986, 16
      %v2011 = vrot.slane %v2009, 4
      %v2012 = vor.u32 %v2011, %v2007
      %v2013 = vrot.slane %v2012, 4
      %v2015 = vshll.u32 %v1987, 16
      %v2017 = vrot.slane %v2015, 5
      %v2018 = vsel %vm490, %v2013, %v2017
      %v2019 = vshrl.u32 %v1987, 16
      %v2021 = vrot.slane %v2019, 4
      %v2022 = vor.u32 %v2021, %v2017
      %v2023 = vrot.slane %v2022, 4
      %v2025 = vshll.u32 %v1988, 16
      %v2027 = vrot.slane %v2025, 5
      %v2028 = vsel %vm490, %v2023, %v2027
      %v2029 = vshrl.u32 %v1988, 16
      %v2031 = vrot.slane %v2029, 4
      %v2032 = vor.u32 %v2031, %v2027
      %v2033 = vrot.slane %v2032, 4
      %v2035 = vshll.u32 %v1989, 16
      %v2037 = vrot.slane %v2035, 5
      %v2038 = vsel %vm490, %v2033, %v2037
      %v2039 = vshrl.u32 %v1989, 16
      %v2041 = vrot.slane %v2039, 4
      %v2042 = vor.u32 %v2041, %v2037
      %v2043 = vrot.slane %v2042, 4
      %v2045 = vshll.u32 %v1990, 16
      %v2047 = vrot.slane %v2045, 5
      %v2048 = vsel %vm490, %v2043, %v2047
      %v2049 = vshrl.u32 %v1990, 16
      %v2051 = vrot.slane %v2049, 4
      %v2052 = vor.u32 %v2051, %v2047
      %v2053 = vrot.slane %v2052, 4
      %v2055 = vshll.u32 %v1991, 16
      %v2057 = vrot.slane %v2055, 5
      %v2058 = vsel %vm490, %v2053, %v2057
      %v2059 = vshrl.u32 %v1991, 16
      %v2061 = vrot.slane %v2059, 4
      %v2062 = vor.u32 %v2061, %v2057
      %v2063 = vrot.slane %v2062, 4
      %v2065 = vshll.u32 %v1992, 16
      %v2067 = vrot.slane %v2065, 5
      %v2068 = vsel %vm490, %v2063, %v2067
      %v2069 = vshrl.u32 %v1992, 16
      %v2071 = vrot.slane %v2069, 4
      %v2072 = vor.u32 %v2071, %v2067
      %v2073 = vrot.slane %v2072, 4
      %v2075 = vshll.u32 %v1993, 16
      %v2077 = vrot.slane %v2075, 5
      %v2078 = vsel %vm490, %v2073, %v2077
      %v2079 = vshrl.u32 %v1993, 16
      %v2081 = vrot.slane %v2079, 4
      %v2082 = vor.u32 %v2081, %v2077
      %v2083 = vrot.slane %v2082, 4
      %v2085 = vshll.u32 %v1994, 16
      %v2087 = vrot.slane %v2085, 5
      %v2088 = vsel %vm490, %v2083, %v2087
      %2098 = vst [vmem:[#allocation4 + $0x8] sm:$0xff] %v2008
      %2099 = vst [vmem:[#allocation4 + $0x20] sm:$0xff] %v2018
      %2100 = vst [vmem:[#allocation4 + $0x38] sm:$0xff] %v2028
      %2101 = vst [vmem:[#allocation4 + $0x50] sm:$0xff] %v2038
      %2102 = vst [vmem:[#allocation4 + $0x68] sm:$0xff] %v2048
      %2103 = vst [vmem:[#allocation4 + $0x80] sm:$0xff] %v2058
      %2104 = vst [vmem:[#allocation4 + $0x98] sm:$0xff] %v2068
      %2105 = vst [vmem:[#allocation4 + $0xb0] sm:$0xff] %v2078
      %2106 = vst [vmem:[#allocation4 + $0xc8] sm:$0xff] %v2088
      %v2107 = vld [vmem:[#allocation3] sm:$0xfc]
      %v2108 = vld [vmem:[#allocation3 + $0x8] sm:$0xfc]
      %v2109 = vld [vmem:[#allocation3 + $0x10] sm:$0xff]
      %v2110 = vld [vmem:[#allocation3 + $0x18] sm:$0xff]
      %v2111 = vld [vmem:[#allocation3 + $0x20] sm:$0xff]
      %v2112 = vld [vmem:[#allocation3 + $0x28] sm:$0xff]
      %v2113 = vld [vmem:[#allocation3 + $0x30] sm:$0xff]
      %v2114 = vld [vmem:[#allocation3 + $0x38] sm:$0xff]
      %v2115 = vld [vmem:[#allocation3 + $0x40] sm:$0xff]
      %v2116 = vld [vmem:[#allocation3 + $0x48] sm:$0xff]
      %v2117 = vld [vmem:[#allocation3 + $0x50] sm:$0xff]
      %v2118 = vld [vmem:[#allocation3 + $0x58] sm:$0xff]
      %v2119 = vld [vmem:[#allocation3 + $0x60] sm:$0xff]
      %v2120 = vld [vmem:[#allocation3 + $0x68] sm:$0xff]
      %v2121 = vld [vmem:[#allocation3 + $0x70] sm:$0xff]
      %v2122 = vld [vmem:[#allocation3 + $0x78] sm:$0xff]
      %v2123 = vld [vmem:[#allocation3 + $0x80] sm:$0xff]
      %v2124 = vld [vmem:[#allocation3 + $0x88] sm:$0xff]
      %v2125 = vld [vmem:[#allocation3 + $0x90] sm:$0x3]
      %v2126 = vld [vmem:[#allocation3 + $0x98] sm:$0x3]
      %v2127 = vpack.c.bf16 %v2109, %v2107
      %v2128 = vpack.c.bf16 %v2110, %v2108
      %v2129 = vpack.c.bf16 %v2113, %v2111
      %v2130 = vpack.c.bf16 %v2114, %v2112
      %v2131 = vpack.c.bf16 %v2117, %v2115
      %v2132 = vpack.c.bf16 %v2118, %v2116
      %v2133 = vpack.c.bf16 %v2121, %v2119
      %v2134 = vpack.c.bf16 %v2122, %v2120
      %v2135 = vpack.c.bf16 %v2125, %v2123
      %v2136 = vpack.c.bf16 %v2126, %v2124
      %v2147 = vunpack.c.l.b16 %v2127
      %v2148 = vunpack.c.l.b16 %v2128
      %v2149 = vunpack.c.h.b16 %v2127
      %v2150 = vunpack.c.h.b16 %v2128
      %v2151 = vunpack.c.l.b16 %v2129
      %v2152 = vunpack.c.l.b16 %v2130
      %v2153 = vunpack.c.h.b16 %v2129
      %v2154 = vunpack.c.h.b16 %v2130
      %v2155 = vunpack.c.l.b16 %v2131
      %v2156 = vunpack.c.l.b16 %v2132
      %v2157 = vunpack.c.h.b16 %v2131
      %v2158 = vunpack.c.h.b16 %v2132
      %v2159 = vunpack.c.l.b16 %v2133
      %v2160 = vunpack.c.l.b16 %v2134
      %v2161 = vunpack.c.h.b16 %v2133
      %v2162 = vunpack.c.h.b16 %v2134
      %v2163 = vunpack.c.l.b16 %v2135
      %v2164 = vunpack.c.l.b16 %v2136
      %v2165 = vunpack.c.h.b16 %v2135
      %v2166 = vunpack.c.h.b16 %v2136
      %v2167 = vpack.c.b16 %v2148, %v2147
      %v2168 = vpack.c.b16 %v2150, %v2149
      %v2169 = vpack.c.b16 %v2152, %v2151
      %v2170 = vpack.c.b16 %v2154, %v2153
      %v2171 = vpack.c.b16 %v2156, %v2155
      %v2172 = vpack.c.b16 %v2158, %v2157
      %v2173 = vpack.c.b16 %v2160, %v2159
      %v2174 = vpack.c.b16 %v2162, %v2161
      %v2175 = vpack.c.b16 %v2164, %v2163
      %v2176 = vpack.c.b16 %v2166, %v2165
      %v2177 = vrot.slane %v2167, 5
      %v2178 = vrot.slane %v2177, 4
      %v2179 = vrot.slane %v2168, 5
      %v2180 = vsel %vm675, %v2178, %v2179
      %v2181 = vrot.slane %v2179, 4
      %v2182 = vrot.slane %v2169, 5
      %v2183 = vsel %vm675, %v2181, %v2182
      %v2184 = vrot.slane %v2182, 4
      %v2185 = vrot.slane %v2170, 5
      %v2186 = vsel %vm675, %v2184, %v2185
      %v2187 = vrot.slane %v2185, 4
      %v2188 = vrot.slane %v2171, 5
      %v2189 = vsel %vm675, %v2187, %v2188
      %v2190 = vrot.slane %v2188, 4
      %v2191 = vrot.slane %v2172, 5
      %v2192 = vsel %vm675, %v2190, %v2191
      %v2193 = vrot.slane %v2191, 4
      %v2194 = vrot.slane %v2173, 5
      %v2195 = vsel %vm675, %v2193, %v2194
      %v2196 = vrot.slane %v2194, 4
      %v2197 = vrot.slane %v2174, 5
      %v2198 = vsel %vm675, %v2196, %v2197
      %v2199 = vrot.slane %v2197, 4
      %v2200 = vrot.slane %v2175, 5
      %v2201 = vsel %vm675, %v2199, %v2200
      %v2202 = vrot.slane %v2200, 4
      %v2203 = vrot.slane %v2176, 5
      %v2204 = vsel %vm675, %v2202, %v2203
      %2214 = vst [vmem:[#allocation4 + $0x10] sm:$0xff] %v2180
      %2215 = vst [vmem:[#allocation4 + $0x28] sm:$0xff] %v2183
      %2216 = vst [vmem:[#allocation4 + $0x40] sm:$0xff] %v2186
      %2217 = vst [vmem:[#allocation4 + $0x58] sm:$0xff] %v2189
      %2218 = vst [vmem:[#allocation4 + $0x70] sm:$0xff] %v2192
      %2219 = vst [vmem:[#allocation4 + $0x88] sm:$0xff] %v2195
      %2220 = vst [vmem:[#allocation4 + $0xa0] sm:$0xff] %v2198
      %2221 = vst [vmem:[#allocation4 + $0xb8] sm:$0xff] %v2201
      %2222 = vst [vmem:[#allocation4 + $0xd0] sm:$0xff] %v2204
      %v2223 = vld [vmem:[#allocation4] sm:$0xff]
      %v2224 = vld [vmem:[#allocation4 + $0x8] sm:$0xff]
      %v2225 = vld [vmem:[#allocation4 + $0x10] sm:$0xff]
      %v2226 = vld [vmem:[#allocation4 + $0x18] sm:$0xff]
      %v2227 = vld [vmem:[#allocation4 + $0x20] sm:$0xff]
      %v2228 = vld [vmem:[#allocation4 + $0x28] sm:$0xff]
      %v2229 = vld [vmem:[#allocation4 + $0x30] sm:$0xff]
      %v2230 = vld [vmem:[#allocation4 + $0x38] sm:$0xff]
      %v2231 = vld [vmem:[#allocation4 + $0x40] sm:$0xff]
      %v2232 = vld [vmem:[#allocation4 + $0x48] sm:$0xff]
      %v2233 = vld [vmem:[#allocation4 + $0x50] sm:$0xff]
      %v2234 = vld [vmem:[#allocation4 + $0x58] sm:$0xff]
      %v2235 = vld [vmem:[#allocation4 + $0x60] sm:$0xff]
      %v2236 = vld [vmem:[#allocation4 + $0x68] sm:$0xff]
      %v2237 = vld [vmem:[#allocation4 + $0x70] sm:$0xff]
      %v2238 = vld [vmem:[#allocation4 + $0x78] sm:$0xff]
      %v2239 = vld [vmem:[#allocation4 + $0x80] sm:$0xff]
      %v2240 = vld [vmem:[#allocation4 + $0x88] sm:$0xff]
      %v2241 = vld [vmem:[#allocation4 + $0x90] sm:$0xff]
      %v2242 = vld [vmem:[#allocation4 + $0x98] sm:$0xff]
      %v2243 = vld [vmem:[#allocation4 + $0xa0] sm:$0xff]
      %v2244 = vld [vmem:[#allocation4 + $0xa8] sm:$0xff]
      %v2245 = vld [vmem:[#allocation4 + $0xb0] sm:$0xff]
      %v2246 = vld [vmem:[#allocation4 + $0xb8] sm:$0xff]
      %v2247 = vld [vmem:[#allocation4 + $0xc0] sm:$0xff]
      %v2248 = vld [vmem:[#allocation4 + $0xc8] sm:$0xff]
      %v2249 = vld [vmem:[#allocation4 + $0xd0] sm:$0xff]
      %v2250 = vld [vmem:[%s3] sm:$0xff]
      %v2251 = vld [vmem:[%s3 + $0x8] sm:$0xff]
      %v2252 = vld [vmem:[%s3 + $0x10] sm:$0xff]
      %v2253 = vld [vmem:[%s3 + $0x18] sm:$0xff]
      %v2254 = vld [vmem:[%s3 + $0x20] sm:$0xff]
      %v2255 = vld [vmem:[%s3 + $0x28] sm:$0xff]
      %v2256 = vld [vmem:[%s3 + $0x30] sm:$0xff]
      %v2257 = vld [vmem:[%s3 + $0x38] sm:$0xff]
      %v2258 = vld [vmem:[%s3 + $0x40] sm:$0xff]
      %v2259 = vld [vmem:[%s3 + $0x48] sm:$0xff]
      %v2260 = vld [vmem:[%s3 + $0x50] sm:$0xff]
      %v2261 = vld [vmem:[%s3 + $0x58] sm:$0xff]
      %v2262 = vld [vmem:[%s3 + $0x60] sm:$0xff]
      %v2263 = vld [vmem:[%s3 + $0x68] sm:$0xff]
      %v2264 = vld [vmem:[%s3 + $0x70] sm:$0xff]
      %v2265 = vld [vmem:[%s3 + $0x78] sm:$0xff]
      %v2266 = vld [vmem:[%s3 + $0x80] sm:$0xff]
      %v2267 = vld [vmem:[%s3 + $0x88] sm:$0xff]
      %v2268 = vld [vmem:[%s3 + $0x90] sm:$0xff]
      %v2269 = vld [vmem:[%s3 + $0x98] sm:$0xff]
      %v2270 = vld [vmem:[%s3 + $0xa0] sm:$0xff]
      %v2271 = vld [vmem:[%s3 + $0xa8] sm:$0xff]
      %v2272 = vld [vmem:[%s3 + $0xb0] sm:$0xff]
      %v2273 = vld [vmem:[%s3 + $0xb8] sm:$0xff]
      %v2274 = vld [vmem:[%s3 + $0xc0] sm:$0xff]
      %v2275 = vld [vmem:[%s3 + $0xc8] sm:$0xff]
      %v2276 = vld [vmem:[%s3 + $0xd0] sm:$0xff]
      %v2277 = vld [vmem:[%s3 + $0xd8] sm:$0xff]
      %v2278 = vld [vmem:[%s3 + $0xe0] sm:$0xff]
      %v2279 = vld [vmem:[%s3 + $0xe8] sm:$0xff]
      %v2280 = vld [vmem:[%s3 + $0xf0] sm:$0xff]
      %v2281 = vld [vmem:[%s3 + $0xf8] sm:$0xff]
      %v2282 = vld [vmem:[%s3 + $0x100] sm:$0xff]
      %v2283 = vld [vmem:[%s3 + $0x108] sm:$0xff]
      %v2284 = vld [vmem:[%s3 + $0x110] sm:$0xff]
      %v2285 = vld [vmem:[%s3 + $0x118] sm:$0xff]
      %v2286 = vld [vmem:[%s3 + $0x120] sm:$0xff]
      %v2287 = vld [vmem:[%s3 + $0x128] sm:$0xff]
      %v2288 = vld [vmem:[%s3 + $0x130] sm:$0xff]
      %v2289 = vld [vmem:[%s3 + $0x138] sm:$0xff]
      %v2290 = vld [vmem:[%s3 + $0x140] sm:$0xff]
      %v2291 = vld [vmem:[%s3 + $0x148] sm:$0xff]
      %v2292 = vld [vmem:[%s3 + $0x150] sm:$0xff]
      %v2293 = vld [vmem:[%s3 + $0x158] sm:$0xff]
      %v2294 = vld [vmem:[%s3 + $0x160] sm:$0xff]
      %v2295 = vld [vmem:[%s3 + $0x168] sm:$0xff]
      %v2296 = vld [vmem:[%s3 + $0x170] sm:$0xff]
      %v2297 = vld [vmem:[%s3 + $0x178] sm:$0xff]
      %v2298 = vld [vmem:[%s3 + $0x180] sm:$0xff]
      %v2299 = vld [vmem:[%s3 + $0x188] sm:$0xff]
      %v2300 = vld [vmem:[%s3 + $0x190] sm:$0xff]
      %v2301 = vld [vmem:[%s3 + $0x198] sm:$0xff]
      %v2302 = vld [vmem:[%s3 + $0x1a0] sm:$0xff]
      %v2303 = vld [vmem:[%s3 + $0x1a8] sm:$0xff]
      %v2304 = vld [vmem:[%s3 + $0x1b0] sm:$0xff]
      %v2305 = vld [vmem:[%s3 + $0x1b8] sm:$0xff]
      %v2306 = vld [vmem:[%s3 + $0x1c0] sm:$0xff]
      %v2307 = vld [vmem:[%s3 + $0x1c8] sm:$0xff]
      %v2308 = vld [vmem:[%s3 + $0x1d0] sm:$0xff]
      %v2309 = vld [vmem:[%s3 + $0x1d8] sm:$0xff]
      %v2310 = vld [vmem:[%s3 + $0x1e0] sm:$0xff]
      %v2311 = vld [vmem:[%s3 + $0x1e8] sm:$0xff]
      %v2312 = vld [vmem:[%s3 + $0x1f0] sm:$0xff]
      %v2313 = vld [vmem:[%s3 + $0x1f8] sm:$0xff]
      %v2314 = vld [vmem:[%s3 + $0x200] sm:$0xff]
      %v2315 = vld [vmem:[%s3 + $0x208] sm:$0xff]
      %v2316 = vld [vmem:[%s3 + $0x210] sm:$0xff]
      %v2317 = vld [vmem:[%s3 + $0x218] sm:$0xff]
      %v2318 = vld [vmem:[%s3 + $0x220] sm:$0xff]
      %v2319 = vld [vmem:[%s3 + $0x228] sm:$0xff]
      %v2320 = vld [vmem:[%s3 + $0x230] sm:$0xff]
      %v2321 = vld [vmem:[%s3 + $0x238] sm:$0xff]
      %v2322 = vld [vmem:[%s3 + $0x240] sm:$0xff]
      %v2323 = vld [vmem:[%s3 + $0x248] sm:$0xff]
      %v2324 = vld [vmem:[%s3 + $0x250] sm:$0xff]
      %v2325 = vld [vmem:[%s3 + $0x258] sm:$0xff]
      %v2326 = vld [vmem:[%s3 + $0x260] sm:$0xff]
      %v2327 = vld [vmem:[%s3 + $0x268] sm:$0xff]
      %v2328 = vld [vmem:[%s3 + $0x270] sm:$0xff]
      %v2329 = vld [vmem:[%s3 + $0x278] sm:$0xff]
      %v2330 = vld [vmem:[%s3 + $0x280] sm:$0xff]
      %v2331 = vld [vmem:[%s3 + $0x288] sm:$0xff]
      %v2332 = vld [vmem:[%s3 + $0x290] sm:$0xff]
      %v2333 = vld [vmem:[%s3 + $0x298] sm:$0xff]
      %v2334 = vld [vmem:[%s3 + $0x2a0] sm:$0xff]
      %v2335 = vld [vmem:[%s3 + $0x2a8] sm:$0xff]
      %v2336 = vld [vmem:[%s3 + $0x2b0] sm:$0xff]
      %v2337 = vld [vmem:[%s3 + $0x2b8] sm:$0xff]
      %v2338 = vld [vmem:[%s3 + $0x2c0] sm:$0xff]
      %v2339 = vld [vmem:[%s3 + $0x2c8] sm:$0xff]
      %v2340 = vld [vmem:[%s3 + $0x2d0] sm:$0xff]
      %v2341 = vld [vmem:[%s3 + $0x2d8] sm:$0xff]
      %v2342 = vld [vmem:[%s3 + $0x2e0] sm:$0xff]
      %v2343 = vld [vmem:[%s3 + $0x2e8] sm:$0xff]
      %v2344 = vld [vmem:[%s3 + $0x2f0] sm:$0xff]
      %v2345 = vld [vmem:[%s3 + $0x2f8] sm:$0xff]
      %v2346 = vld [vmem:[%s4] sm:$0x3]
      %v2348 = vlaneseq
      %v2349 = vshrl.u32 %v2348, 7
      %v2350 = vsub.s32 0, %v2349
      %v2351 = vrot.slane %v2346, %v2350
      %v2352 = vlaneseq
      %v2353 = vshrl.u32 %v2352, 7
      %v2354 = vsub.s32 1, %v2353
      %v2355 = vrot.slane %v2346, %v2354
      %v2385 = vunpack.c.l.b16 %v2223
      %v2386 = vunpack.c.h.b16 %v2223
      %v2387 = vunpack.c.l.b16 %v2224
      %v2388 = vunpack.c.h.b16 %v2224
      %v2389 = vunpack.c.l.b16 %v2225
      %v2390 = vunpack.c.h.b16 %v2225
      %v2391 = vunpack.c.l.b16 %v2226
      %v2392 = vunpack.c.h.b16 %v2226
      %v2393 = vunpack.c.l.b16 %v2227
      %v2394 = vunpack.c.h.b16 %v2227
      %v2395 = vunpack.c.l.b16 %v2228
      %v2396 = vunpack.c.h.b16 %v2228
      %v2397 = vunpack.c.l.b16 %v2229
      %v2398 = vunpack.c.h.b16 %v2229
      %v2399 = vunpack.c.l.b16 %v2230
      %v2400 = vunpack.c.h.b16 %v2230
      %v2401 = vunpack.c.l.b16 %v2231
      %v2402 = vunpack.c.h.b16 %v2231
      %v2403 = vunpack.c.l.b16 %v2232
      %v2404 = vunpack.c.h.b16 %v2232
      %v2405 = vunpack.c.l.b16 %v2233
      %v2406 = vunpack.c.h.b16 %v2233
      %v2407 = vunpack.c.l.b16 %v2234
      %v2408 = vunpack.c.h.b16 %v2234
      %v2409 = vunpack.c.l.b16 %v2235
      %v2410 = vunpack.c.h.b16 %v2235
      %v2411 = vunpack.c.l.b16 %v2236
      %v2412 = vunpack.c.h.b16 %v2236
      %v2413 = vunpack.c.l.b16 %v2237
      %v2414 = vunpack.c.h.b16 %v2237
      %v2415 = vunpack.c.l.b16 %v2238
      %v2416 = vunpack.c.h.b16 %v2238
      %v2417 = vunpack.c.l.b16 %v2239
      %v2418 = vunpack.c.h.b16 %v2239
      %v2419 = vunpack.c.l.b16 %v2240
      %v2420 = vunpack.c.h.b16 %v2240
      %v2421 = vunpack.c.l.b16 %v2241
      %v2422 = vunpack.c.h.b16 %v2241
      %v2423 = vunpack.c.l.b16 %v2242
      %v2424 = vunpack.c.h.b16 %v2242
      %v2425 = vunpack.c.l.b16 %v2243
      %v2426 = vunpack.c.h.b16 %v2243
      %v2427 = vunpack.c.l.b16 %v2244
      %v2428 = vunpack.c.h.b16 %v2244
      %v2429 = vunpack.c.l.b16 %v2245
      %v2430 = vunpack.c.h.b16 %v2245
      %v2431 = vunpack.c.l.b16 %v2246
      %v2432 = vunpack.c.h.b16 %v2246
      %v2433 = vunpack.c.l.b16 %v2247
      %v2434 = vunpack.c.h.b16 %v2247
      %v2435 = vunpack.c.l.b16 %v2248
      %v2436 = vunpack.c.h.b16 %v2248
      %v2437 = vunpack.c.l.b16 %v2249
      %v2438 = vunpack.c.h.b16 %v2249
      %v2439 = vpack.c.b16 %v2391, %v2385
      %v2440 = vpack.c.b16 %v2392, %v2386
      %v2441 = vpack.c.b16 %v2393, %v2387
      %v2442 = vpack.c.b16 %v2394, %v2388
      %v2443 = vpack.c.b16 %v2395, %v2389
      %v2444 = vpack.c.b16 %v2396, %v2390
      %v2445 = vpack.c.b16 %v2403, %v2397
      %v2446 = vpack.c.b16 %v2404, %v2398
      %v2447 = vpack.c.b16 %v2405, %v2399
      %v2448 = vpack.c.b16 %v2406, %v2400
      %v2449 = vpack.c.b16 %v2407, %v2401
      %v2450 = vpack.c.b16 %v2408, %v2402
      %v2451 = vpack.c.b16 %v2415, %v2409
      %v2452 = vpack.c.b16 %v2416, %v2410
      %v2453 = vpack.c.b16 %v2417, %v2411
      %v2454 = vpack.c.b16 %v2418, %v2412
      %v2455 = vpack.c.b16 %v2419, %v2413
      %v2456 = vpack.c.b16 %v2420, %v2414
      %v2457 = vpack.c.b16 %v2427, %v2421
      %v2458 = vpack.c.b16 %v2428, %v2422
      %v2459 = vpack.c.b16 %v2429, %v2423
      %v2460 = vpack.c.b16 %v2430, %v2424
      %v2461 = vpack.c.b16 %v2431, %v2425
      %v2462 = vpack.c.b16 %v2432, %v2426
      %v2463 = vpack.c.b16 %v2433, %v2433
      %v2464 = vpack.c.b16 %v2434, %v2434
      %v2465 = vpack.c.b16 %v2435, %v2435
      %v2466 = vpack.c.b16 %v2436, %v2436
      %v2467 = vpack.c.b16 %v2437, %v2437
      %v2468 = vpack.c.b16 %v2438, %v2438
      %v2595 = vunpack.c.l.b16 %v2250
      %v2596 = vunpack.c.h.b16 %v2250
      %v2597 = vunpack.c.l.b16 %v2251
      %v2598 = vunpack.c.h.b16 %v2251
      %v2599 = vunpack.c.l.b16 %v2252
      %v2600 = vunpack.c.h.b16 %v2252
      %v2601 = vunpack.c.l.b16 %v2253
      %v2602 = vunpack.c.h.b16 %v2253
      %v2603 = vunpack.c.l.b16 %v2254
      %v2604 = vunpack.c.h.b16 %v2254
      %v2605 = vunpack.c.l.b16 %v2255
      %v2606 = vunpack.c.h.b16 %v2255
      %v2607 = vunpack.c.l.b16 %v2256
      %v2608 = vunpack.c.h.b16 %v2256
      %v2609 = vunpack.c.l.b16 %v2257
      %v2610 = vunpack.c.h.b16 %v2257
      %v2611 = vunpack.c.l.b16 %v2258
      %v2612 = vunpack.c.h.b16 %v2258
      %v2613 = vunpack.c.l.b16 %v2259
      %v2614 = vunpack.c.h.b16 %v2259
      %v2615 = vunpack.c.l.b16 %v2260
      %v2616 = vunpack.c.h.b16 %v2260
      %v2617 = vunpack.c.l.b16 %v2261
      %v2618 = vunpack.c.h.b16 %v2261
      %v2619 = vunpack.c.l.b16 %v2262
      %v2620 = vunpack.c.h.b16 %v2262
      %v2621 = vunpack.c.l.b16 %v2263
      %v2622 = vunpack.c.h.b16 %v2263
      %v2623 = vunpack.c.l.b16 %v2264
      %v2624 = vunpack.c.h.b16 %v2264
      %v2625 = vunpack.c.l.b16 %v2265
      %v2626 = vunpack.c.h.b16 %v2265
      %v2627 = vunpack.c.l.b16 %v2266
      %v2628 = vunpack.c.h.b16 %v2266
      %v2629 = vunpack.c.l.b16 %v2267
      %v2630 = vunpack.c.h.b16 %v2267
      %v2631 = vunpack.c.l.b16 %v2268
      %v2632 = vunpack.c.h.b16 %v2268
      %v2633 = vunpack.c.l.b16 %v2269
      %v2634 = vunpack.c.h.b16 %v2269
      %v2635 = vunpack.c.l.b16 %v2270
      %v2636 = vunpack.c.h.b16 %v2270
      %v2637 = vunpack.c.l.b16 %v2271
      %v2638 = vunpack.c.h.b16 %v2271
      %v2639 = vunpack.c.l.b16 %v2272
      %v2640 = vunpack.c.h.b16 %v2272
      %v2641 = vunpack.c.l.b16 %v2273
      %v2642 = vunpack.c.h.b16 %v2273
      %v2643 = vunpack.c.l.b16 %v2274
      %v2644 = vunpack.c.h.b16 %v2274
      %v2645 = vunpack.c.l.b16 %v2275
      %v2646 = vunpack.c.h.b16 %v2275
      %v2647 = vunpack.c.l.b16 %v2276
      %v2648 = vunpack.c.h.b16 %v2276
      %v2649 = vunpack.c.l.b16 %v2277
      %v2650 = vunpack.c.h.b16 %v2277
      %v2651 = vunpack.c.l.b16 %v2278
      %v2652 = vunpack.c.h.b16 %v2278
      %v2653 = vunpack.c.l.b16 %v2279
      %v2654 = vunpack.c.h.b16 %v2279
      %v2655 = vunpack.c.l.b16 %v2280
      %v2656 = vunpack.c.h.b16 %v2280
      %v2657 = vunpack.c.l.b16 %v2281
      %v2658 = vunpack.c.h.b16 %v2281
      %v2659 = vunpack.c.l.b16 %v2282
      %v2660 = vunpack.c.h.b16 %v2282
      %v2661 = vunpack.c.l.b16 %v2283
      %v2662 = vunpack.c.h.b16 %v2283
      %v2663 = vunpack.c.l.b16 %v2284
      %v2664 = vunpack.c.h.b16 %v2284
      %v2665 = vunpack.c.l.b16 %v2285
      %v2666 = vunpack.c.h.b16 %v2285
      %v2667 = vunpack.c.l.b16 %v2286
      %v2668 = vunpack.c.h.b16 %v2286
      %v2669 = vunpack.c.l.b16 %v2287
      %v2670 = vunpack.c.h.b16 %v2287
      %v2671 = vunpack.c.l.b16 %v2288
      %v2672 = vunpack.c.h.b16 %v2288
      %v2673 = vunpack.c.l.b16 %v2289
      %v2674 = vunpack.c.h.b16 %v2289
      %v2675 = vunpack.c.l.b16 %v2290
      %v2676 = vunpack.c.h.b16 %v2290
      %v2677 = vunpack.c.l.b16 %v2291
      %v2678 = vunpack.c.h.b16 %v2291
      %v2679 = vunpack.c.l.b16 %v2292
      %v2680 = vunpack.c.h.b16 %v2292
      %v2681 = vunpack.c.l.b16 %v2293
      %v2682 = vunpack.c.h.b16 %v2293
      %v2683 = vunpack.c.l.b16 %v2294
      %v2684 = vunpack.c.h.b16 %v2294
      %v2685 = vunpack.c.l.b16 %v2295
      %v2686 = vunpack.c.h.b16 %v2295
      %v2687 = vunpack.c.l.b16 %v2296
      %v2688 = vunpack.c.h.b16 %v2296
      %v2689 = vunpack.c.l.b16 %v2297
      %v2690 = vunpack.c.h.b16 %v2297
      %v2691 = vunpack.c.l.b16 %v2298
      %v2692 = vunpack.c.h.b16 %v2298
      %v2693 = vunpack.c.l.b16 %v2299
      %v2694 = vunpack.c.h.b16 %v2299
      %v2695 = vunpack.c.l.b16 %v2300
      %v2696 = vunpack.c.h.b16 %v2300
      %v2697 = vunpack.c.l.b16 %v2301
      %v2698 = vunpack.c.h.b16 %v2301
      %v2699 = vunpack.c.l.b16 %v2302
      %v2700 = vunpack.c.h.b16 %v2302
      %v2701 = vunpack.c.l.b16 %v2303
      %v2702 = vunpack.c.h.b16 %v2303
      %v2703 = vunpack.c.l.b16 %v2304
      %v2704 = vunpack.c.h.b16 %v2304
      %v2705 = vunpack.c.l.b16 %v2305
      %v2706 = vunpack.c.h.b16 %v2305
      %v2707 = vunpack.c.l.b16 %v2306
      %v2708 = vunpack.c.h.b16 %v2306
      %v2709 = vunpack.c.l.b16 %v2307
      %v2710 = vunpack.c.h.b16 %v2307
      %v2711 = vunpack.c.l.b16 %v2308
      %v2712 = vunpack.c.h.b16 %v2308
      %v2713 = vunpack.c.l.b16 %v2309
      %v2714 = vunpack.c.h.b16 %v2309
      %v2715 = vunpack.c.l.b16 %v2310
      %v2716 = vunpack.c.h.b16 %v2310
      %v2717 = vunpack.c.l.b16 %v2311
      %v2718 = vunpack.c.h.b16 %v2311
      %v2719 = vunpack.c.l.b16 %v2312
      %v2720 = vunpack.c.h.b16 %v2312
      %v2721 = vunpack.c.l.b16 %v2313
      %v2722 = vunpack.c.h.b16 %v2313
      %v2723 = vunpack.c.l.b16 %v2314
      %v2724 = vunpack.c.h.b16 %v2314
      %v2725 = vunpack.c.l.b16 %v2315
      %v2726 = vunpack.c.h.b16 %v2315
      %v2727 = vunpack.c.l.b16 %v2316
      %v2728 = vunpack.c.h.b16 %v2316
      %v2729 = vunpack.c.l.b16 %v2317
      %v2730 = vunpack.c.h.b16 %v2317
      %v2731 = vunpack.c.l.b16 %v2318
      %v2732 = vunpack.c.h.b16 %v2318
      %v2733 = vunpack.c.l.b16 %v2319
      %v2734 = vunpack.c.h.b16 %v2319
      %v2735 = vunpack.c.l.b16 %v2320
      %v2736 = vunpack.c.h.b16 %v2320
      %v2737 = vunpack.c.l.b16 %v2321
      %v2738 = vunpack.c.h.b16 %v2321
      %v2739 = vunpack.c.l.b16 %v2322
      %v2740 = vunpack.c.h.b16 %v2322
      %v2741 = vunpack.c.l.b16 %v2323
      %v2742 = vunpack.c.h.b16 %v2323
      %v2743 = vunpack.c.l.b16 %v2324
      %v2744 = vunpack.c.h.b16 %v2324
      %v2745 = vunpack.c.l.b16 %v2325
      %v2746 = vunpack.c.h.b16 %v2325
      %v2747 = vunpack.c.l.b16 %v2326
      %v2748 = vunpack.c.h.b16 %v2326
      %v2749 = vunpack.c.l.b16 %v2327
      %v2750 = vunpack.c.h.b16 %v2327
      %v2751 = vunpack.c.l.b16 %v2328
      %v2752 = vunpack.c.h.b16 %v2328
      %v2753 = vunpack.c.l.b16 %v2329
      %v2754 = vunpack.c.h.b16 %v2329
      %v2755 = vunpack.c.l.b16 %v2330
      %v2756 = vunpack.c.h.b16 %v2330
      %v2757 = vunpack.c.l.b16 %v2331
      %v2758 = vunpack.c.h.b16 %v2331
      %v2759 = vunpack.c.l.b16 %v2332
      %v2760 = vunpack.c.h.b16 %v2332
      %v2761 = vunpack.c.l.b16 %v2333
      %v2762 = vunpack.c.h.b16 %v2333
      %v2763 = vunpack.c.l.b16 %v2334
      %v2764 = vunpack.c.h.b16 %v2334
      %v2765 = vunpack.c.l.b16 %v2335
      %v2766 = vunpack.c.h.b16 %v2335
      %v2767 = vunpack.c.l.b16 %v2336
      %v2768 = vunpack.c.h.b16 %v2336
      %v2769 = vunpack.c.l.b16 %v2337
      %v2770 = vunpack.c.h.b16 %v2337
      %v2771 = vunpack.c.l.b16 %v2338
      %v2772 = vunpack.c.h.b16 %v2338
      %v2773 = vunpack.c.l.b16 %v2339
      %v2774 = vunpack.c.h.b16 %v2339
      %v2775 = vunpack.c.l.b16 %v2340
      %v2776 = vunpack.c.h.b16 %v2340
      %v2777 = vunpack.c.l.b16 %v2341
      %v2778 = vunpack.c.h.b16 %v2341
      %v2779 = vunpack.c.l.b16 %v2342
      %v2780 = vunpack.c.h.b16 %v2342
      %v2781 = vunpack.c.l.b16 %v2343
      %v2782 = vunpack.c.h.b16 %v2343
      %v2783 = vunpack.c.l.b16 %v2344
      %v2784 = vunpack.c.h.b16 %v2344
      %v2785 = vunpack.c.l.b16 %v2345
      %v2786 = vunpack.c.h.b16 %v2345
      %v2787 = vpack.c.b16 %v2597, %v2595
      %v2788 = vpack.c.b16 %v2598, %v2596
      %v2789 = vpack.c.b16 %v2601, %v2599
      %v2790 = vpack.c.b16 %v2602, %v2600
      %v2791 = vpack.c.b16 %v2605, %v2603
      %v2792 = vpack.c.b16 %v2606, %v2604
      %v2793 = vpack.c.b16 %v2609, %v2607
      %v2794 = vpack.c.b16 %v2610, %v2608
      %v2795 = vpack.c.b16 %v2613, %v2611
      %v2796 = vpack.c.b16 %v2614, %v2612
      %v2797 = vpack.c.b16 %v2617, %v2615
      %v2798 = vpack.c.b16 %v2618, %v2616
      %v2799 = vpack.c.b16 %v2621, %v2619
      %v2800 = vpack.c.b16 %v2622, %v2620
      %v2801 = vpack.c.b16 %v2625, %v2623
      %v2802 = vpack.c.b16 %v2626, %v2624
      %v2803 = vpack.c.b16 %v2629, %v2627
      %v2804 = vpack.c.b16 %v2630, %v2628
      %v2805 = vpack.c.b16 %v2633, %v2631
      %v2806 = vpack.c.b16 %v2634, %v2632
      %v2807 = vpack.c.b16 %v2637, %v2635
      %v2808 = vpack.c.b16 %v2638, %v2636
      %v2809 = vpack.c.b16 %v2641, %v2639
      %v2810 = vpack.c.b16 %v2642, %v2640
      %v2811 = vpack.c.b16 %v2645, %v2643
      %v2812 = vpack.c.b16 %v2646, %v2644
      %v2813 = vpack.c.b16 %v2649, %v2647
      %v2814 = vpack.c.b16 %v2650, %v2648
      %v2815 = vpack.c.b16 %v2653, %v2651
      %v2816 = vpack.c.b16 %v2654, %v2652
      %v2817 = vpack.c.b16 %v2657, %v2655
      %v2818 = vpack.c.b16 %v2658, %v2656
      %v2819 = vpack.c.b16 %v2661, %v2659
      %v2820 = vpack.c.b16 %v2662, %v2660
      %v2821 = vpack.c.b16 %v2665, %v2663
      %v2822 = vpack.c.b16 %v2666, %v2664
      %v2823 = vpack.c.b16 %v2669, %v2667
      %v2824 = vpack.c.b16 %v2670, %v2668
      %v2825 = vpack.c.b16 %v2673, %v2671
      %v2826 = vpack.c.b16 %v2674, %v2672
      %v2827 = vpack.c.b16 %v2677, %v2675
      %v2828 = vpack.c.b16 %v2678, %v2676
      %v2829 = vpack.c.b16 %v2681, %v2679
      %v2830 = vpack.c.b16 %v2682, %v2680
      %v2831 = vpack.c.b16 %v2685, %v2683
      %v2832 = vpack.c.b16 %v2686, %v2684
      %v2833 = vpack.c.b16 %v2689, %v2687
      %v2834 = vpack.c.b16 %v2690, %v2688
      %v2835 = vpack.c.b16 %v2693, %v2691
      %v2836 = vpack.c.b16 %v2694, %v2692
      %v2837 = vpack.c.b16 %v2697, %v2695
      %v2838 = vpack.c.b16 %v2698, %v2696
      %v2839 = vpack.c.b16 %v2701, %v2699
      %v2840 = vpack.c.b16 %v2702, %v2700
      %v2841 = vpack.c.b16 %v2705, %v2703
      %v2842 = vpack.c.b16 %v2706, %v2704
      %v2843 = vpack.c.b16 %v2709, %v2707
      %v2844 = vpack.c.b16 %v2710, %v2708
      %v2845 = vpack.c.b16 %v2713, %v2711
      %v2846 = vpack.c.b16 %v2714, %v2712
      %v2847 = vpack.c.b16 %v2717, %v2715
      %v2848 = vpack.c.b16 %v2718, %v2716
      %v2849 = vpack.c.b16 %v2721, %v2719
      %v2850 = vpack.c.b16 %v2722, %v2720
      %v2851 = vpack.c.b16 %v2725, %v2723
      %v2852 = vpack.c.b16 %v2726, %v2724
      %v2853 = vpack.c.b16 %v2729, %v2727
      %v2854 = vpack.c.b16 %v2730, %v2728
      %v2855 = vpack.c.b16 %v2733, %v2731
      %v2856 = vpack.c.b16 %v2734, %v2732
      %v2857 = vpack.c.b16 %v2737, %v2735
      %v2858 = vpack.c.b16 %v2738, %v2736
      %v2859 = vpack.c.b16 %v2741, %v2739
      %v2860 = vpack.c.b16 %v2742, %v2740
      %v2861 = vpack.c.b16 %v2745, %v2743
      %v2862 = vpack.c.b16 %v2746, %v2744
      %v2863 = vpack.c.b16 %v2749, %v2747
      %v2864 = vpack.c.b16 %v2750, %v2748
      %v2865 = vpack.c.b16 %v2753, %v2751
      %v2866 = vpack.c.b16 %v2754, %v2752
      %v2867 = vpack.c.b16 %v2757, %v2755
      %v2868 = vpack.c.b16 %v2758, %v2756
      %v2869 = vpack.c.b16 %v2761, %v2759
      %v2870 = vpack.c.b16 %v2762, %v2760
      %v2871 = vpack.c.b16 %v2765, %v2763
      %v2872 = vpack.c.b16 %v2766, %v2764
      %v2873 = vpack.c.b16 %v2769, %v2767
      %v2874 = vpack.c.b16 %v2770, %v2768
      %v2875 = vpack.c.b16 %v2773, %v2771
      %v2876 = vpack.c.b16 %v2774, %v2772
      %v2877 = vpack.c.b16 %v2777, %v2775
      %v2878 = vpack.c.b16 %v2778, %v2776
      %v2879 = vpack.c.b16 %v2781, %v2779
      %v2880 = vpack.c.b16 %v2782, %v2780
      %v2881 = vpack.c.b16 %v2785, %v2783
      %v2882 = vpack.c.b16 %v2786, %v2784
      %2979 = vmatprep.subr.bf16.mxu0 %v2788
      %2980 = vmatpush1.bf16.msra.mxu0 %v2787
      %2981 = vmatprep.subr.bf16.mxu0 %v2790
      %2982 = vmatpush1.bf16.msra.mxu0 %v2789
      %2983 = vmatprep.subr.bf16.mxu0 %v2792
      %2984 = vmatpush1.bf16.msra.mxu0 %v2791
      %2985 = vmatprep.subr.bf16.mxu0 %v2794
      %2986 = vmatpush1.bf16.msra.mxu0 %v2793
      %2987 = vmatprep.subr.bf16.mxu0 %v2796
      %2988 = vmatpush1.bf16.msra.mxu0 %v2795
      %2989 = vmatprep.subr.bf16.mxu0 %v2798
      %2990 = vmatpush1.bf16.msra.mxu0 %v2797
      %2991 = vmatprep.subr.bf16.mxu0 %v2800
      %2992 = vmatpush1.bf16.msra.mxu0 %v2799
      %2993 = vmatprep.subr.bf16.mxu0 %v2802
      %2994 = vmatpush1.bf16.msra.mxu0 %v2801
      %2995 = vmatprep.subr.bf16.mxu0 %v2804
      %2996 = vmatpush1.bf16.msra.mxu0 %v2803
      %2997 = vmatprep.subr.bf16.mxu0 %v2806
      %2998 = vmatpush1.bf16.msra.mxu0 %v2805
      %2999 = vmatprep.subr.bf16.mxu0 %v2808
      %3000 = vmatpush1.bf16.msra.mxu0 %v2807
      %3001 = vmatprep.subr.bf16.mxu0 %v2810
      %3002 = vmatpush1.bf16.msra.mxu0 %v2809
      %3003 = vmatprep.subr.bf16.mxu0 %v2812
      %3004 = vmatpush1.bf16.msra.mxu0 %v2811
      %3005 = vmatprep.subr.bf16.mxu0 %v2814
      %3006 = vmatpush1.bf16.msra.mxu0 %v2813
      %3007 = vmatprep.subr.bf16.mxu0 %v2816
      %3008 = vmatpush1.bf16.msra.mxu0 %v2815
      %3009 = vmatprep.subr.bf16.mxu0 %v2818
      %3010 = vmatpush1.bf16.msra.mxu0 %v2817
      %3011 = vmatprep.mubr.bf16.mxu0 %v2440
      %3012 = vmatmul.mubr.bf16.gmra.mrb[0].mxu0 %v2439
      %v3013 = vpop.f32.mrb[0].mxu0
      %v3014 = vadd.f32 %v2351, %v3013
      %v3015 = vpop.f32.mrb[0].mxu0
      %v3016 = vadd.f32 %v2355, %v3015
      %v3017 = vpop.f32.mrb[0].mxu0
      %v3018 = vadd.f32 %v2351, %v3017
      %v3019 = vpop.f32.mrb[0].mxu0
      %v3020 = vadd.f32 %v2355, %v3019
      %3021 = vmatprep.mubr.bf16.mxu0 %v2446
      %3022 = vmatmul.mubr.bf16.gmra.mrb[0].mxu0 %v2445
      %v3023 = vpop.f32.mrb[0].mxu0
      %v3024 = vadd.f32 %v2351, %v3023
      %v3025 = vpop.f32.mrb[0].mxu0
      %v3026 = vadd.f32 %v2355, %v3025
      %v3027 = vpop.f32.mrb[0].mxu0
      %v3028 = vadd.f32 %v2351, %v3027
      %v3029 = vpop.f32.mrb[0].mxu0
      %v3030 = vadd.f32 %v2355, %v3029
      %3031 = vmatprep.mubr.bf16.mxu0 %v2452
      %3032 = vmatmul.mubr.bf16.gmra.mrb[0].mxu0 %v2451
      %v3033 = vpop.f32.mrb[0].mxu0
      %v3034 = vadd.f32 %v2351, %v3033
      %v3035 = vpop.f32.mrb[0].mxu0
      %v3036 = vadd.f32 %v2355, %v3035
      %v3037 = vpop.f32.mrb[0].mxu0
      %v3038 = vadd.f32 %v2351, %v3037
      %v3039 = vpop.f32.mrb[0].mxu0
      %v3040 = vadd.f32 %v2355, %v3039
      %3041 = vmatprep.mubr.bf16.mxu0 %v2458
      %3042 = vmatmul.mubr.bf16.gmra.mrb[0].mxu0 %v2457
      %v3043 = vpop.f32.mrb[0].mxu0
      %v3044 = vadd.f32 %v2351, %v3043
      %v3045 = vpop.f32.mrb[0].mxu0
      %v3046 = vadd.f32 %v2355, %v3045
      %v3047 = vpop.f32.mrb[0].mxu0
      %v3048 = vadd.f32 %v2351, %v3047
      %v3049 = vpop.f32.mrb[0].mxu0
      %v3050 = vadd.f32 %v2355, %v3049
      %3051 = vmatprep.mubr.bf16.mxu0 %v2464
      %3052 = vmatmul.mubr.bf16.gmra.mrb[0].mxu0 %v2463
      %v3053 = vpop.f32.mrb[0].mxu0
      %v3054 = vadd.f32 %v2351, %v3053
      %v3055 = vpop.f32.mrb[0].mxu0
      %v3056 = vadd.f32 %v2355, %v3055
      %v3057 = vpop.f32.mrb[0].mxu0
      %v3058 = vpop.f32.mrb[0].mxu0
      %3059 = vdwg.mxu0
      %3060 = vmatprep.subr.bf16.mxu0 %v2820
      %3061 = vmatpush1.bf16.msra.mxu0 %v2819
      %3062 = vmatprep.subr.bf16.mxu0 %v2822
      %3063 = vmatpush1.bf16.msra.mxu0 %v2821
      %3064 = vmatprep.subr.bf16.mxu0 %v2824
      %3065 = vmatpush1.bf16.msra.mxu0 %v2823
      %3066 = vmatprep.subr.bf16.mxu0 %v2826
      %3067 = vmatpush1.bf16.msra.mxu0 %v2825
      %3068 = vmatprep.subr.bf16.mxu0 %v2828
      %3069 = vmatpush1.bf16.msra.mxu0 %v2827
      %3070 = vmatprep.subr.bf16.mxu0 %v2830
      %3071 = vmatpush1.bf16.msra.mxu0 %v2829
      %3072 = vmatprep.subr.bf16.mxu0 %v2832
      %3073 = vmatpush1.bf16.msra.mxu0 %v2831
      %3074 = vmatprep.subr.bf16.mxu0 %v2834
      %3075 = vmatpush1.bf16.msra.mxu0 %v2833
      %3076 = vmatprep.subr.bf16.mxu0 %v2836
      %3077 = vmatpush1.bf16.msra.mxu0 %v2835
      %3078 = vmatprep.subr.bf16.mxu0 %v2838
      %3079 = vmatpush1.bf16.msra.mxu0 %v2837
      %3080 = vmatprep.subr.bf16.mxu0 %v2840
      %3081 = vmatpush1.bf16.msra.mxu0 %v2839
      %3082 = vmatprep.subr.bf16.mxu0 %v2842
      %3083 = vmatpush1.bf16.msra.mxu0 %v2841
      %3084 = vmatprep.subr.bf16.mxu0 %v2844
      %3085 = vmatpush1.bf16.msra.mxu0 %v2843
      %3086 = vmatprep.subr.bf16.mxu0 %v2846
      %3087 = vmatpush1.bf16.msra.mxu0 %v2845
      %3088 = vmatprep.subr.bf16.mxu0 %v2848
      %3089 = vmatpush1.bf16.msra.mxu0 %v2847
      %3090 = vmatprep.subr.bf16.mxu0 %v2850
      %3091 = vmatpush1.bf16.msra.mxu0 %v2849
      %3092 = vmatprep.mubr.bf16.mxu0 %v2442
      %3093 = vmatmul.mubr.bf16.gmra.mrb[0].mxu0 %v2441
      %v3094 = vpop.f32.mrb[0].mxu0
      %v3095 = vadd.f32 %v3014, %v3094
      %v3096 = vpop.f32.mrb[0].mxu0
      %v3097 = vadd.f32 %v3016, %v3096
      %v3098 = vpop.f32.mrb[0].mxu0
      %v3099 = vadd.f32 %v3018, %v3098
      %v3100 = vpop.f32.mrb[0].mxu0
      %v3101 = vadd.f32 %v3020, %v3100
      %3102 = vmatprep.mubr.bf16.mxu0 %v2448
      %3103 = vmatmul.mubr.bf16.gmra.mrb[0].mxu0 %v2447
      %v3104 = vpop.f32.mrb[0].mxu0
      %v3105 = vadd.f32 %v3024, %v3104
      %v3106 = vpop.f32.mrb[0].mxu0
      %v3107 = vadd.f32 %v3026, %v3106
      %v3108 = vpop.f32.mrb[0].mxu0
      %v3109 = vadd.f32 %v3028, %v3108
      %v3110 = vpop.f32.mrb[0].mxu0
      %v3111 = vadd.f32 %v3030, %v3110
      %3112 = vmatprep.mubr.bf16.mxu0 %v2454
      %3113 = vmatmul.mubr.bf16.gmra.mrb[0].mxu0 %v2453
      %v3114 = vpop.f32.mrb[0].mxu0
      %v3115 = vadd.f32 %v3034, %v3114
      %v3116 = vpop.f32.mrb[0].mxu0
      %v3117 = vadd.f32 %v3036, %v3116
      %v3118 = vpop.f32.mrb[0].mxu0
      %v3119 = vadd.f32 %v3038, %v3118
      %v3120 = vpop.f32.mrb[0].mxu0
      %v3121 = vadd.f32 %v3040, %v3120
      %3122 = vmatprep.mubr.bf16.mxu0 %v2460
      %3123 = vmatmul.mubr.bf16.gmra.mrb[0].mxu0 %v2459
      %v3124 = vpop.f32.mrb[0].mxu0
      %v3125 = vadd.f32 %v3044, %v3124
      %v3126 = vpop.f32.mrb[0].mxu0
      %v3127 = vadd.f32 %v3046, %v3126
      %v3128 = vpop.f32.mrb[0].mxu0
      %v3129 = vadd.f32 %v3048, %v3128
      %v3130 = vpop.f32.mrb[0].mxu0
      %v3131 = vadd.f32 %v3050, %v3130
      %3132 = vmatprep.mubr.bf16.mxu0 %v2466
      %3133 = vmatmul.mubr.bf16.gmra.mrb[0].mxu0 %v2465
      %v3134 = vpop.f32.mrb[0].mxu0
      %v3135 = vadd.f32 %v3054, %v3134
      %v3136 = vpop.f32.mrb[0].mxu0
      %v3137 = vadd.f32 %v3056, %v3136
      %v3138 = vpop.f32.mrb[0].mxu0
      %v3139 = vpop.f32.mrb[0].mxu0
      %3140 = vdwg.mxu0
      %3141 = vmatprep.subr.bf16.mxu0 %v2852
      %3142 = vmatpush1.bf16.msra.mxu0 %v2851
      %3143 = vmatprep.subr.bf16.mxu0 %v2854
      %3144 = vmatpush1.bf16.msra.mxu0 %v2853
      %3145 = vmatprep.subr.bf16.mxu0 %v2856
      %3146 = vmatpush1.bf16.msra.mxu0 %v2855
      %3147 = vmatprep.subr.bf16.mxu0 %v2858
      %3148 = vmatpush1.bf16.msra.mxu0 %v2857
      %3149 = vmatprep.subr.bf16.mxu0 %v2860
      %3150 = vmatpush1.bf16.msra.mxu0 %v2859
      %3151 = vmatprep.subr.bf16.mxu0 %v2862
      %3152 = vmatpush1.bf16.msra.mxu0 %v2861
      %3153 = vmatprep.subr.bf16.mxu0 %v2864
      %3154 = vmatpush1.bf16.msra.mxu0 %v2863
      %3155 = vmatprep.subr.bf16.mxu0 %v2866
      %3156 = vmatpush1.bf16.msra.mxu0 %v2865
      %3157 = vmatprep.subr.bf16.mxu0 %v2868
      %3158 = vmatpush1.bf16.msra.mxu0 %v2867
      %3159 = vmatprep.subr.bf16.mxu0 %v2870
      %3160 = vmatpush1.bf16.msra.mxu0 %v2869
      %3161 = vmatprep.subr.bf16.mxu0 %v2872
      %3162 = vmatpush1.bf16.msra.mxu0 %v2871
      %3163 = vmatprep.subr.bf16.mxu0 %v2874
      %3164 = vmatpush1.bf16.msra.mxu0 %v2873
      %3165 = vmatprep.subr.bf16.mxu0 %v2876
      %3166 = vmatpush1.bf16.msra.mxu0 %v2875
      %3167 = vmatprep.subr.bf16.mxu0 %v2878
      %3168 = vmatpush1.bf16.msra.mxu0 %v2877
      %3169 = vmatprep.subr.bf16.mxu0 %v2880
      %3170 = vmatpush1.bf16.msra.mxu0 %v2879
      %3171 = vmatprep.subr.bf16.mxu0 %v2882
      %3172 = vmatpush1.bf16.msra.mxu0 %v2881
      %3173 = vmatprep.mubr.bf16.mxu0 %v2444
      %3174 = vmatmul.mubr.bf16.gmra.mrb[0].mxu0 %v2443
      %v3175 = vpop.f32.mrb[0].mxu0
      %v3176 = vadd.f32 %v3095, %v3175
      %v3177 = vpop.f32.mrb[0].mxu0
      %v3178 = vadd.f32 %v3097, %v3177
      %v3179 = vpop.f32.mrb[0].mxu0
      %v3180 = vadd.f32 %v3099, %v3179
      %v3181 = vpop.f32.mrb[0].mxu0
      %v3182 = vadd.f32 %v3101, %v3181
      %3183 = vmatprep.mubr.bf16.mxu0 %v2450
      %3184 = vmatmul.mubr.bf16.gmra.mrb[0].mxu0 %v2449
      %v3185 = vpop.f32.mrb[0].mxu0
      %v3186 = vadd.f32 %v3105, %v3185
      %v3187 = vpop.f32.mrb[0].mxu0
      %v3188 = vadd.f32 %v3107, %v3187
      %v3189 = vpop.f32.mrb[0].mxu0
      %v3190 = vadd.f32 %v3109, %v3189
      %v3191 = vpop.f32.mrb[0].mxu0
      %v3192 = vadd.f32 %v3111, %v3191
      %3193 = vmatprep.mubr.bf16.mxu0 %v2456
      %3194 = vmatmul.mubr.bf16.gmra.mrb[0].mxu0 %v2455
      %v3195 = vpop.f32.mrb[0].mxu0
      %v3196 = vadd.f32 %v3115, %v3195
      %v3197 = vpop.f32.mrb[0].mxu0
      %v3198 = vadd.f32 %v3117, %v3197
      %v3199 = vpop.f32.mrb[0].mxu0
      %v3200 = vadd.f32 %v3119, %v3199
      %v3201 = vpop.f32.mrb[0].mxu0
      %v3202 = vadd.f32 %v3121, %v3201
      %3203 = vmatprep.mubr.bf16.mxu0 %v2462
      %3204 = vmatmul.mubr.bf16.gmra.mrb[0].mxu0 %v2461
      %v3205 = vpop.f32.mrb[0].mxu0
      %v3206 = vadd.f32 %v3125, %v3205
      %v3207 = vpop.f32.mrb[0].mxu0
      %v3208 = vadd.f32 %v3127, %v3207
      %v3209 = vpop.f32.mrb[0].mxu0
      %v3210 = vadd.f32 %v3129, %v3209
      %v3211 = vpop.f32.mrb[0].mxu0
      %v3212 = vadd.f32 %v3131, %v3211
      %3213 = vmatprep.mubr.bf16.mxu0 %v2468
      %3214 = vmatmul.mubr.bf16.gmra.mrb[0].mxu0 %v2467
      %v3215 = vpop.f32.mrb[0].mxu0
      %v3216 = vadd.f32 %v3135, %v3215
      %v3217 = vpop.f32.mrb[0].mxu0
      %v3218 = vadd.f32 %v3137, %v3217
      %v3219 = vpop.f32.mrb[0].mxu0
      %v3220 = vpop.f32.mrb[0].mxu0
      %3221 = vdwg.mxu0
      %v3222 = vld [vmem:[%s224] sm:$0xff]
      %v3223 = vld [vmem:[%s224 + $0x8] sm:$0xff]
      %v3224 = vld [vmem:[%s224 + $0x10] sm:$0xff]
      %v3225 = vld [vmem:[%s224 + $0x18] sm:$0xff]
      %v3230 = vrot.slane %v3222, 7
      %v3231 = vrot.slane %v3223, 7
      %v3232 = vrot.slane %v3224, 7
      %v3233 = vsel %vm1757, %v3230, %v3232
      %v3234 = vrot.slane %v3225, 7
      %v3235 = vsel %vm1757, %v3231, %v3234
      %v3242 = vadd.f32 %v3176, %v3230
      %v3243 = vadd.f32 %v3178, %v3231
      %v3244 = vadd.f32 %v3180, %v3233
      %v3245 = vadd.f32 %v3182, %v3235
      %v3246 = vadd.f32 %v3186, %v3232
      %v3247 = vadd.f32 %v3188, %v3234
      %vm3254 = vcmask 1046528
      %v3255 = vrot.slane %v3242, 1
      %v3256 = vrot.slane %v3244, 1
      %v3257 = vsel %vm3254, %v3255, %v3256
      %v3258 = vrot.slane %v3243, 1
      %v3259 = vrot.slane %v3245, 1
      %v3260 = vsel %vm3254, %v3258, %v3259
      %v3261 = vrot.slane %v3246, 1
      %v3262 = vsel %vm3254, %v3256, %v3261
      %v3263 = vrot.slane %v3247, 1
      %v3264 = vsel %vm3254, %v3259, %v3263
      %3269 = vst [vmem:[%s231] sm:$0xff] %v3257
      %3270 = vst [vmem:[%s231 + $0x8] sm:$0xff] %v3260
      %3271 = vst [vmem:[%s231 + $0x10] sm:$0xff] %v3262
      %3272 = vst [vmem:[%s231 + $0x18] sm:$0xff] %v3264
      %v3273 = vld [vmem:[%s270] sm:$0xff]
      %v3274 = vld [vmem:[%s270 + $0x8] sm:$0xff]
      %v3275 = vld [vmem:[%s270 + $0x10] sm:$0xff]
      %v3276 = vld [vmem:[%s270 + $0x18] sm:$0xff]
      %vm3281 = vcmask 1042432
      %v3282 = vrot.slane %v3273, 5
      %v3283 = vrot.slane %v3274, 5
      %v3284 = vrot.slane %v3275, 5
      %v3285 = vsel %vm3281, %v3282, %v3284
      %v3286 = vrot.slane %v3276, 5
      %v3287 = vsel %vm3281, %v3283, %v3286
      %v3294 = vadd.f32 %v3186, %v3282
      %v3295 = vadd.f32 %v3188, %v3283
      %v3296 = vadd.f32 %v3190, %v3285
      %v3297 = vadd.f32 %v3192, %v3287
      %v3298 = vadd.f32 %v3196, %v3284
      %v3299 = vadd.f32 %v3198, %v3286
      %vm3306 = vcmask 1044480
      %v3307 = vrot.slane %v3294, 3
      %v3308 = vrot.slane %v3296, 3
      %v3309 = vsel %vm3306, %v3307, %v3308
      %v3310 = vrot.slane %v3295, 3
      %v3311 = vrot.slane %v3297, 3
      %v3312 = vsel %vm3306, %v3310, %v3311
      %v3313 = vrot.slane %v3298, 3
      %v3314 = vsel %vm3306, %v3308, %v3313
      %v3315 = vrot.slane %v3299, 3
      %v3316 = vsel %vm3306, %v3311, %v3315
      %s3321 = scalar_lea.vmem %s231, 32
      %3322 = vst [vmem:[%s3321] sm:$0xff] %v3309
      %3323 = vst [vmem:[%s3321 + $0x8] sm:$0xff] %v3312
      %3324 = vst [vmem:[%s3321 + $0x10] sm:$0xff] %v3314
      %3325 = vst [vmem:[%s3321 + $0x18] sm:$0xff] %v3316
      %v3326 = vld [vmem:[%s298] sm:$0xff]
      %v3327 = vld [vmem:[%s298 + $0x8] sm:$0xff]
      %v3328 = vld [vmem:[%s298 + $0x10] sm:$0xff]
      %v3329 = vld [vmem:[%s298 + $0x18] sm:$0xff]
      %v3334 = vrot.slane %v3326, 3
      %v3335 = vrot.slane %v3327, 3
      %v3336 = vrot.slane %v3328, 3
      %v3337 = vsel %vm3306, %v3334, %v3336
      %v3338 = vrot.slane %v3329, 3
      %v3339 = vsel %vm3306, %v3335, %v3338
      %v3346 = vadd.f32 %v3196, %v3334
      %v3347 = vadd.f32 %v3198, %v3335
      %v3348 = vadd.f32 %v3200, %v3337
      %v3349 = vadd.f32 %v3202, %v3339
      %v3350 = vadd.f32 %v3206, %v3336
      %v3351 = vadd.f32 %v3208, %v3338
      %v3358 = vrot.slane %v3346, 5
      %v3359 = vrot.slane %v3348, 5
      %v3360 = vsel %vm3281, %v3358, %v3359
      %v3361 = vrot.slane %v3347, 5
      %v3362 = vrot.slane %v3349, 5
      %v3363 = vsel %vm3281, %v3361, %v3362
      %v3364 = vrot.slane %v3350, 5
      %v3365 = vsel %vm3281, %v3359, %v3364
      %v3366 = vrot.slane %v3351, 5
      %v3367 = vsel %vm3281, %v3362, %v3366
      %s3372 = scalar_lea.vmem %s231, 64
      %3373 = vst [vmem:[%s3372] sm:$0xff] %v3360
      %3374 = vst [vmem:[%s3372 + $0x8] sm:$0xff] %v3363
      %3375 = vst [vmem:[%s3372 + $0x10] sm:$0xff] %v3365
      %3376 = vst [vmem:[%s3372 + $0x18] sm:$0xff] %v3367
      %v3377 = vld [vmem:[%s326] sm:$0xff]
      %v3378 = vld [vmem:[%s326 + $0x8] sm:$0xff]
      %v3379 = vld [vmem:[%s326 + $0x10] sm:$0xff]
      %v3380 = vld [vmem:[%s326 + $0x18] sm:$0xff]
      %v3385 = vrot.slane %v3377, 1
      %v3386 = vrot.slane %v3378, 1
      %v3387 = vrot.slane %v3379, 1
      %v3388 = vsel %vm3254, %v3385, %v3387
      %v3389 = vrot.slane %v3380, 1
      %v3390 = vsel %vm3254, %v3386, %v3389
      %v3397 = vadd.f32 %v3206, %v3385
      %v3398 = vadd.f32 %v3208, %v3386
      %v3399 = vadd.f32 %v3210, %v3388
      %v3400 = vadd.f32 %v3212, %v3390
      %v3401 = vadd.f32 %v3216, %v3387
      %v3402 = vadd.f32 %v3218, %v3389
      %v3409 = vrot.slane %v3397, 7
      %v3410 = vrot.slane %v3399, 7
      %v3411 = vsel %vm1757, %v3409, %v3410
      %v3412 = vrot.slane %v3398, 7
      %v3413 = vrot.slane %v3400, 7
      %v3414 = vsel %vm1757, %v3412, %v3413
      %v3415 = vrot.slane %v3401, 7
      %v3416 = vsel %vm1757, %v3410, %v3415
      %v3417 = vrot.slane %v3402, 7
      %v3418 = vsel %vm1757, %v3413, %v3417
      %s3423 = scalar_lea.vmem %s231, 96
      %3424 = vst [vmem:[%s3423] sm:$0xff] %v3411
      %3425 = vst [vmem:[%s3423 + $0x8] sm:$0xff] %v3414
      %3426 = vst [vmem:[%s3423 + $0x10] sm:$0xff] %v3416
      %3427 = vst [vmem:[%s3423 + $0x18] sm:$0xff] %v3418
      %s3428 = smul.u32 4, %s16
      %p3429 = scmp.lt.s32.totalorder %s3428, 7
      %s3430 = scalar_select %p3429, %s3428, 7
      %s3431 = smul.addr %s3430, 4
      %s3432 = smul.addr %s3431, 8
      %s3433 = scalar_lea.vmem %s5, %s3432
      // Predicated region
      $region41: #{resblock_forward.1} parent=39 // pred_check
        %p3434 = pneg %p144
      $region42: #{resblock_forward.1} parent=39 // pred_check_branch
        %3436 = sbr.rel (%p3434) target = $region44
      $region43: #{resblock_forward.1} parent=39 // pred_region
        %s3437 = smul.u32 4, %s16
      $region44: #{resblock_forward.1} parent=39 // pred_fallthru
        _
    $region40: #{resblock_forward.1} parent=5 // pred_fallthru
      _
    %p3438 = scmp.le.s32.totalorder 2, %s11
    // Predicated region
    $region45: #{resblock_forward.1} parent=5 // pred_check
      %p3439 = pneg %p3438
    $region46: #{resblock_forward.1} parent=5 // pred_check_branch
      %3441 = sbr.rel (%p3439) target = $region48
    $region47: #{resblock_forward.1} parent=5 // pred_region
      %s3442 = ssub.s32 %s11, 2
      // Predicated region
      $region49: #{resblock_forward.1} parent=47 // pred_check
        %p3443 = pneg %p150
      $region50: #{resblock_forward.1} parent=47 // pred_check_branch
        %3445 = sbr.rel (%p3443) target = $region52
      $region51: #{resblock_forward.1} parent=47 // pred_region
        %s3446 = smul.u32 4, %s17
        %p3447 = scmp.lt.s32.totalorder %s3446, 7
        %s3448 = scalar_select %p3447, %s3446, 7
        %s3449 = smul.addr %s3448, 4
        %s3450 = smul.addr %s3449, 8
        %s3451 = scalar_lea.vmem %s5, %s3450
      $region52: #{resblock_forward.1} parent=47 // pred_fallthru
        _
    $region48: #{resblock_forward.1} parent=5 // pred_fallthru
      _
  $region6: #{resblock_forward.1} parent=0 // loop_footer
    %s15 = sadd.s32 1, %s11
  $region7: #{resblock_forward.1} parent=0 // loop_footer_branch
    %10 = sbr.rel target = $region3
  $region8: #{resblock_forward.1} parent=0 // loop_exit
    _

</llo_original>
